<compile_context>
chip_gen: v7x
topology: tpu7x:2x2x1
jax: 0.10.0
libtpu: 0.0.40
codegen_flags: <defaults>
</compile_context>

<pallas_src>
import jax
import jax.numpy as jnp
import numpy as np
from jax.experimental import pallas as pl
from jax.experimental.pallas import tpu as pltpu

_ROW_FOLD = 2          # image rows folded into the lane dimension
_BN_EPS = 1e-5


# ---------------------------------------------------------------------------
# Host-side (numpy) one-shot weight preparation
# ---------------------------------------------------------------------------

def _band_matrices_np(w_hwio, W, P):
    """Banded matrices for a 'SAME' conv on row-folded slabs (H/P, P*W*Cin).

    Returns (KS, P*W*Cin, P*W*Cout):  out_superrow[r] = sum_ks xpad[r+ks] @ M[ks]
    where xpad has one zero super-row at each end (KS==3) or none (KS==1).
    Lane order inside a super-row is (row_parity, w, c); width 'SAME' padding
    is implicit (out-of-range w blocks simply omitted)."""
    KH, KW, Cin, Cout = w_hwio.shape
    rh, rw = KH // 2, KW // 2
    Lin, Lout = P * W * Cin, P * W * Cout
    shifts = sorted({(po + kh - rh) // P for po in range(P) for kh in range(KH)})
    smin = shifts[0]
    m = np.zeros((len(shifts), Lin, Lout), np.float32)
    for po in range(P):
        for kh in range(KH):
            d = po + kh - rh          # input-row offset relative to P*r
            s = d // P                # super-row shift (floor division)
            pi = d - P * s            # row parity inside the input super-row
            ks = s - smin
            for wo in range(W):
                for kw in range(KW):
                    wi = wo + kw - rw
                    if 0 <= wi < W:
                        m[ks,
                          pi * W * Cin + wi * Cin: pi * W * Cin + (wi + 1) * Cin,
                          po * W * Cout + wo * Cout: po * W * Cout + (wo + 1) * Cout
                          ] = w_hwio[kh, kw]
    return m


def _fold_bn_np(bn, reps, eps=_BN_EPS):
    g, b, mean, var = (np.asarray(t, np.float32) for t in bn)
    s = g / np.sqrt(var + eps)
    bias = b - mean * s
    return np.tile(s, reps), np.tile(bias, reps)


def prepare_params(params, W):
    """One-shot host-side preprocessing: banded conv matrices for the
    row-folded layout, kh-tap concatenation along K, BN folding, bf16 cast."""
    P = _ROW_FOLD

    def np32(t):
        return np.asarray(t, np.float32)

    def cat_taps(w_hwio):                       # (3,3,Cin,Cout) -> (3L, L)
        m = _band_matrices_np(np32(w_hwio), W, P)
        ks, lin, lout = m.shape
        return m.reshape(ks * lin, lout)

    def branch(bp):
        m1 = _band_matrices_np(np32(bp['conv1']), W, P)[0]     # (L, L)
        mats, scales, biases = [], [], []
        for blk in bp['blocks']:
            for wname, bnname in (('w1', 'bn1'), ('w2', 'bn2')):
                mats.append(cat_taps(blk[wname]))
                s, b = _fold_bn_np(blk[bnname], P * W)
                scales.append(s)
                biases.append(b)
        mats.append(cat_taps(bp['conv3']))
        return {'m1x1': jnp.asarray(m1, jnp.bfloat16),
                'mcats': jnp.asarray(np.stack(mats), jnp.bfloat16),   # (5,3L,L)
                'bn_s': jnp.asarray(np.stack(scales), jnp.float32),   # (4,L)
                'bn_b': jnp.asarray(np.stack(biases), jnp.float32)}   # (4,L)

    return {'rgb': branch(params['rgb']),
            'hha': branch(params['hha']),
            'crp': jnp.asarray(cat_taps(params['crp']), jnp.bfloat16)}


# ---------------------------------------------------------------------------
# The single fused kernel (one batch element per grid step)
# ---------------------------------------------------------------------------

def _make_mmf_kernel(H, W, C):
    P = _ROW_FOLD
    Hs = H // P                    # super-rows
    L = P * W * C                  # folded lane width (128 at toy sizes)
    WC = W * C                     # lanes per row-parity half
    PWC = (W + 4) * C              # per-parity lane-padded width for the pool

    def kernel(xr_ref, xd_ref,
               m1_r, mc_r, s_r, b_r,          # rgb branch weights
               m1_h, mc_h, s_h, b_h,          # hha branch weights
               m_crp,                         # CRP conv weights
               o_ref, pad_ref, pool_ref):
        f32, bf16 = jnp.float32, jnp.bfloat16

        # Zero the H-halo rows of the padded-activation scratch once; only the
        # interior rows are ever rewritten, so the halos stay zero.
        pad_ref[0:1, :] = jnp.zeros((1, L), f32)
        pad_ref[Hs + 1:Hs + 2, :] = jnp.zeros((1, L), f32)

        def conv3(m_cat):
            """3x3 'SAME' conv of the activation stored in pad_ref[1:Hs+1, :]
            as ONE (Hs, 3L) x (3L, L) MXU matmul (taps concatenated along K)."""
            xc = jnp.concatenate(
                [pad_ref[0:Hs, :], pad_ref[1:Hs + 1, :], pad_ref[2:Hs + 2, :]],
                axis=1)
            return jnp.dot(xc.astype(bf16), m_cat,
                           preferred_element_type=f32)

        def branch(x_ref, m1_ref, mc_ref, sc_ref, bi_ref):
            # Dropout(p=0.5) is identity in eval mode.
            # conv1x1 == one block-diagonal matmul on the folded slab.
            y = jnp.dot(x_ref[...].astype(bf16), m1_ref[...],
                        preferred_element_type=f32)
            # two BasicBlocks: relu(bn2(conv2(relu(bn1(conv1(y))))) + y)
            for i in range(2):
                pad_ref[1:Hs + 1, :] = y
                h = conv3(mc_ref[2 * i]) * sc_ref[2 * i:2 * i + 1, :] \
                    + bi_ref[2 * i:2 * i + 1, :]
                h = jnp.maximum(h, 0.0)
                pad_ref[1:Hs + 1, :] = h
                h2 = conv3(mc_ref[2 * i + 1]) * sc_ref[2 * i + 1:2 * i + 2, :] \
                    + bi_ref[2 * i + 1:2 * i + 2, :]
                y = jnp.maximum(h2 + y, 0.0)
            # trailing conv3x3
            pad_ref[1:Hs + 1, :] = y
            return conv3(mc_ref[4])

        y_rgb = branch(xr_ref, m1_r, mc_r, s_r, b_r)
        y_hha = branch(xd_ref, m1_h, mc_h, s_h, b_h)

        # Fusion: x = relu(rgb + hha)  (f32, hence x >= 0 everywhere).
        x = jnp.maximum(y_rgb + y_hha, 0.0)

        # ------- CRP: out = x + conv3x3( maxpool5x5_s1_p2(x) ) --------------
        # Separable max pool; zero padding is exact since x >= 0.
        # (1) W pass, independently per row parity, via a lane-padded scratch.
        pool_ref[...] = jnp.zeros((2, Hs, PWC), f32)
        pool_ref[0, :, 2 * C:2 * C + WC] = x[:, 0:WC]       # even image rows
        pool_ref[1, :, 2 * C:2 * C + WC] = x[:, WC:L]       # odd image rows

        def wpool(p):
            r = pool_ref[p, :, 2 * C:2 * C + WC]            # centre tap
            for kw in (0, 1, 3, 4):
                r = jnp.maximum(r, pool_ref[p, :, kw * C:kw * C + WC])
            return r

        w_even = wpool(0)
        w_odd = wpool(1)

        # (2) H pass: reuse pad_ref (zero halos) for the +/-1 super-row taps.
        #     image row 2r   pools rows 2r-2 .. 2r+2
        #     image row 2r+1 pools rows 2r-1 .. 2r+3
        pad_ref[1:Hs + 1, 0:WC] = w_even
        pad_ref[1:Hs + 1, WC:L] = w_odd
        a0 = pad_ref[0:Hs, 0:WC]
        b0 = pad_ref[0:Hs, WC:L]
        a1 = pad_ref[1:Hs + 1, 0:WC]
        b1 = pad_ref[1:Hs + 1, WC:L]
        a2 = pad_ref[2:Hs + 2, 0:WC]
        b2 = pad_ref[2:Hs + 2, WC:L]
        p_even = jnp.maximum(jnp.maximum(jnp.maximum(a0, b0),
                                         jnp.maximum(a1, b1)), a2)
        p_odd = jnp.maximum(jnp.maximum(jnp.maximum(b0, a1),
                                        jnp.maximum(b1, a2)), b2)

        # conv3x3 on the pooled map, then the CRP residual add.
        pad_ref[1:Hs + 1, 0:WC] = p_even
        pad_ref[1:Hs + 1, WC:L] = p_odd
        o_ref[...] = conv3(m_crp[...]) + x

    return kernel


# ---------------------------------------------------------------------------
# Forward wrapper (NCHW in / NCHW out)
# ---------------------------------------------------------------------------

def _fold(x_nchw):
    """NCHW -> row-folded lane-dense slab (N, H/2, 2*W*C), f32."""
    N, C, H, W = x_nchw.shape
    x = jnp.transpose(x_nchw, (0, 2, 3, 1)).astype(jnp.float32)   # NHWC
    return x.reshape(N, H // _ROW_FOLD, _ROW_FOLD * W * C)


@jax.jit
def mmfnet_forward(x_rgb_nchw, x_dep_nchw, prepared):
    N, C, H, W = x_rgb_nchw.shape
    assert H % _ROW_FOLD == 0, "row-pair folding needs even H"
    Hs = H // _ROW_FOLD
    L = _ROW_FOLD * W * C

    xr = _fold(x_rgb_nchw)
    xd = _fold(x_dep_nchw)
    pr, ph = prepared['rgb'], prepared['hha']

    act_spec = pl.BlockSpec((None, Hs, L), lambda n: (n, 0, 0))

    def w2d(shape):
        return pl.BlockSpec(shape, lambda n: (0, 0))

    def w3d(shape):
        return pl.BlockSpec(shape, lambda n: (0, 0, 0))

    out = pl.pallas_call(
        _make_mmf_kernel(H, W, C),
        grid=(N,),
        in_specs=[act_spec, act_spec,
                  w2d((L, L)), w3d((5, 3 * L, L)), w2d((4, L)), w2d((4, L)),
                  w2d((L, L)), w3d((5, 3 * L, L)), w2d((4, L)), w2d((4, L)),
                  w2d((3 * L, L))],
        out_specs=pl.BlockSpec((None, Hs, L), lambda n: (n, 0, 0)),
        out_shape=jax.ShapeDtypeStruct((N, Hs, L), jnp.float32),
        scratch_shapes=[pltpu.VMEM((Hs + 2, L), jnp.float32),
                        pltpu.VMEM((2, Hs, (W + 4) * C), jnp.float32)],
        compiler_params=pltpu.CompilerParams(
            dimension_semantics=("parallel",),     # v7x: one image per TC
            vmem_limit_bytes=64 * 1024 * 1024),
    )(xr, xd,
      pr['m1x1'], pr['mcats'], pr['bn_s'], pr['bn_b'],
      ph['m1x1'], ph['mcats'], ph['bn_s'], ph['bn_b'],
      prepared['crp'])

    out = out.reshape(N, H, W, C)
    return jnp.transpose(out, (0, 3, 1, 2))


# ---------------------------------------------------------------------------
# Pure-JAX reference (mirrors the kernel's bf16-at-matmul-boundary precision)
# ---------------------------------------------------------------------------

def _q(t):
    return t.astype(jnp.bfloat16).astype(jnp.float32)


def _ref_conv(x, w):
    return jax.lax.conv_general_dilated(
        _q(x), _q(w), window_strides=(1, 1), padding='SAME',
        dimension_numbers=('NHWC', 'HWIO', 'NHWC'),
        precision=jax.lax.Precision.HIGHEST)


def _ref_bn(x, bn, eps=_BN_EPS):
    g, b, m, v = bn
    s = g / jnp.sqrt(v + eps)
    return x * s + (b - m * s)


def _ref_block(y, blk):
    h = jax.nn.relu(_ref_bn(_ref_conv(y, blk['w1']), blk['bn1']))
    h2 = _ref_bn(_ref_conv(h, blk['w2']), blk['bn2'])
    return jax.nn.relu(h2 + y)            # residual in f32, as in the kernel


def _ref_branch(x, bp):
    y = _ref_conv(x, bp['conv1'])
    for blk in bp['blocks']:
        y = _ref_block(y, blk)
    return _ref_conv(y, bp['conv3'])


def mmfnet_reference(x_rgb_nchw, x_dep_nchw, params):
    xr = jnp.transpose(x_rgb_nchw, (0, 2, 3, 1)).astype(jnp.float32)
    xd = jnp.transpose(x_dep_nchw, (0, 2, 3, 1)).astype(jnp.float32)
    yr = _ref_branch(xr, params['rgb'])
    yd = _ref_branch(xd, params['hha'])
    x = jax.nn.relu(yr + yd)
    top = jax.lax.reduce_window(x, jnp.array(-jnp.inf, x.dtype), jax.lax.max,
                                (1, 5, 5, 1), (1, 1, 1, 1), 'SAME')
    out = _ref_conv(top, params['crp']) + x
    return jnp.transpose(out, (0, 3, 1, 2))


# ---------------------------------------------------------------------------
# Deterministic example run
# ---------------------------------------------------------------------------

def _make_bn(key, C):
    k = jax.random.split(key, 4)
    g = 1.0 + 0.1 * jax.random.normal(k[0], (C,), jnp.float32)
    b = 0.1 * jax.random.normal(k[1], (C,), jnp.float32)
    m = 0.1 * jax.random.normal(k[2], (C,), jnp.float32)
    v = jnp.abs(jax.random.normal(k[3], (C,), jnp.float32)) + 0.5
    return (g, b, m, v)


def _make_block(key, C):
    k = jax.random.split(key, 4)
    return {'w1': 0.1 * jax.random.normal(k[0], (3, 3, C, C), jnp.float32),
            'bn1': _make_bn(k[1], C),
            'w2': 0.1 * jax.random.normal(k[2], (3, 3, C, C), jnp.float32),
            'bn2': _make_bn(k[3], C)}


def _make_branch(key, C):
    k = jax.random.split(key, 4)
    return {'conv1': 0.3 * jax.random.normal(k[0], (1, 1, C, C), jnp.float32),
            'blocks': [_make_block(k[1], C), _make_block(k[2], C)],
            'conv3': 0.1 * jax.random.normal(k[3], (3, 3, C, C), jnp.float32)}


if __name__ == "__main__":
    N, C, H, W = 2, 4, 16, 16          # small shapes implied by the module

    key = jax.random.PRNGKey(0)
    k_in, k_rgb, k_hha, k_crp = jax.random.split(key, 4)
    k_xr, k_xd = jax.random.split(k_in)

    x_rgb = jax.random.normal(k_xr, (N, C, H, W), jnp.float32)
    x_dep = jax.random.normal(k_xd, (N, C, H, W), jnp.float32)

    params = {
        'rgb': _make_branch(k_rgb, C),
        'hha': _make_branch(k_hha, C),
        'crp': 0.1 * jax.random.normal(k_crp, (3, 3, C, C), jnp.float32),
    }

    prepared = prepare_params(params, W)      # one-shot host-side prep

    out = mmfnet_forward(x_rgb, x_dep, prepared)
    out = jax.block_until_ready(out)

    ref = mmfnet_reference(x_rgb, x_dep, params)
    assert out.shape == (N, C, H, W)
    max_err = float(jnp.max(jnp.abs(out - ref)))
    assert jnp.allclose(out, ref, atol=1e-2, rtol=1e-2), \
        f"mismatch vs reference, max abs err = {max_err}"

    print("KERNEL_OK")
</pallas_src>

<mosaic_0001>
module attributes {stable_mosaic.version = 11 : i64} {
  func.func @kernel(%arg0: i32, %arg1: memref<1x8x128xf32, #tpu.memory_space<vmem>>, %arg2: memref<1x8x128xf32, #tpu.memory_space<vmem>>, %arg3: memref<128x128xbf16, #tpu.memory_space<vmem>>, %arg4: memref<5x384x128xbf16, #tpu.memory_space<vmem>>, %arg5: memref<4x128xf32, #tpu.memory_space<vmem>>, %arg6: memref<4x128xf32, #tpu.memory_space<vmem>>, %arg7: memref<128x128xbf16, #tpu.memory_space<vmem>>, %arg8: memref<5x384x128xbf16, #tpu.memory_space<vmem>>, %arg9: memref<4x128xf32, #tpu.memory_space<vmem>>, %arg10: memref<4x128xf32, #tpu.memory_space<vmem>>, %arg11: memref<384x128xbf16, #tpu.memory_space<vmem>>, %arg12: memref<1x8x128xf32, #tpu.memory_space<vmem>>, %arg13: memref<10x128xf32, #tpu.memory_space<vmem>>, %arg14: memref<2x8x80xf32, #tpu.memory_space<vmem>>) attributes {dimension_semantics = [#tpu.dimension_semantics<parallel>], iteration_bounds = array<i64: 2>, scalar_prefetch = 0 : i64, scratch_operands = 2 : i64, tpu.core_type = #tpu.core_type<tc>, window_params = [{transform_indices = @transform_0, window_bounds = array<i64: 1, 8, 128>}, {transform_indices = @transform_1, window_bounds = array<i64: 1, 8, 128>}, {pipeline_mode = #tpu.pipeline_mode<synchronous>, transform_indices = @transform_2, window_bounds = array<i64: 128, 128>}, {pipeline_mode = #tpu.pipeline_mode<synchronous>, transform_indices = @transform_3, window_bounds = array<i64: 5, 384, 128>}, {pipeline_mode = #tpu.pipeline_mode<synchronous>, transform_indices = @transform_4, window_bounds = array<i64: 4, 128>}, {pipeline_mode = #tpu.pipeline_mode<synchronous>, transform_indices = @transform_5, window_bounds = array<i64: 4, 128>}, {pipeline_mode = #tpu.pipeline_mode<synchronous>, transform_indices = @transform_6, window_bounds = array<i64: 128, 128>}, {pipeline_mode = #tpu.pipeline_mode<synchronous>, transform_indices = @transform_7, window_bounds = array<i64: 5, 384, 128>}, {pipeline_mode = #tpu.pipeline_mode<synchronous>, transform_indices = @transform_8, window_bounds = array<i64: 4, 128>}, {pipeline_mode = #tpu.pipeline_mode<synchronous>, transform_indices = @transform_9, window_bounds = array<i64: 4, 128>}, {pipeline_mode = #tpu.pipeline_mode<synchronous>, transform_indices = @transform_10, window_bounds = array<i64: 384, 128>}, {transform_indices = @transform_11, window_bounds = array<i64: 1, 8, 128>}]} {
    %cst = arith.constant 0.000000e+00 : f32
    %0 = vector.broadcast %cst : f32 to vector<1x128xf32>
    %c0 = arith.constant 0 : index
    %c0_0 = arith.constant 0 : index
    %1 = vector.load %arg13[%c0, %c0_0] : memref<10x128xf32, #tpu.memory_space<vmem>>, vector<1x128xf32>
    tpu.vector_store %arg13[%c0, %c0_0], %0 {strides = array<i32>} : memref<10x128xf32, #tpu.memory_space<vmem>>, vector<1x128xf32>,
    %cst_1 = arith.constant 0.000000e+00 : f32
    %2 = vector.broadcast %cst_1 : f32 to vector<1x128xf32>
    %c9 = arith.constant 9 : index
    %c0_2 = arith.constant 0 : index
    %3 = vector.load %arg13[%c9, %c0_2] : memref<10x128xf32, #tpu.memory_space<vmem>>, vector<1x128xf32>
    tpu.vector_store %arg13[%c9, %c0_2], %2 {strides = array<i32>} : memref<10x128xf32, #tpu.memory_space<vmem>>, vector<1x128xf32>,
    %c0_3 = arith.constant 0 : index
    %c0_4 = arith.constant 0 : index
    %c0_5 = arith.constant 0 : index
    %4 = vector.load %arg1[%c0_3, %c0_4, %c0_5] : memref<1x8x128xf32, #tpu.memory_space<vmem>>, vector<1x8x128xf32>
    %5 = vector.shape_cast %4 : vector<1x8x128xf32> to vector<8x128xf32>
    %6 = arith.truncf %5 : vector<8x128xf32> to vector<8x128xbf16>
    %c0_6 = arith.constant 0 : index
    %c0_7 = arith.constant 0 : index
    %7 = vector.load %arg3[%c0_6, %c0_7] : memref<128x128xbf16, #tpu.memory_space<vmem>>, vector<128x128xbf16>
    %cst_8 = arith.constant dense<0.000000e+00> : vector<8x128xf32>
    %8 = tpu.matmul %6, %7, %cst_8 {dimension_numbers = #tpu.dot_dimension_numbers<[1], [0], [0], [1], [0, 0, 1, 1], [], []>} : vector<8x128xbf16>, vector<128x128xbf16>, vector<8x128xf32> -> vector<8x128xf32>
    %c1 = arith.constant 1 : index
    %c0_9 = arith.constant 0 : index
    %9 = vector.load %arg13[%c1, %c0_9] : memref<10x128xf32, #tpu.memory_space<vmem>>, vector<8x128xf32>
    tpu.vector_store %arg13[%c1, %c0_9], %8 {strides = array<i32>} : memref<10x128xf32, #tpu.memory_space<vmem>>, vector<8x128xf32>,
    %c0_10 = arith.constant 0 : index
    %c0_11 = arith.constant 0 : index
    %c0_12 = arith.constant 0 : index
    %10 = vector.load %arg4[%c0_10, %c0_11, %c0_12] : memref<5x384x128xbf16, #tpu.memory_space<vmem>>, vector<1x384x128xbf16>
    %11 = vector.shape_cast %10 : vector<1x384x128xbf16> to vector<384x128xbf16>
    %c0_13 = arith.constant 0 : index
    %c0_14 = arith.constant 0 : index
    %12 = vector.load %arg13[%c0_13, %c0_14] : memref<10x128xf32, #tpu.memory_space<vmem>>, vector<8x128xf32>
    %c1_15 = arith.constant 1 : index
    %c0_16 = arith.constant 0 : index
    %13 = vector.load %arg13[%c1_15, %c0_16] : memref<10x128xf32, #tpu.memory_space<vmem>>, vector<8x128xf32>
    %c2 = arith.constant 2 : index
    %c0_17 = arith.constant 0 : index
    %14 = vector.load %arg13[%c2, %c0_17] : memref<10x128xf32, #tpu.memory_space<vmem>>, vector<8x128xf32>
    %15 = tpu.concatenate %12, %13, %14 in 1 : vector<8x128xf32>, vector<8x128xf32>, vector<8x128xf32> -> vector<8x384xf32>
    %16 = arith.truncf %15 : vector<8x384xf32> to vector<8x384xbf16>
    %cst_18 = arith.constant dense<0.000000e+00> : vector<8x128xf32>
    %17 = tpu.matmul %16, %11, %cst_18 {dimension_numbers = #tpu.dot_dimension_numbers<[1], [0], [0], [1], [0, 0, 1, 1], [], []>} : vector<8x384xbf16>, vector<384x128xbf16>, vector<8x128xf32> -> vector<8x128xf32>
    %c0_19 = arith.constant 0 : index
    %c0_20 = arith.constant 0 : index
    %18 = vector.load %arg5[%c0_19, %c0_20] : memref<4x128xf32, #tpu.memory_space<vmem>>, vector<1x128xf32>
    %19 = vector.broadcast %18 : vector<1x128xf32> to vector<8x128xf32>
    %20 = arith.mulf %17, %19 : vector<8x128xf32>
    %c0_21 = arith.constant 0 : index
    %c0_22 = arith.constant 0 : index
    %21 = vector.load %arg6[%c0_21, %c0_22] : memref<4x128xf32, #tpu.memory_space<vmem>>, vector<1x128xf32>
    %22 = vector.broadcast %21 : vector<1x128xf32> to vector<8x128xf32>
    %23 = arith.addf %20, %22 : vector<8x128xf32>
    %cst_23 = arith.constant 0.000000e+00 : f32
    %24 = vector.broadcast %cst_23 : f32 to vector<8x128xf32>
    %25 = arith.maximumf %23, %24 : vector<8x128xf32>
    %c1_24 = arith.constant 1 : index
    %c0_25 = arith.constant 0 : index
    %26 = vector.load %arg13[%c1_24, %c0_25] : memref<10x128xf32, #tpu.memory_space<vmem>>, vector<8x128xf32>
    tpu.vector_store %arg13[%c1_24, %c0_25], %25 {strides = array<i32>} : memref<10x128xf32, #tpu.memory_space<vmem>>, vector<8x128xf32>,
    %c1_26 = arith.constant 1 : index
    %c0_27 = arith.constant 0 : index
    %c0_28 = arith.constant 0 : index
    %27 = vector.load %arg4[%c1_26, %c0_27, %c0_28] : memref<5x384x128xbf16, #tpu.memory_space<vmem>>, vector<1x384x128xbf16>
    %28 = vector.shape_cast %27 : vector<1x384x128xbf16> to vector<384x128xbf16>
    %c0_29 = arith.constant 0 : index
    %c0_30 = arith.constant 0 : index
    %29 = vector.load %arg13[%c0_29, %c0_30] : memref<10x128xf32, #tpu.memory_space<vmem>>, vector<8x128xf32>
    %c1_31 = arith.constant 1 : index
    %c0_32 = arith.constant 0 : index
    %30 = vector.load %arg13[%c1_31, %c0_32] : memref<10x128xf32, #tpu.memory_space<vmem>>, vector<8x128xf32>
    %c2_33 = arith.constant 2 : index
    %c0_34 = arith.constant 0 : index
    %31 = vector.load %arg13[%c2_33, %c0_34] : memref<10x128xf32, #tpu.memory_space<vmem>>, vector<8x128xf32>
    %32 = tpu.concatenate %29, %30, %31 in 1 : vector<8x128xf32>, vector<8x128xf32>, vector<8x128xf32> -> vector<8x384xf32>
    %33 = arith.truncf %32 : vector<8x384xf32> to vector<8x384xbf16>
    %cst_35 = arith.constant dense<0.000000e+00> : vector<8x128xf32>
    %34 = tpu.matmul %33, %28, %cst_35 {dimension_numbers = #tpu.dot_dimension_numbers<[1], [0], [0], [1], [0, 0, 1, 1], [], []>} : vector<8x384xbf16>, vector<384x128xbf16>, vector<8x128xf32> -> vector<8x128xf32>
    %c1_36 = arith.constant 1 : index
    %c0_37 = arith.constant 0 : index
    %35 = vector.load %arg5[%c1_36, %c0_37] : memref<4x128xf32, #tpu.memory_space<vmem>>, vector<1x128xf32>
    %36 = vector.broadcast %35 : vector<1x128xf32> to vector<8x128xf32>
    %37 = arith.mulf %34, %36 : vector<8x128xf32>
    %c1_38 = arith.constant 1 : index
    %c0_39 = arith.constant 0 : index
    %38 = vector.load %arg6[%c1_38, %c0_39] : memref<4x128xf32, #tpu.memory_space<vmem>>, vector<1x128xf32>
    %39 = vector.broadcast %38 : vector<1x128xf32> to vector<8x128xf32>
    %40 = arith.addf %37, %39 : vector<8x128xf32>
    %41 = arith.addf %40, %8 : vector<8x128xf32>
    %cst_40 = arith.constant 0.000000e+00 : f32
    %42 = vector.broadcast %cst_40 : f32 to vector<8x128xf32>
    %43 = arith.maximumf %41, %42 : vector<8x128xf32>
    %c1_41 = arith.constant 1 : index
    %c0_42 = arith.constant 0 : index
    %44 = vector.load %arg13[%c1_41, %c0_42] : memref<10x128xf32, #tpu.memory_space<vmem>>, vector<8x128xf32>
    tpu.vector_store %arg13[%c1_41, %c0_42], %43 {strides = array<i32>} : memref<10x128xf32, #tpu.memory_space<vmem>>, vector<8x128xf32>,
    %c2_43 = arith.constant 2 : index
    %c0_44 = arith.constant 0 : index
    %c0_45 = arith.constant 0 : index
    %45 = vector.load %arg4[%c2_43, %c0_44, %c0_45] : memref<5x384x128xbf16, #tpu.memory_space<vmem>>, vector<1x384x128xbf16>
    %46 = vector.shape_cast %45 : vector<1x384x128xbf16> to vector<384x128xbf16>
    %c0_46 = arith.constant 0 : index
    %c0_47 = arith.constant 0 : index
    %47 = vector.load %arg13[%c0_46, %c0_47] : memref<10x128xf32, #tpu.memory_space<vmem>>, vector<8x128xf32>
    %c1_48 = arith.constant 1 : index
    %c0_49 = arith.constant 0 : index
    %48 = vector.load %arg13[%c1_48, %c0_49] : memref<10x128xf32, #tpu.memory_space<vmem>>, vector<8x128xf32>
    %c2_50 = arith.constant 2 : index
    %c0_51 = arith.constant 0 : index
    %49 = vector.load %arg13[%c2_50, %c0_51] : memref<10x128xf32, #tpu.memory_space<vmem>>, vector<8x128xf32>
    %50 = tpu.concatenate %47, %48, %49 in 1 : vector<8x128xf32>, vector<8x128xf32>, vector<8x128xf32> -> vector<8x384xf32>
    %51 = arith.truncf %50 : vector<8x384xf32> to vector<8x384xbf16>
    %cst_52 = arith.constant dense<0.000000e+00> : vector<8x128xf32>
    %52 = tpu.matmul %51, %46, %cst_52 {dimension_numbers = #tpu.dot_dimension_numbers<[1], [0], [0], [1], [0, 0, 1, 1], [], []>} : vector<8x384xbf16>, vector<384x128xbf16>, vector<8x128xf32> -> vector<8x128xf32>
    %c2_53 = arith.constant 2 : index
    %c0_54 = arith.constant 0 : index
    %53 = vector.load %arg5[%c2_53, %c0_54] : memref<4x128xf32, #tpu.memory_space<vmem>>, vector<1x128xf32>
    %54 = vector.broadcast %53 : vector<1x128xf32> to vector<8x128xf32>
    %55 = arith.mulf %52, %54 : vector<8x128xf32>
    %c2_55 = arith.constant 2 : index
    %c0_56 = arith.constant 0 : index
    %56 = vector.load %arg6[%c2_55, %c0_56] : memref<4x128xf32, #tpu.memory_space<vmem>>, vector<1x128xf32>
    %57 = vector.broadcast %56 : vector<1x128xf32> to vector<8x128xf32>
    %58 = arith.addf %55, %57 : vector<8x128xf32>
    %cst_57 = arith.constant 0.000000e+00 : f32
    %59 = vector.broadcast %cst_57 : f32 to vector<8x128xf32>
    %60 = arith.maximumf %58, %59 : vector<8x128xf32>
    %c1_58 = arith.constant 1 : index
    %c0_59 = arith.constant 0 : index
    %61 = vector.load %arg13[%c1_58, %c0_59] : memref<10x128xf32, #tpu.memory_space<vmem>>, vector<8x128xf32>
    tpu.vector_store %arg13[%c1_58, %c0_59], %60 {strides = array<i32>} : memref<10x128xf32, #tpu.memory_space<vmem>>, vector<8x128xf32>,
    %c3 = arith.constant 3 : index
    %c0_60 = arith.constant 0 : index
    %c0_61 = arith.constant 0 : index
    %62 = vector.load %arg4[%c3, %c0_60, %c0_61] : memref<5x384x128xbf16, #tpu.memory_space<vmem>>, vector<1x384x128xbf16>
    %63 = vector.shape_cast %62 : vector<1x384x128xbf16> to vector<384x128xbf16>
    %c0_62 = arith.constant 0 : index
    %c0_63 = arith.constant 0 : index
    %64 = vector.load %arg13[%c0_62, %c0_63] : memref<10x128xf32, #tpu.memory_space<vmem>>, vector<8x128xf32>
    %c1_64 = arith.constant 1 : index
    %c0_65 = arith.constant 0 : index
    %65 = vector.load %arg13[%c1_64, %c0_65] : memref<10x128xf32, #tpu.memory_space<vmem>>, vector<8x128xf32>
    %c2_66 = arith.constant 2 : index
    %c0_67 = arith.constant 0 : index
    %66 = vector.load %arg13[%c2_66, %c0_67] : memref<10x128xf32, #tpu.memory_space<vmem>>, vector<8x128xf32>
    %67 = tpu.concatenate %64, %65, %66 in 1 : vector<8x128xf32>, vector<8x128xf32>, vector<8x128xf32> -> vector<8x384xf32>
    %68 = arith.truncf %67 : vector<8x384xf32> to vector<8x384xbf16>
    %cst_68 = arith.constant dense<0.000000e+00> : vector<8x128xf32>
    %69 = tpu.matmul %68, %63, %cst_68 {dimension_numbers = #tpu.dot_dimension_numbers<[1], [0], [0], [1], [0, 0, 1, 1], [], []>} : vector<8x384xbf16>, vector<384x128xbf16>, vector<8x128xf32> -> vector<8x128xf32>
    %c3_69 = arith.constant 3 : index
    %c0_70 = arith.constant 0 : index
    %70 = vector.load %arg5[%c3_69, %c0_70] : memref<4x128xf32, #tpu.memory_space<vmem>>, vector<1x128xf32>
    %71 = vector.broadcast %70 : vector<1x128xf32> to vector<8x128xf32>
    %72 = arith.mulf %69, %71 : vector<8x128xf32>
    %c3_71 = arith.constant 3 : index
    %c0_72 = arith.constant 0 : index
    %73 = vector.load %arg6[%c3_71, %c0_72] : memref<4x128xf32, #tpu.memory_space<vmem>>, vector<1x128xf32>
    %74 = vector.broadcast %73 : vector<1x128xf32> to vector<8x128xf32>
    %75 = arith.addf %72, %74 : vector<8x128xf32>
    %76 = arith.addf %75, %43 : vector<8x128xf32>
    %cst_73 = arith.constant 0.000000e+00 : f32
    %77 = vector.broadcast %cst_73 : f32 to vector<8x128xf32>
    %78 = arith.maximumf %76, %77 : vector<8x128xf32>
    %c1_74 = arith.constant 1 : index
    %c0_75 = arith.constant 0 : index
    %79 = vector.load %arg13[%c1_74, %c0_75] : memref<10x128xf32, #tpu.memory_space<vmem>>, vector<8x128xf32>
    tpu.vector_store %arg13[%c1_74, %c0_75], %78 {strides = array<i32>} : memref<10x128xf32, #tpu.memory_space<vmem>>, vector<8x128xf32>,
    %c4 = arith.constant 4 : index
    %c0_76 = arith.constant 0 : index
    %c0_77 = arith.constant 0 : index
    %80 = vector.load %arg4[%c4, %c0_76, %c0_77] : memref<5x384x128xbf16, #tpu.memory_space<vmem>>, vector<1x384x128xbf16>
    %81 = vector.shape_cast %80 : vector<1x384x128xbf16> to vector<384x128xbf16>
    %c0_78 = arith.constant 0 : index
    %c0_79 = arith.constant 0 : index
    %82 = vector.load %arg13[%c0_78, %c0_79] : memref<10x128xf32, #tpu.memory_space<vmem>>, vector<8x128xf32>
    %c1_80 = arith.constant 1 : index
    %c0_81 = arith.constant 0 : index
    %83 = vector.load %arg13[%c1_80, %c0_81] : memref<10x128xf32, #tpu.memory_space<vmem>>, vector<8x128xf32>
    %c2_82 = arith.constant 2 : index
    %c0_83 = arith.constant 0 : index
    %84 = vector.load %arg13[%c2_82, %c0_83] : memref<10x128xf32, #tpu.memory_space<vmem>>, vector<8x128xf32>
    %85 = tpu.concatenate %82, %83, %84 in 1 : vector<8x128xf32>, vector<8x128xf32>, vector<8x128xf32> -> vector<8x384xf32>
    %86 = arith.truncf %85 : vector<8x384xf32> to vector<8x384xbf16>
    %cst_84 = arith.constant dense<0.000000e+00> : vector<8x128xf32>
    %87 = tpu.matmul %86, %81, %cst_84 {dimension_numbers = #tpu.dot_dimension_numbers<[1], [0], [0], [1], [0, 0, 1, 1], [], []>} : vector<8x384xbf16>, vector<384x128xbf16>, vector<8x128xf32> -> vector<8x128xf32>
    %c0_85 = arith.constant 0 : index
    %c0_86 = arith.constant 0 : index
    %c0_87 = arith.constant 0 : index
    %88 = vector.load %arg2[%c0_85, %c0_86, %c0_87] : memref<1x8x128xf32, #tpu.memory_space<vmem>>, vector<1x8x128xf32>
    %89 = vector.shape_cast %88 : vector<1x8x128xf32> to vector<8x128xf32>
    %90 = arith.truncf %89 : vector<8x128xf32> to vector<8x128xbf16>
    %c0_88 = arith.constant 0 : index
    %c0_89 = arith.constant 0 : index
    %91 = vector.load %arg7[%c0_88, %c0_89] : memref<128x128xbf16, #tpu.memory_space<vmem>>, vector<128x128xbf16>
    %cst_90 = arith.constant dense<0.000000e+00> : vector<8x128xf32>
    %92 = tpu.matmul %90, %91, %cst_90 {dimension_numbers = #tpu.dot_dimension_numbers<[1], [0], [0], [1], [0, 0, 1, 1], [], []>} : vector<8x128xbf16>, vector<128x128xbf16>, vector<8x128xf32> -> vector<8x128xf32>
    %c1_91 = arith.constant 1 : index
    %c0_92 = arith.constant 0 : index
    %93 = vector.load %arg13[%c1_91, %c0_92] : memref<10x128xf32, #tpu.memory_space<vmem>>, vector<8x128xf32>
    tpu.vector_store %arg13[%c1_91, %c0_92], %92 {strides = array<i32>} : memref<10x128xf32, #tpu.memory_space<vmem>>, vector<8x128xf32>,
    %c0_93 = arith.constant 0 : index
    %c0_94 = arith.constant 0 : index
    %c0_95 = arith.constant 0 : index
    %94 = vector.load %arg8[%c0_93, %c0_94, %c0_95] : memref<5x384x128xbf16, #tpu.memory_space<vmem>>, vector<1x384x128xbf16>
    %95 = vector.shape_cast %94 : vector<1x384x128xbf16> to vector<384x128xbf16>
    %c0_96 = arith.constant 0 : index
    %c0_97 = arith.constant 0 : index
    %96 = vector.load %arg13[%c0_96, %c0_97] : memref<10x128xf32, #tpu.memory_space<vmem>>, vector<8x128xf32>
    %c1_98 = arith.constant 1 : index
    %c0_99 = arith.constant 0 : index
    %97 = vector.load %arg13[%c1_98, %c0_99] : memref<10x128xf32, #tpu.memory_space<vmem>>, vector<8x128xf32>
    %c2_100 = arith.constant 2 : index
    %c0_101 = arith.constant 0 : index
    %98 = vector.load %arg13[%c2_100, %c0_101] : memref<10x128xf32, #tpu.memory_space<vmem>>, vector<8x128xf32>
    %99 = tpu.concatenate %96, %97, %98 in 1 : vector<8x128xf32>, vector<8x128xf32>, vector<8x128xf32> -> vector<8x384xf32>
    %100 = arith.truncf %99 : vector<8x384xf32> to vector<8x384xbf16>
    %cst_102 = arith.constant dense<0.000000e+00> : vector<8x128xf32>
    %101 = tpu.matmul %100, %95, %cst_102 {dimension_numbers = #tpu.dot_dimension_numbers<[1], [0], [0], [1], [0, 0, 1, 1], [], []>} : vector<8x384xbf16>, vector<384x128xbf16>, vector<8x128xf32> -> vector<8x128xf32>
    %c0_103 = arith.constant 0 : index
    %c0_104 = arith.constant 0 : index
    %102 = vector.load %arg9[%c0_103, %c0_104] : memref<4x128xf32, #tpu.memory_space<vmem>>, vector<1x128xf32>
    %103 = vector.broadcast %102 : vector<1x128xf32> to vector<8x128xf32>
    %104 = arith.mulf %101, %103 : vector<8x128xf32>
    %c0_105 = arith.constant 0 : index
    %c0_106 = arith.constant 0 : index
    %105 = vector.load %arg10[%c0_105, %c0_106] : memref<4x128xf32, #tpu.memory_space<vmem>>, vector<1x128xf32>
    %106 = vector.broadcast %105 : vector<1x128xf32> to vector<8x128xf32>
    %107 = arith.addf %104, %106 : vector<8x128xf32>
    %cst_107 = arith.constant 0.000000e+00 : f32
    %108 = vector.broadcast %cst_107 : f32 to vector<8x128xf32>
    %109 = arith.maximumf %107, %108 : vector<8x128xf32>
    %c1_108 = arith.constant 1 : index
    %c0_109 = arith.constant 0 : index
    %110 = vector.load %arg13[%c1_108, %c0_109] : memref<10x128xf32, #tpu.memory_space<vmem>>, vector<8x128xf32>
    tpu.vector_store %arg13[%c1_108, %c0_109], %109 {strides = array<i32>} : memref<10x128xf32, #tpu.memory_space<vmem>>, vector<8x128xf32>,
    %c1_110 = arith.constant 1 : index
    %c0_111 = arith.constant 0 : index
    %c0_112 = arith.constant 0 : index
    %111 = vector.load %arg8[%c1_110, %c0_111, %c0_112] : memref<5x384x128xbf16, #tpu.memory_space<vmem>>, vector<1x384x128xbf16>
    %112 = vector.shape_cast %111 : vector<1x384x128xbf16> to vector<384x128xbf16>
    %c0_113 = arith.constant 0 : index
    %c0_114 = arith.constant 0 : index
    %113 = vector.load %arg13[%c0_113, %c0_114] : memref<10x128xf32, #tpu.memory_space<vmem>>, vector<8x128xf32>
    %c1_115 = arith.constant 1 : index
    %c0_116 = arith.constant 0 : index
    %114 = vector.load %arg13[%c1_115, %c0_116] : memref<10x128xf32, #tpu.memory_space<vmem>>, vector<8x128xf32>
    %c2_117 = arith.constant 2 : index
    %c0_118 = arith.constant 0 : index
    %115 = vector.load %arg13[%c2_117, %c0_118] : memref<10x128xf32, #tpu.memory_space<vmem>>, vector<8x128xf32>
    %116 = tpu.concatenate %113, %114, %115 in 1 : vector<8x128xf32>, vector<8x128xf32>, vector<8x128xf32> -> vector<8x384xf32>
    %117 = arith.truncf %116 : vector<8x384xf32> to vector<8x384xbf16>
    %cst_119 = arith.constant dense<0.000000e+00> : vector<8x128xf32>
    %118 = tpu.matmul %117, %112, %cst_119 {dimension_numbers = #tpu.dot_dimension_numbers<[1], [0], [0], [1], [0, 0, 1, 1], [], []>} : vector<8x384xbf16>, vector<384x128xbf16>, vector<8x128xf32> -> vector<8x128xf32>
    %c1_120 = arith.constant 1 : index
    %c0_121 = arith.constant 0 : index
    %119 = vector.load %arg9[%c1_120, %c0_121] : memref<4x128xf32, #tpu.memory_space<vmem>>, vector<1x128xf32>
    %120 = vector.broadcast %119 : vector<1x128xf32> to vector<8x128xf32>
    %121 = arith.mulf %118, %120 : vector<8x128xf32>
    %c1_122 = arith.constant 1 : index
    %c0_123 = arith.constant 0 : index
    %122 = vector.load %arg10[%c1_122, %c0_123] : memref<4x128xf32, #tpu.memory_space<vmem>>, vector<1x128xf32>
    %123 = vector.broadcast %122 : vector<1x128xf32> to vector<8x128xf32>
    %124 = arith.addf %121, %123 : vector<8x128xf32>
    %125 = arith.addf %124, %92 : vector<8x128xf32>
    %cst_124 = arith.constant 0.000000e+00 : f32
    %126 = vector.broadcast %cst_124 : f32 to vector<8x128xf32>
    %127 = arith.maximumf %125, %126 : vector<8x128xf32>
    %c1_125 = arith.constant 1 : index
    %c0_126 = arith.constant 0 : index
    %128 = vector.load %arg13[%c1_125, %c0_126] : memref<10x128xf32, #tpu.memory_space<vmem>>, vector<8x128xf32>
    tpu.vector_store %arg13[%c1_125, %c0_126], %127 {strides = array<i32>} : memref<10x128xf32, #tpu.memory_space<vmem>>, vector<8x128xf32>,
    %c2_127 = arith.constant 2 : index
    %c0_128 = arith.constant 0 : index
    %c0_129 = arith.constant 0 : index
    %129 = vector.load %arg8[%c2_127, %c0_128, %c0_129] : memref<5x384x128xbf16, #tpu.memory_space<vmem>>, vector<1x384x128xbf16>
    %130 = vector.shape_cast %129 : vector<1x384x128xbf16> to vector<384x128xbf16>
    %c0_130 = arith.constant 0 : index
    %c0_131 = arith.constant 0 : index
    %131 = vector.load %arg13[%c0_130, %c0_131] : memref<10x128xf32, #tpu.memory_space<vmem>>, vector<8x128xf32>
    %c1_132 = arith.constant 1 : index
    %c0_133 = arith.constant 0 : index
    %132 = vector.load %arg13[%c1_132, %c0_133] : memref<10x128xf32, #tpu.memory_space<vmem>>, vector<8x128xf32>
    %c2_134 = arith.constant 2 : index
    %c0_135 = arith.constant 0 : index
    %133 = vector.load %arg13[%c2_134, %c0_135] : memref<10x128xf32, #tpu.memory_space<vmem>>, vector<8x128xf32>
    %134 = tpu.concatenate %131, %132, %133 in 1 : vector<8x128xf32>, vector<8x128xf32>, vector<8x128xf32> -> vector<8x384xf32>
    %135 = arith.truncf %134 : vector<8x384xf32> to vector<8x384xbf16>
    %cst_136 = arith.constant dense<0.000000e+00> : vector<8x128xf32>
    %136 = tpu.matmul %135, %130, %cst_136 {dimension_numbers = #tpu.dot_dimension_numbers<[1], [0], [0], [1], [0, 0, 1, 1], [], []>} : vector<8x384xbf16>, vector<384x128xbf16>, vector<8x128xf32> -> vector<8x128xf32>
    %c2_137 = arith.constant 2 : index
    %c0_138 = arith.constant 0 : index
    %137 = vector.load %arg9[%c2_137, %c0_138] : memref<4x128xf32, #tpu.memory_space<vmem>>, vector<1x128xf32>
    %138 = vector.broadcast %137 : vector<1x128xf32> to vector<8x128xf32>
    %139 = arith.mulf %136, %138 : vector<8x128xf32>
    %c2_139 = arith.constant 2 : index
    %c0_140 = arith.constant 0 : index
    %140 = vector.load %arg10[%c2_139, %c0_140] : memref<4x128xf32, #tpu.memory_space<vmem>>, vector<1x128xf32>
    %141 = vector.broadcast %140 : vector<1x128xf32> to vector<8x128xf32>
    %142 = arith.addf %139, %141 : vector<8x128xf32>
    %cst_141 = arith.constant 0.000000e+00 : f32
    %143 = vector.broadcast %cst_141 : f32 to vector<8x128xf32>
    %144 = arith.maximumf %142, %143 : vector<8x128xf32>
    %c1_142 = arith.constant 1 : index
    %c0_143 = arith.constant 0 : index
    %145 = vector.load %arg13[%c1_142, %c0_143] : memref<10x128xf32, #tpu.memory_space<vmem>>, vector<8x128xf32>
    tpu.vector_store %arg13[%c1_142, %c0_143], %144 {strides = array<i32>} : memref<10x128xf32, #tpu.memory_space<vmem>>, vector<8x128xf32>,
    %c3_144 = arith.constant 3 : index
    %c0_145 = arith.constant 0 : index
    %c0_146 = arith.constant 0 : index
    %146 = vector.load %arg8[%c3_144, %c0_145, %c0_146] : memref<5x384x128xbf16, #tpu.memory_space<vmem>>, vector<1x384x128xbf16>
    %147 = vector.shape_cast %146 : vector<1x384x128xbf16> to vector<384x128xbf16>
    %c0_147 = arith.constant 0 : index
    %c0_148 = arith.constant 0 : index
    %148 = vector.load %arg13[%c0_147, %c0_148] : memref<10x128xf32, #tpu.memory_space<vmem>>, vector<8x128xf32>
    %c1_149 = arith.constant 1 : index
    %c0_150 = arith.constant 0 : index
    %149 = vector.load %arg13[%c1_149, %c0_150] : memref<10x128xf32, #tpu.memory_space<vmem>>, vector<8x128xf32>
    %c2_151 = arith.constant 2 : index
    %c0_152 = arith.constant 0 : index
    %150 = vector.load %arg13[%c2_151, %c0_152] : memref<10x128xf32, #tpu.memory_space<vmem>>, vector<8x128xf32>
    %151 = tpu.concatenate %148, %149, %150 in 1 : vector<8x128xf32>, vector<8x128xf32>, vector<8x128xf32> -> vector<8x384xf32>
    %152 = arith.truncf %151 : vector<8x384xf32> to vector<8x384xbf16>
    %cst_153 = arith.constant dense<0.000000e+00> : vector<8x128xf32>
    %153 = tpu.matmul %152, %147, %cst_153 {dimension_numbers = #tpu.dot_dimension_numbers<[1], [0], [0], [1], [0, 0, 1, 1], [], []>} : vector<8x384xbf16>, vector<384x128xbf16>, vector<8x128xf32> -> vector<8x128xf32>
    %c3_154 = arith.constant 3 : index
    %c0_155 = arith.constant 0 : index
    %154 = vector.load %arg9[%c3_154, %c0_155] : memref<4x128xf32, #tpu.memory_space<vmem>>, vector<1x128xf32>
    %155 = vector.broadcast %154 : vector<1x128xf32> to vector<8x128xf32>
    %156 = arith.mulf %153, %155 : vector<8x128xf32>
    %c3_156 = arith.constant 3 : index
    %c0_157 = arith.constant 0 : index
    %157 = vector.load %arg10[%c3_156, %c0_157] : memref<4x128xf32, #tpu.memory_space<vmem>>, vector<1x128xf32>
    %158 = vector.broadcast %157 : vector<1x128xf32> to vector<8x128xf32>
    %159 = arith.addf %156, %158 : vector<8x128xf32>
    %160 = arith.addf %159, %127 : vector<8x128xf32>
    %cst_158 = arith.constant 0.000000e+00 : f32
    %161 = vector.broadcast %cst_158 : f32 to vector<8x128xf32>
    %162 = arith.maximumf %160, %161 : vector<8x128xf32>
    %c1_159 = arith.constant 1 : index
    %c0_160 = arith.constant 0 : index
    %163 = vector.load %arg13[%c1_159, %c0_160] : memref<10x128xf32, #tpu.memory_space<vmem>>, vector<8x128xf32>
    tpu.vector_store %arg13[%c1_159, %c0_160], %162 {strides = array<i32>} : memref<10x128xf32, #tpu.memory_space<vmem>>, vector<8x128xf32>,
    %c4_161 = arith.constant 4 : index
    %c0_162 = arith.constant 0 : index
    %c0_163 = arith.constant 0 : index
    %164 = vector.load %arg8[%c4_161, %c0_162, %c0_163] : memref<5x384x128xbf16, #tpu.memory_space<vmem>>, vector<1x384x128xbf16>
    %165 = vector.shape_cast %164 : vector<1x384x128xbf16> to vector<384x128xbf16>
    %c0_164 = arith.constant 0 : index
    %c0_165 = arith.constant 0 : index
    %166 = vector.load %arg13[%c0_164, %c0_165] : memref<10x128xf32, #tpu.memory_space<vmem>>, vector<8x128xf32>
    %c1_166 = arith.constant 1 : index
    %c0_167 = arith.constant 0 : index
    %167 = vector.load %arg13[%c1_166, %c0_167] : memref<10x128xf32, #tpu.memory_space<vmem>>, vector<8x128xf32>
    %c2_168 = arith.constant 2 : index
    %c0_169 = arith.constant 0 : index
    %168 = vector.load %arg13[%c2_168, %c0_169] : memref<10x128xf32, #tpu.memory_space<vmem>>, vector<8x128xf32>
    %169 = tpu.concatenate %166, %167, %168 in 1 : vector<8x128xf32>, vector<8x128xf32>, vector<8x128xf32> -> vector<8x384xf32>
    %170 = arith.truncf %169 : vector<8x384xf32> to vector<8x384xbf16>
    %cst_170 = arith.constant dense<0.000000e+00> : vector<8x128xf32>
    %171 = tpu.matmul %170, %165, %cst_170 {dimension_numbers = #tpu.dot_dimension_numbers<[1], [0], [0], [1], [0, 0, 1, 1], [], []>} : vector<8x384xbf16>, vector<384x128xbf16>, vector<8x128xf32> -> vector<8x128xf32>
    %172 = arith.addf %87, %171 : vector<8x128xf32>
    %cst_171 = arith.constant 0.000000e+00 : f32
    %173 = vector.broadcast %cst_171 : f32 to vector<8x128xf32>
    %174 = arith.maximumf %172, %173 : vector<8x128xf32>
    %cst_172 = arith.constant 0.000000e+00 : f32
    %175 = vector.broadcast %cst_172 : f32 to vector<2x8x80xf32>
    %c0_173 = arith.constant 0 : index
    %c0_174 = arith.constant 0 : index
    %c0_175 = arith.constant 0 : index
    %176 = vector.load %arg14[%c0_173, %c0_174, %c0_175] : memref<2x8x80xf32, #tpu.memory_space<vmem>>, vector<2x8x80xf32>
    tpu.vector_store %arg14[%c0_173, %c0_174, %c0_175], %175 {strides = array<i32>} : memref<2x8x80xf32, #tpu.memory_space<vmem>>, vector<2x8x80xf32>,
    %177 = vector.extract_strided_slice %174 {offsets = [0, 0], sizes = [8, 64], strides = [1, 1]} : vector<8x128xf32> to vector<8x64xf32>
    %c0_176 = arith.constant 0 : index
    %c0_177 = arith.constant 0 : index
    %c8 = arith.constant 8 : index
    %178 = vector.load %arg14[%c0_176, %c0_177, %c8] : memref<2x8x80xf32, #tpu.memory_space<vmem>>, vector<1x8x64xf32>
    %179 = vector.shape_cast %178 : vector<1x8x64xf32> to vector<8x64xf32>
    %180 = vector.shape_cast %177 : vector<8x64xf32> to vector<1x8x64xf32>
    tpu.vector_store %arg14[%c0_176, %c0_177, %c8], %180 {strides = array<i32>} : memref<2x8x80xf32, #tpu.memory_space<vmem>>, vector<1x8x64xf32>,
    %181 = vector.extract_strided_slice %174 {offsets = [0, 64], sizes = [8, 64], strides = [1, 1]} : vector<8x128xf32> to vector<8x64xf32>
    %c1_178 = arith.constant 1 : index
    %c0_179 = arith.constant 0 : index
    %c8_180 = arith.constant 8 : index
    %182 = vector.load %arg14[%c1_178, %c0_179, %c8_180] : memref<2x8x80xf32, #tpu.memory_space<vmem>>, vector<1x8x64xf32>
    %183 = vector.shape_cast %182 : vector<1x8x64xf32> to vector<8x64xf32>
    %184 = vector.shape_cast %181 : vector<8x64xf32> to vector<1x8x64xf32>
    tpu.vector_store %arg14[%c1_178, %c0_179, %c8_180], %184 {strides = array<i32>} : memref<2x8x80xf32, #tpu.memory_space<vmem>>, vector<1x8x64xf32>,
    %c0_181 = arith.constant 0 : index
    %c0_182 = arith.constant 0 : index
    %c8_183 = arith.constant 8 : index
    %185 = vector.load %arg14[%c0_181, %c0_182, %c8_183] : memref<2x8x80xf32, #tpu.memory_space<vmem>>, vector<1x8x64xf32>
    %186 = vector.shape_cast %185 : vector<1x8x64xf32> to vector<8x64xf32>
    %c0_184 = arith.constant 0 : index
    %c0_185 = arith.constant 0 : index
    %c0_186 = arith.constant 0 : index
    %187 = vector.load %arg14[%c0_184, %c0_185, %c0_186] : memref<2x8x80xf32, #tpu.memory_space<vmem>>, vector<1x8x64xf32>
    %188 = vector.shape_cast %187 : vector<1x8x64xf32> to vector<8x64xf32>
    %189 = arith.maximumf %186, %188 : vector<8x64xf32>
    %c0_187 = arith.constant 0 : index
    %c0_188 = arith.constant 0 : index
    %c4_189 = arith.constant 4 : index
    %190 = vector.load %arg14[%c0_187, %c0_188, %c4_189] : memref<2x8x80xf32, #tpu.memory_space<vmem>>, vector<1x8x64xf32>
    %191 = vector.shape_cast %190 : vector<1x8x64xf32> to vector<8x64xf32>
    %192 = arith.maximumf %189, %191 : vector<8x64xf32>
    %c0_190 = arith.constant 0 : index
    %c0_191 = arith.constant 0 : index
    %c12 = arith.constant 12 : index
    %193 = vector.load %arg14[%c0_190, %c0_191, %c12] : memref<2x8x80xf32, #tpu.memory_space<vmem>>, vector<1x8x64xf32>
    %194 = vector.shape_cast %193 : vector<1x8x64xf32> to vector<8x64xf32>
    %195 = arith.maximumf %192, %194 : vector<8x64xf32>
    %c0_192 = arith.constant 0 : index
    %c0_193 = arith.constant 0 : index
    %c16 = arith.constant 16 : index
    %196 = vector.load %arg14[%c0_192, %c0_193, %c16] : memref<2x8x80xf32, #tpu.memory_space<vmem>>, vector<1x8x64xf32>
    %197 = vector.shape_cast %196 : vector<1x8x64xf32> to vector<8x64xf32>
    %198 = arith.maximumf %195, %197 : vector<8x64xf32>
    %c1_194 = arith.constant 1 : index
    %c0_195 = arith.constant 0 : index
    %c8_196 = arith.constant 8 : index
    %199 = vector.load %arg14[%c1_194, %c0_195, %c8_196] : memref<2x8x80xf32, #tpu.memory_space<vmem>>, vector<1x8x64xf32>
    %200 = vector.shape_cast %199 : vector<1x8x64xf32> to vector<8x64xf32>
    %c1_197 = arith.constant 1 : index
    %c0_198 = arith.constant 0 : index
    %c0_199 = arith.constant 0 : index
    %201 = vector.load %arg14[%c1_197, %c0_198, %c0_199] : memref<2x8x80xf32, #tpu.memory_space<vmem>>, vector<1x8x64xf32>
    %202 = vector.shape_cast %201 : vector<1x8x64xf32> to vector<8x64xf32>
    %203 = arith.maximumf %200, %202 : vector<8x64xf32>
    %c1_200 = arith.constant 1 : index
    %c0_201 = arith.constant 0 : index
    %c4_202 = arith.constant 4 : index
    %204 = vector.load %arg14[%c1_200, %c0_201, %c4_202] : memref<2x8x80xf32, #tpu.memory_space<vmem>>, vector<1x8x64xf32>
    %205 = vector.shape_cast %204 : vector<1x8x64xf32> to vector<8x64xf32>
    %206 = arith.maximumf %203, %205 : vector<8x64xf32>
    %c1_203 = arith.constant 1 : index
    %c0_204 = arith.constant 0 : index
    %c12_205 = arith.constant 12 : index
    %207 = vector.load %arg14[%c1_203, %c0_204, %c12_205] : memref<2x8x80xf32, #tpu.memory_space<vmem>>, vector<1x8x64xf32>
    %208 = vector.shape_cast %207 : vector<1x8x64xf32> to vector<8x64xf32>
    %209 = arith.maximumf %206, %208 : vector<8x64xf32>
    %c1_206 = arith.constant 1 : index
    %c0_207 = arith.constant 0 : index
    %c16_208 = arith.constant 16 : index
    %210 = vector.load %arg14[%c1_206, %c0_207, %c16_208] : memref<2x8x80xf32, #tpu.memory_space<vmem>>, vector<1x8x64xf32>
    %211 = vector.shape_cast %210 : vector<1x8x64xf32> to vector<8x64xf32>
    %212 = arith.maximumf %209, %211 : vector<8x64xf32>
    %c1_209 = arith.constant 1 : index
    %c0_210 = arith.constant 0 : index
    %213 = vector.load %arg13[%c1_209, %c0_210] : memref<10x128xf32, #tpu.memory_space<vmem>>, vector<8x64xf32>
    tpu.vector_store %arg13[%c1_209, %c0_210], %198 {strides = array<i32>} : memref<10x128xf32, #tpu.memory_space<vmem>>, vector<8x64xf32>,
    %c1_211 = arith.constant 1 : index
    %c64 = arith.constant 64 : index
    %214 = vector.load %arg13[%c1_211, %c64] : memref<10x128xf32, #tpu.memory_space<vmem>>, vector<8x64xf32>
    tpu.vector_store %arg13[%c1_211, %c64], %212 {strides = array<i32>} : memref<10x128xf32, #tpu.memory_space<vmem>>, vector<8x64xf32>,
    %c0_212 = arith.constant 0 : index
    %c0_213 = arith.constant 0 : index
    %215 = vector.load %arg13[%c0_212, %c0_213] : memref<10x128xf32, #tpu.memory_space<vmem>>, vector<8x64xf32>
    %c0_214 = arith.constant 0 : index
    %c64_215 = arith.constant 64 : index
    %216 = vector.load %arg13[%c0_214, %c64_215] : memref<10x128xf32, #tpu.memory_space<vmem>>, vector<8x64xf32>
    %c1_216 = arith.constant 1 : index
    %c0_217 = arith.constant 0 : index
    %217 = vector.load %arg13[%c1_216, %c0_217] : memref<10x128xf32, #tpu.memory_space<vmem>>, vector<8x64xf32>
    %c1_218 = arith.constant 1 : index
    %c64_219 = arith.constant 64 : index
    %218 = vector.load %arg13[%c1_218, %c64_219] : memref<10x128xf32, #tpu.memory_space<vmem>>, vector<8x64xf32>
    %c2_220 = arith.constant 2 : index
    %c0_221 = arith.constant 0 : index
    %219 = vector.load %arg13[%c2_220, %c0_221] : memref<10x128xf32, #tpu.memory_space<vmem>>, vector<8x64xf32>
    %c2_222 = arith.constant 2 : index
    %c64_223 = arith.constant 64 : index
    %220 = vector.load %arg13[%c2_222, %c64_223] : memref<10x128xf32, #tpu.memory_space<vmem>>, vector<8x64xf32>
    %221 = arith.maximumf %215, %216 : vector<8x64xf32>
    %222 = arith.maximumf %217, %218 : vector<8x64xf32>
    %223 = arith.maximumf %221, %222 : vector<8x64xf32>
    %224 = arith.maximumf %223, %219 : vector<8x64xf32>
    %225 = arith.maximumf %216, %217 : vector<8x64xf32>
    %226 = arith.maximumf %218, %219 : vector<8x64xf32>
    %227 = arith.maximumf %225, %226 : vector<8x64xf32>
    %228 = arith.maximumf %227, %220 : vector<8x64xf32>
    %c1_224 = arith.constant 1 : index
    %c0_225 = arith.constant 0 : index
    %229 = vector.load %arg13[%c1_224, %c0_225] : memref<10x128xf32, #tpu.memory_space<vmem>>, vector<8x64xf32>
    tpu.vector_store %arg13[%c1_224, %c0_225], %224 {strides = array<i32>} : memref<10x128xf32, #tpu.memory_space<vmem>>, vector<8x64xf32>,
    %c1_226 = arith.constant 1 : index
    %c64_227 = arith.constant 64 : index
    %230 = vector.load %arg13[%c1_226, %c64_227] : memref<10x128xf32, #tpu.memory_space<vmem>>, vector<8x64xf32>
    tpu.vector_store %arg13[%c1_226, %c64_227], %228 {strides = array<i32>} : memref<10x128xf32, #tpu.memory_space<vmem>>, vector<8x64xf32>,
    %c0_228 = arith.constant 0 : index
    %c0_229 = arith.constant 0 : index
    %231 = vector.load %arg11[%c0_228, %c0_229] : memref<384x128xbf16, #tpu.memory_space<vmem>>, vector<384x128xbf16>
    %c0_230 = arith.constant 0 : index
    %c0_231 = arith.constant 0 : index
    %232 = vector.load %arg13[%c0_230, %c0_231] : memref<10x128xf32, #tpu.memory_space<vmem>>, vector<8x128xf32>
    %c1_232 = arith.constant 1 : index
    %c0_233 = arith.constant 0 : index
    %233 = vector.load %arg13[%c1_232, %c0_233] : memref<10x128xf32, #tpu.memory_space<vmem>>, vector<8x128xf32>
    %c2_234 = arith.constant 2 : index
    %c0_235 = arith.constant 0 : index
    %234 = vector.load %arg13[%c2_234, %c0_235] : memref<10x128xf32, #tpu.memory_space<vmem>>, vector<8x128xf32>
    %235 = tpu.concatenate %232, %233, %234 in 1 : vector<8x128xf32>, vector<8x128xf32>, vector<8x128xf32> -> vector<8x384xf32>
    %236 = arith.truncf %235 : vector<8x384xf32> to vector<8x384xbf16>
    %cst_236 = arith.constant dense<0.000000e+00> : vector<8x128xf32>
    %237 = tpu.matmul %236, %231, %cst_236 {dimension_numbers = #tpu.dot_dimension_numbers<[1], [0], [0], [1], [0, 0, 1, 1], [], []>} : vector<8x384xbf16>, vector<384x128xbf16>, vector<8x128xf32> -> vector<8x128xf32>
    %238 = arith.addf %237, %174 : vector<8x128xf32>
    %c0_237 = arith.constant 0 : index
    %c0_238 = arith.constant 0 : index
    %c0_239 = arith.constant 0 : index
    %239 = vector.load %arg12[%c0_237, %c0_238, %c0_239] : memref<1x8x128xf32, #tpu.memory_space<vmem>>, vector<1x8x128xf32>
    %240 = vector.shape_cast %239 : vector<1x8x128xf32> to vector<8x128xf32>
    %241 = vector.shape_cast %238 : vector<8x128xf32> to vector<1x8x128xf32>
    tpu.vector_store %arg12[%c0_237, %c0_238, %c0_239], %241 {strides = array<i32>} : memref<1x8x128xf32, #tpu.memory_space<vmem>>, vector<1x8x128xf32>,
    return
  }
  func.func @transform_0(%arg0: i32) -> (i32, i32, i32) {
    %c0_i32 = arith.constant 0 : i32
    %c0_i32_0 = arith.constant 0 : i32
    %c0_i32_1 = arith.constant 0 : i32
    return %arg0, %c0_i32, %c0_i32_0 : i32, i32, i32
  }
  func.func @transform_1(%arg0: i32) -> (i32, i32, i32) {
    %c0_i32 = arith.constant 0 : i32
    %c0_i32_0 = arith.constant 0 : i32
    %c0_i32_1 = arith.constant 0 : i32
    return %arg0, %c0_i32, %c0_i32_0 : i32, i32, i32
  }
  func.func @transform_2(%arg0: i32) -> (i32, i32) {
    %c0_i32 = arith.constant 0 : i32
    %c0_i32_0 = arith.constant 0 : i32
    %c0_i32_1 = arith.constant 0 : i32
    return %c0_i32, %c0_i32_0 : i32, i32
  }
  func.func @transform_3(%arg0: i32) -> (i32, i32, i32) {
    %c0_i32 = arith.constant 0 : i32
    %c0_i32_0 = arith.constant 0 : i32
    %c0_i32_1 = arith.constant 0 : i32
    %c0_i32_2 = arith.constant 0 : i32
    return %c0_i32, %c0_i32_0, %c0_i32_1 : i32, i32, i32
  }
  func.func @transform_4(%arg0: i32) -> (i32, i32) {
    %c0_i32 = arith.constant 0 : i32
    %c0_i32_0 = arith.constant 0 : i32
    %c0_i32_1 = arith.constant 0 : i32
    return %c0_i32, %c0_i32_0 : i32, i32
  }
  func.func @transform_5(%arg0: i32) -> (i32, i32) {
    %c0_i32 = arith.constant 0 : i32
    %c0_i32_0 = arith.constant 0 : i32
    %c0_i32_1 = arith.constant 0 : i32
    return %c0_i32, %c0_i32_0 : i32, i32
  }
  func.func @transform_6(%arg0: i32) -> (i32, i32) {
    %c0_i32 = arith.constant 0 : i32
    %c0_i32_0 = arith.constant 0 : i32
    %c0_i32_1 = arith.constant 0 : i32
    return %c0_i32, %c0_i32_0 : i32, i32
  }
  func.func @transform_7(%arg0: i32) -> (i32, i32, i32) {
    %c0_i32 = arith.constant 0 : i32
    %c0_i32_0 = arith.constant 0 : i32
    %c0_i32_1 = arith.constant 0 : i32
    %c0_i32_2 = arith.constant 0 : i32
    return %c0_i32, %c0_i32_0, %c0_i32_1 : i32, i32, i32
  }
  func.func @transform_8(%arg0: i32) -> (i32, i32) {
    %c0_i32 = arith.constant 0 : i32
    %c0_i32_0 = arith.constant 0 : i32
    %c0_i32_1 = arith.constant 0 : i32
    return %c0_i32, %c0_i32_0 : i32, i32
  }
  func.func @transform_9(%arg0: i32) -> (i32, i32) {
    %c0_i32 = arith.constant 0 : i32
    %c0_i32_0 = arith.constant 0 : i32
    %c0_i32_1 = arith.constant 0 : i32
    return %c0_i32, %c0_i32_0 : i32, i32
  }
  func.func @transform_10(%arg0: i32) -> (i32, i32) {
    %c0_i32 = arith.constant 0 : i32
    %c0_i32_0 = arith.constant 0 : i32
    %c0_i32_1 = arith.constant 0 : i32
    return %c0_i32, %c0_i32_0 : i32, i32
  }
  func.func @transform_11(%arg0: i32) -> (i32, i32, i32) {
    %c0_i32 = arith.constant 0 : i32
    %c0_i32_0 = arith.constant 0 : i32
    %c0_i32_1 = arith.constant 0 : i32
    return %arg0, %c0_i32, %c0_i32_0 : i32, i32, i32
  }
}

</mosaic_0001>

<llo_original>
// kernel: mmfnet_forward.1
$region0: #{mmfnet_forward.1}
  #allocation0 [shape = 'u32[]', space=smem, size = 0x4, offset = 0x4, fixed_abs, tag = 'smem constant byte address 0x4 - core index']
  #allocation1 [shape = 'u32[144,128]{1,0:T(1,128)}', space=vmem, size = 0x12000, scoped, tag = 'internal scratch']
  #allocation2 [shape = 'f32[10,128]{1,0:T(8,128)}', space=vmem, size = 0x2000, scoped, tag = 'scratch operand']
  #allocation3 [shape = 'f32[2,8,80]{2,1,0:T(8,128)}', space=vmem, size = 0x2000, scoped, tag = 'scratch operand']
  %s0 = inlined_call_operand.hbm [shape: f32[2,8,128], index: 0, kind: input, shape index: {}]
  %s1 = inlined_call_operand.hbm [shape: f32[2,8,128], index: 1, kind: input, shape index: {}]
  %s2 = inlined_call_operand.hbm [shape: bf16[128,128], index: 2, kind: input, shape index: {}]
  %s3 = inlined_call_operand.hbm [shape: bf16[5,384,128], index: 3, kind: input, shape index: {}]
  %s4 = inlined_call_operand.hbm [shape: f32[4,128], index: 4, kind: input, shape index: {}]
  %s5 = inlined_call_operand.hbm [shape: f32[4,128], index: 5, kind: input, shape index: {}]
  %s6 = inlined_call_operand.hbm [shape: bf16[128,128], index: 6, kind: input, shape index: {}]
  %s7 = inlined_call_operand.hbm [shape: bf16[5,384,128], index: 7, kind: input, shape index: {}]
  %s8 = inlined_call_operand.hbm [shape: f32[4,128], index: 8, kind: input, shape index: {}]
  %s9 = inlined_call_operand.hbm [shape: f32[4,128], index: 9, kind: input, shape index: {}]
  %s10 = inlined_call_operand.hbm [shape: bf16[384,128], index: 10, kind: input, shape index: {}]
  %s11 = inlined_call_operand.hbm [shape: f32[2,8,128], index: 11, kind: output, shape index: {}]
  %s12 = sld [smem:[#allocation0]]
  $region121: #{mmfnet_forward.1} parent=0
    _
  %s14 = ssub.s32 1, %s12
  %s15 = scalar_select 0, %s14, %s12
  $region1: #{mmfnet_forward.1} parent=0
    #allocation4 [shape = 'u8[8192]{0}', space=vmem, size = 0x2000, scoped, tag = 'input window, operand 0']
    #allocation5 [shape = 's32[2]{0}', space=sflag, size = 0x8, scoped, tag = 'scoped memory for mmfnet_forward.1']
    #allocation6 [shape = 's32[2]{0}', space=sflag, size = 0x8, scoped, tag = 'scoped memory for mmfnet_forward.1']
    #allocation7 [shape = 'u8[8192]{0}', space=vmem, size = 0x2000, scoped, tag = 'input window, operand 1']
    #allocation8 [shape = 's32[2]{0}', space=sflag, size = 0x8, scoped, tag = 'scoped memory for mmfnet_forward.1']
    #allocation9 [shape = 'u8[32768]{0}', space=vmem, size = 0x8000, scoped, tag = 'input window, operand 2, single buffered']
    #allocation10 [shape = 'u8[491520]{0}', space=vmem, size = 0x78000, scoped, tag = 'input window, operand 3, single buffered']
    #allocation11 [shape = 's32[1]{0}', space=sflag, size = 0x4, scoped, tag = 'scoped memory for mmfnet_forward.1']
    #allocation12 [shape = 'u8[2048]{0}', space=vmem, size = 0x800, scoped, tag = 'input window, operand 4, single buffered']
    #allocation13 [shape = 'u8[2048]{0}', space=vmem, size = 0x800, scoped, tag = 'input window, operand 5, single buffered']
    #allocation14 [shape = 's32[1]{0}', space=sflag, size = 0x4, scoped, tag = 'scoped memory for mmfnet_forward.1']
    #allocation15 [shape = 'u8[32768]{0}', space=vmem, size = 0x8000, scoped, tag = 'input window, operand 6, single buffered']
    #allocation16 [shape = 'u8[491520]{0}', space=vmem, size = 0x78000, scoped, tag = 'input window, operand 7, single buffered']
    #allocation17 [shape = 's32[1]{0}', space=sflag, size = 0x4, scoped, tag = 'scoped memory for mmfnet_forward.1']
    #allocation18 [shape = 'u8[2048]{0}', space=vmem, size = 0x800, scoped, tag = 'input window, operand 8, single buffered']
    #allocation19 [shape = 'u8[2048]{0}', space=vmem, size = 0x800, scoped, tag = 'input window, operand 9, single buffered']
    #allocation20 [shape = 's32[1]{0}', space=sflag, size = 0x4, scoped, tag = 'scoped memory for mmfnet_forward.1']
    #allocation21 [shape = 'u8[98304]{0}', space=vmem, size = 0x18000, scoped, tag = 'input window, operand 10, single buffered']
    #allocation22 [shape = 'u8[8192]{0}', space=vmem, size = 0x2000, scoped, tag = 'output window, operand 0']
    %16 = vsyncpa [#allocation5], 0
    %s17 = scalar_lea.sflag [#allocation5], 1
    %18 = vsyncpa %s17, 0
    %19 = vsyncpa [#allocation8], 0
    %s20 = scalar_lea.sflag [#allocation8], 1
    %21 = vsyncpa %s20, 0
    %22 = vsyncpa [#allocation11], 0
    %23 = vsyncpa [#allocation14], 0
    %24 = vsyncpa [#allocation17], 0
    %25 = vsyncpa [#allocation20], 0
    %26 = vsyncpa [#allocation6], 0
    %s27 = scalar_lea.sflag [#allocation6], 1
    %28 = vsyncpa %s27, 0
    loop: start=0, step=1, limit=4
    $region2: #{mmfnet_forward.1} parent=1 // loop_pre_header
      _
    $region3: #{mmfnet_forward.1} parent=1 // loop_header
      %s30 = sphi 0, %s34
      %p31 = scmp.ge.s32.totalorder %s30, 4
      %s40 = sphi 0, %s42
      %s43 = sphi 0, %s40
      %s44 = sphi 0, %s43
      %s60 = sphi 0, %s44
      %s66 = sphi 0, %s68
      %s69 = sphi 0, %s66
      %s70 = sphi 0, %s69
      %s86 = sphi 0, %s70
      %s90 = sphi 0, %s90
      %s92 = sphi 0, %s90
      %s93 = sphi 0, %s92
      %s107 = sphi 0, %s93
      %s111 = sphi 0, %s111
      %s113 = sphi 0, %s111
      %s114 = sphi 0, %s113
      %s128 = sphi 0, %s114
      %s132 = sphi 0, %s132
      %s134 = sphi 0, %s132
      %s135 = sphi 0, %s134
      %s149 = sphi 0, %s135
      %s153 = sphi 0, %s153
      %s155 = sphi 0, %s153
      %s156 = sphi 0, %s155
      %s170 = sphi 0, %s156
      %s174 = sphi 0, %s174
      %s176 = sphi 0, %s174
      %s177 = sphi 0, %s176
      %s191 = sphi 0, %s177
      %s195 = sphi 0, %s195
      %s197 = sphi 0, %s195
      %s198 = sphi 0, %s197
      %s212 = sphi 0, %s198
      %s216 = sphi 0, %s216
      %s218 = sphi 0, %s216
      %s219 = sphi 0, %s218
      %s233 = sphi 0, %s219
      %s237 = sphi 0, %s237
      %s239 = sphi 0, %s237
      %s240 = sphi 0, %s239
      %s254 = sphi 0, %s240
      %s258 = sphi 0, %s258
      %s260 = sphi 0, %s258
      %s261 = sphi 0, %s260
      %s275 = sphi 0, %s261
      %s281 = sphi 0, %s283
      %s284 = sphi 0, %s281
      %s285 = sphi 0, %s284
      %s301 = sphi 0, %s285
    $region4: #{mmfnet_forward.1} parent=1 // loop_header_branch
      %33 = sbr.rel (%p31) target = $region8
    $region5: #{mmfnet_forward.1} parent=1 // loop_body
      %s35 = ssub.s32 %s30, 1
      %s36 = ssub.s32 %s30, 2
      %s37 = sadd.s32 %s30, 1
      %s38 = ssub.s32 %s30, %s37
      %p39 = scmp.eq.s32.totalorder %s38, 0
      %s41 = sadd.s32 %s40, 1
      %s42 = scalar_select %p39, %s40, %s41
      %p45 = pneg %p39
      %p46 = scmp.eq.s32.totalorder %s30, 1
      %p47 = por %p45, %p46
      %p48 = scmp.ne.s32.totalorder %s40, %s43
      %p49 = scmp.eq.s32.totalorder %s30, 0
      %p50 = por %p48, %p49
      %p51 = scmp.ne.s32.totalorder %s40, %s43
      %p52 = scmp.eq.s32.totalorder %s35, 1
      %p53 = por %p51, %p52
      %p54 = scmp.ne.s32.totalorder %s43, %s44
      %p55 = scmp.eq.s32.totalorder %s35, 0
      %p56 = por %p54, %p55
      %p57 = scmp.ne.s32.totalorder %s43, %s44
      %p58 = scmp.eq.s32.totalorder %s36, 1
      %p59 = por %p57, %p58
      %p61 = scmp.ne.s32.totalorder %s44, %s60
      %p62 = scmp.eq.s32.totalorder %s36, 0
      %p63 = por %p61, %p62
      %s64 = ssub.s32 %s30, %s37
      %p65 = scmp.eq.s32.totalorder %s64, 0
      %s67 = sadd.s32 %s66, 1
      %s68 = scalar_select %p65, %s66, %s67
      %p71 = pneg %p65
      %p72 = scmp.eq.s32.totalorder %s30, 1
      %p73 = por %p71, %p72
      %p74 = scmp.ne.s32.totalorder %s66, %s69
      %p75 = scmp.eq.s32.totalorder %s30, 0
      %p76 = por %p74, %p75
      %p77 = scmp.ne.s32.totalorder %s66, %s69
      %p78 = scmp.eq.s32.totalorder %s35, 1
      %p79 = por %p77, %p78
      %p80 = scmp.ne.s32.totalorder %s69, %s70
      %p81 = scmp.eq.s32.totalorder %s35, 0
      %p82 = por %p80, %p81
      %p83 = scmp.ne.s32.totalorder %s69, %s70
      %p84 = scmp.eq.s32.totalorder %s36, 1
      %p85 = por %p83, %p84
      %p87 = scmp.ne.s32.totalorder %s70, %s86
      %p88 = scmp.eq.s32.totalorder %s36, 0
      %p89 = por %p87, %p88
      %s91 = sadd.s32 %s90, 1
      %p94 = scmp.eq.s32.totalorder %s30, 1
      %p95 = scmp.ne.s32.totalorder %s90, %s92
      %p96 = scmp.eq.s32.totalorder %s30, 0
      %p97 = por %p95, %p96
      %p98 = scmp.ne.s32.totalorder %s90, %s92
      %p99 = scmp.eq.s32.totalorder %s35, 1
      %p100 = por %p98, %p99
      %p101 = scmp.ne.s32.totalorder %s92, %s93
      %p102 = scmp.eq.s32.totalorder %s35, 0
      %p103 = por %p101, %p102
      %p104 = scmp.ne.s32.totalorder %s92, %s93
      %p105 = scmp.eq.s32.totalorder %s36, 1
      %p106 = por %p104, %p105
      %p108 = scmp.ne.s32.totalorder %s93, %s107
      %p109 = scmp.eq.s32.totalorder %s36, 0
      %p110 = por %p108, %p109
      %s112 = sadd.s32 %s111, 1
      %p115 = scmp.eq.s32.totalorder %s30, 1
      %p116 = scmp.ne.s32.totalorder %s111, %s113
      %p117 = scmp.eq.s32.totalorder %s30, 0
      %p118 = por %p116, %p117
      %p119 = scmp.ne.s32.totalorder %s111, %s113
      %p120 = scmp.eq.s32.totalorder %s35, 1
      %p121 = por %p119, %p120
      %p122 = scmp.ne.s32.totalorder %s113, %s114
      %p123 = scmp.eq.s32.totalorder %s35, 0
      %p124 = por %p122, %p123
      %p125 = scmp.ne.s32.totalorder %s113, %s114
      %p126 = scmp.eq.s32.totalorder %s36, 1
      %p127 = por %p125, %p126
      %p129 = scmp.ne.s32.totalorder %s114, %s128
      %p130 = scmp.eq.s32.totalorder %s36, 0
      %p131 = por %p129, %p130
      %s133 = sadd.s32 %s132, 1
      %p136 = scmp.eq.s32.totalorder %s30, 1
      %p137 = scmp.ne.s32.totalorder %s132, %s134
      %p138 = scmp.eq.s32.totalorder %s30, 0
      %p139 = por %p137, %p138
      %p140 = scmp.ne.s32.totalorder %s132, %s134
      %p141 = scmp.eq.s32.totalorder %s35, 1
      %p142 = por %p140, %p141
      %p143 = scmp.ne.s32.totalorder %s134, %s135
      %p144 = scmp.eq.s32.totalorder %s35, 0
      %p145 = por %p143, %p144
      %p146 = scmp.ne.s32.totalorder %s134, %s135
      %p147 = scmp.eq.s32.totalorder %s36, 1
      %p148 = por %p146, %p147
      %p150 = scmp.ne.s32.totalorder %s135, %s149
      %p151 = scmp.eq.s32.totalorder %s36, 0
      %p152 = por %p150, %p151
      %s154 = sadd.s32 %s153, 1
      %p157 = scmp.eq.s32.totalorder %s30, 1
      %p158 = scmp.ne.s32.totalorder %s153, %s155
      %p159 = scmp.eq.s32.totalorder %s30, 0
      %p160 = por %p158, %p159
      %p161 = scmp.ne.s32.totalorder %s153, %s155
      %p162 = scmp.eq.s32.totalorder %s35, 1
      %p163 = por %p161, %p162
      %p164 = scmp.ne.s32.totalorder %s155, %s156
      %p165 = scmp.eq.s32.totalorder %s35, 0
      %p166 = por %p164, %p165
      %p167 = scmp.ne.s32.totalorder %s155, %s156
      %p168 = scmp.eq.s32.totalorder %s36, 1
      %p169 = por %p167, %p168
      %p171 = scmp.ne.s32.totalorder %s156, %s170
      %p172 = scmp.eq.s32.totalorder %s36, 0
      %p173 = por %p171, %p172
      %s175 = sadd.s32 %s174, 1
      %p178 = scmp.eq.s32.totalorder %s30, 1
      %p179 = scmp.ne.s32.totalorder %s174, %s176
      %p180 = scmp.eq.s32.totalorder %s30, 0
      %p181 = por %p179, %p180
      %p182 = scmp.ne.s32.totalorder %s174, %s176
      %p183 = scmp.eq.s32.totalorder %s35, 1
      %p184 = por %p182, %p183
      %p185 = scmp.ne.s32.totalorder %s176, %s177
      %p186 = scmp.eq.s32.totalorder %s35, 0
      %p187 = por %p185, %p186
      %p188 = scmp.ne.s32.totalorder %s176, %s177
      %p189 = scmp.eq.s32.totalorder %s36, 1
      %p190 = por %p188, %p189
      %p192 = scmp.ne.s32.totalorder %s177, %s191
      %p193 = scmp.eq.s32.totalorder %s36, 0
      %p194 = por %p192, %p193
      %s196 = sadd.s32 %s195, 1
      %p199 = scmp.eq.s32.totalorder %s30, 1
      %p200 = scmp.ne.s32.totalorder %s195, %s197
      %p201 = scmp.eq.s32.totalorder %s30, 0
      %p202 = por %p200, %p201
      %p203 = scmp.ne.s32.totalorder %s195, %s197
      %p204 = scmp.eq.s32.totalorder %s35, 1
      %p205 = por %p203, %p204
      %p206 = scmp.ne.s32.totalorder %s197, %s198
      %p207 = scmp.eq.s32.totalorder %s35, 0
      %p208 = por %p206, %p207
      %p209 = scmp.ne.s32.totalorder %s197, %s198
      %p210 = scmp.eq.s32.totalorder %s36, 1
      %p211 = por %p209, %p210
      %p213 = scmp.ne.s32.totalorder %s198, %s212
      %p214 = scmp.eq.s32.totalorder %s36, 0
      %p215 = por %p213, %p214
      %s217 = sadd.s32 %s216, 1
      %p220 = scmp.eq.s32.totalorder %s30, 1
      %p221 = scmp.ne.s32.totalorder %s216, %s218
      %p222 = scmp.eq.s32.totalorder %s30, 0
      %p223 = por %p221, %p222
      %p224 = scmp.ne.s32.totalorder %s216, %s218
      %p225 = scmp.eq.s32.totalorder %s35, 1
      %p226 = por %p224, %p225
      %p227 = scmp.ne.s32.totalorder %s218, %s219
      %p228 = scmp.eq.s32.totalorder %s35, 0
      %p229 = por %p227, %p228
      %p230 = scmp.ne.s32.totalorder %s218, %s219
      %p231 = scmp.eq.s32.totalorder %s36, 1
      %p232 = por %p230, %p231
      %p234 = scmp.ne.s32.totalorder %s219, %s233
      %p235 = scmp.eq.s32.totalorder %s36, 0
      %p236 = por %p234, %p235
      %s238 = sadd.s32 %s237, 1
      %p241 = scmp.eq.s32.totalorder %s30, 1
      %p242 = scmp.ne.s32.totalorder %s237, %s239
      %p243 = scmp.eq.s32.totalorder %s30, 0
      %p244 = por %p242, %p243
      %p245 = scmp.ne.s32.totalorder %s237, %s239
      %p246 = scmp.eq.s32.totalorder %s35, 1
      %p247 = por %p245, %p246
      %p248 = scmp.ne.s32.totalorder %s239, %s240
      %p249 = scmp.eq.s32.totalorder %s35, 0
      %p250 = por %p248, %p249
      %p251 = scmp.ne.s32.totalorder %s239, %s240
      %p252 = scmp.eq.s32.totalorder %s36, 1
      %p253 = por %p251, %p252
      %p255 = scmp.ne.s32.totalorder %s240, %s254
      %p256 = scmp.eq.s32.totalorder %s36, 0
      %p257 = por %p255, %p256
      %s259 = sadd.s32 %s258, 1
      %p262 = scmp.eq.s32.totalorder %s30, 1
      %p263 = scmp.ne.s32.totalorder %s258, %s260
      %p264 = scmp.eq.s32.totalorder %s30, 0
      %p265 = por %p263, %p264
      %p266 = scmp.ne.s32.totalorder %s258, %s260
      %p267 = scmp.eq.s32.totalorder %s35, 1
      %p268 = por %p266, %p267
      %p269 = scmp.ne.s32.totalorder %s260, %s261
      %p270 = scmp.eq.s32.totalorder %s35, 0
      %p271 = por %p269, %p270
      %p272 = scmp.ne.s32.totalorder %s260, %s261
      %p273 = scmp.eq.s32.totalorder %s36, 1
      %p274 = por %p272, %p273
      %p276 = scmp.ne.s32.totalorder %s261, %s275
      %p277 = scmp.eq.s32.totalorder %s36, 0
      %p278 = por %p276, %p277
      %s279 = ssub.s32 %s30, %s37
      %p280 = scmp.eq.s32.totalorder %s279, 0
      %s282 = sadd.s32 %s281, 1
      %s283 = scalar_select %p280, %s281, %s282
      %p286 = pneg %p280
      %p287 = scmp.eq.s32.totalorder %s30, 1
      %p288 = por %p286, %p287
      %p289 = scmp.ne.s32.totalorder %s281, %s284
      %p290 = scmp.eq.s32.totalorder %s30, 0
      %p291 = por %p289, %p290
      %p292 = scmp.ne.s32.totalorder %s281, %s284
      %p293 = scmp.eq.s32.totalorder %s35, 1
      %p294 = por %p292, %p293
      %p295 = scmp.ne.s32.totalorder %s284, %s285
      %p296 = scmp.eq.s32.totalorder %s35, 0
      %p297 = por %p295, %p296
      %p298 = scmp.ne.s32.totalorder %s284, %s285
      %p299 = scmp.eq.s32.totalorder %s36, 1
      %p300 = por %p298, %p299
      %p302 = scmp.ne.s32.totalorder %s285, %s301
      %p303 = scmp.eq.s32.totalorder %s36, 0
      %p304 = por %p302, %p303
      %p305 = scmp.le.s32.totalorder 1, %s30
      %p306 = scmp.lt.s32.totalorder %s30, 3
      %p307 = pnand %p305, %p306
      %p308 = pneg %p307
      // Predicated region
      $region9: #{mmfnet_forward.1} parent=5 // pred_check
        _
      $region10: #{mmfnet_forward.1} parent=5 // pred_check_branch
        %310 = sbr.rel (%p307) target = $region12
      $region11: #{mmfnet_forward.1} parent=5 // pred_region
        %s311 = ssub.s32 %s30, 1
        // Predicated region
        $region13: #{mmfnet_forward.1} parent=11 // pred_check
          %p312 = pneg %p103
        $region14: #{mmfnet_forward.1} parent=11 // pred_check_branch
          %314 = sbr.rel (%p312) target = $region16
        $region15: #{mmfnet_forward.1} parent=11 // pred_region
          %s316 = ssub.s32 1024, 1024
          %317 = vsyncadd [#allocation8], %s316
          %s318 = sshll.u32 [#allocation9], 4
          %s319 = int_to_ptr.vmem [resolvable:$true] %s318
          %324 = dma.hbm_to_vmem [thread:$0]  %s2, 1024, %s319, [#allocation8], 64, 64, 4
        $region16: #{mmfnet_forward.1} parent=11 // pred_fallthru
          _
        // Predicated region
        $region17: #{mmfnet_forward.1} parent=11 // pred_check
          %p325 = pneg %p124
        $region18: #{mmfnet_forward.1} parent=11 // pred_check_branch
          %327 = sbr.rel (%p325) target = $region20
        $region19: #{mmfnet_forward.1} parent=11 // pred_region
          %s329 = ssub.s32 15360, 15360
          %330 = vsyncadd [#allocation11], %s329
          %s331 = sshll.u32 [#allocation10], 4
          %s332 = int_to_ptr.vmem [resolvable:$true] %s331
          %337 = dma.hbm_to_vmem [thread:$0]  %s3, 15360, %s332, [#allocation11], 64, 64, 4
        $region20: #{mmfnet_forward.1} parent=11 // pred_fallthru
          _
        // Predicated region
        $region21: #{mmfnet_forward.1} parent=11 // pred_check
          %p338 = pneg %p145
        $region22: #{mmfnet_forward.1} parent=11 // pred_check_branch
          %340 = sbr.rel (%p338) target = $region24
        $region23: #{mmfnet_forward.1} parent=11 // pred_region
          %s342 = ssub.s32 64, 64
          %343 = vsyncadd [#allocation11], %s342
          %s345 = sshll.u32 [#allocation12], 4
          %s346 = int_to_ptr.vmem [resolvable:$true] %s345
          %348 = dma.hbm_to_vmem [thread:$0]  %s4, 64, %s346, [#allocation11]
        $region24: #{mmfnet_forward.1} parent=11 // pred_fallthru
          _
        // Predicated region
        $region25: #{mmfnet_forward.1} parent=11 // pred_check
          %p349 = pneg %p166
        $region26: #{mmfnet_forward.1} parent=11 // pred_check_branch
          %351 = sbr.rel (%p349) target = $region28
        $region27: #{mmfnet_forward.1} parent=11 // pred_region
          %s353 = ssub.s32 64, 64
          %354 = vsyncadd [#allocation14], %s353
          %s356 = sshll.u32 [#allocation13], 4
          %s357 = int_to_ptr.vmem [resolvable:$true] %s356
          %359 = dma.hbm_to_vmem [thread:$0]  %s5, 64, %s357, [#allocation14]
        $region28: #{mmfnet_forward.1} parent=11 // pred_fallthru
          _
        // Predicated region
        $region29: #{mmfnet_forward.1} parent=11 // pred_check
          %p360 = pneg %p187
        $region30: #{mmfnet_forward.1} parent=11 // pred_check_branch
          %362 = sbr.rel (%p360) target = $region32
        $region31: #{mmfnet_forward.1} parent=11 // pred_region
          %s364 = ssub.s32 1024, 1024
          %365 = vsyncadd [#allocation14], %s364
          %s366 = sshll.u32 [#allocation15], 4
          %s367 = int_to_ptr.vmem [resolvable:$true] %s366
          %372 = dma.hbm_to_vmem [thread:$0]  %s6, 1024, %s367, [#allocation14], 64, 64, 4
        $region32: #{mmfnet_forward.1} parent=11 // pred_fallthru
          _
        // Predicated region
        $region33: #{mmfnet_forward.1} parent=11 // pred_check
          %p373 = pneg %p208
        $region34: #{mmfnet_forward.1} parent=11 // pred_check_branch
          %375 = sbr.rel (%p373) target = $region36
        $region35: #{mmfnet_forward.1} parent=11 // pred_region
          %s377 = ssub.s32 15360, 15360
          %378 = vsyncadd [#allocation17], %s377
          %s379 = sshll.u32 [#allocation16], 4
          %s380 = int_to_ptr.vmem [resolvable:$true] %s379
          %385 = dma.hbm_to_vmem [thread:$0]  %s7, 15360, %s380, [#allocation17], 64, 64, 4
        $region36: #{mmfnet_forward.1} parent=11 // pred_fallthru
          _
        // Predicated region
        $region37: #{mmfnet_forward.1} parent=11 // pred_check
          %p386 = pneg %p229
        $region38: #{mmfnet_forward.1} parent=11 // pred_check_branch
          %388 = sbr.rel (%p386) target = $region40
        $region39: #{mmfnet_forward.1} parent=11 // pred_region
          %s390 = ssub.s32 64, 64
          %391 = vsyncadd [#allocation17], %s390
          %s393 = sshll.u32 [#allocation18], 4
          %s394 = int_to_ptr.vmem [resolvable:$true] %s393
          %396 = dma.hbm_to_vmem [thread:$0]  %s8, 64, %s394, [#allocation17]
        $region40: #{mmfnet_forward.1} parent=11 // pred_fallthru
          _
        // Predicated region
        $region41: #{mmfnet_forward.1} parent=11 // pred_check
          %p397 = pneg %p250
        $region42: #{mmfnet_forward.1} parent=11 // pred_check_branch
          %399 = sbr.rel (%p397) target = $region44
        $region43: #{mmfnet_forward.1} parent=11 // pred_region
          %s401 = ssub.s32 64, 64
          %402 = vsyncadd [#allocation20], %s401
          %s404 = sshll.u32 [#allocation19], 4
          %s405 = int_to_ptr.vmem [resolvable:$true] %s404
          %407 = dma.hbm_to_vmem [thread:$0]  %s9, 64, %s405, [#allocation20]
        $region44: #{mmfnet_forward.1} parent=11 // pred_fallthru
          _
        // Predicated region
        $region45: #{mmfnet_forward.1} parent=11 // pred_check
          %p408 = pneg %p271
        $region46: #{mmfnet_forward.1} parent=11 // pred_check_branch
          %410 = sbr.rel (%p408) target = $region48
        $region47: #{mmfnet_forward.1} parent=11 // pred_region
          %s412 = ssub.s32 3072, 3072
          %413 = vsyncadd [#allocation20], %s412
          %s414 = sshll.u32 [#allocation21], 4
          %s415 = int_to_ptr.vmem [resolvable:$true] %s414
          %420 = dma.hbm_to_vmem [thread:$0]  %s10, 3072, %s415, [#allocation20], 64, 64, 4
        $region48: #{mmfnet_forward.1} parent=11 // pred_fallthru
          _
      $region12: #{mmfnet_forward.1} parent=5 // pred_fallthru
        _
      %p421 = scmp.lt.s32.totalorder %s30, 2
      // Predicated region
      $region49: #{mmfnet_forward.1} parent=5 // pred_check
        %p422 = pneg %p421
      $region50: #{mmfnet_forward.1} parent=5 // pred_check_branch
        %424 = sbr.rel (%p422) target = $region52
      $region51: #{mmfnet_forward.1} parent=5 // pred_region
        // Predicated region
        $region53: #{mmfnet_forward.1} parent=51 // pred_check
          %p425 = pneg %p50
        $region54: #{mmfnet_forward.1} parent=51 // pred_check_branch
          %427 = sbr.rel (%p425) target = $region56
        $region55: #{mmfnet_forward.1} parent=51 // pred_region
          %s428 = sand.u32 %s40, 1
          %s429 = scalar_lea.sflag [#allocation5], %s428
          %s430 = sand.u32 %s40, 1
          %s431 = smul.addr %s430, 8
          %s432 = scalar_lea.vmem [#allocation4], %s431
          %s434 = ssub.s32 128, 128
          %435 = vsyncadd %s429, %s434
          %s436 = smul.addr %s30, 128
          %s437 = scalar_lea.hbm %s0, %s436
          %s439 = sshll.u32 %s432, 4
          %s440 = int_to_ptr.vmem [resolvable:$true] %s439
          %442 = dma.hbm_to_vmem [thread:$0]  %s437, 128, %s440, %s429
        $region56: #{mmfnet_forward.1} parent=51 // pred_fallthru
          _
        // Predicated region
        $region57: #{mmfnet_forward.1} parent=51 // pred_check
          %p443 = pneg %p76
        $region58: #{mmfnet_forward.1} parent=51 // pred_check_branch
          %445 = sbr.rel (%p443) target = $region60
        $region59: #{mmfnet_forward.1} parent=51 // pred_region
          %s446 = sand.u32 %s30, 1
          %s447 = scalar_lea.sflag [#allocation8], %s446
          %s448 = sand.u32 %s66, 1
          %s449 = smul.addr %s448, 8
          %s450 = scalar_lea.vmem [#allocation7], %s449
          %s452 = ssub.s32 128, 128
          %453 = vsyncadd %s447, %s452
          %s454 = smul.addr %s30, 128
          %s455 = scalar_lea.hbm %s1, %s454
          %s457 = sshll.u32 %s450, 4
          %s458 = int_to_ptr.vmem [resolvable:$true] %s457
          %460 = dma.hbm_to_vmem [thread:$0]  %s455, 128, %s458, %s447
        $region60: #{mmfnet_forward.1} parent=51 // pred_fallthru
          _
      $region52: #{mmfnet_forward.1} parent=5 // pred_fallthru
        _
      %p461 = scmp.le.s32.totalorder 1, %s30
      %p462 = scmp.lt.s32.totalorder %s30, 3
      %p463 = pnand %p461, %p462
      %p464 = pneg %p463
      // Predicated region
      $region61: #{mmfnet_forward.1} parent=5 // pred_check
        _
      $region62: #{mmfnet_forward.1} parent=5 // pred_check_branch
        %466 = sbr.rel (%p463) target = $region64
      $region63: #{mmfnet_forward.1} parent=5 // pred_region
        %s467 = ssub.s32 %s30, 1
        %s468 = sand.u32 %s43, 1
        %s469 = scalar_lea.sflag [#allocation5], %s468
        %s470 = sand.u32 %s43, 1
        %s471 = smul.addr %s470, 8
        %s472 = scalar_lea.vmem [#allocation4], %s471
        // Predicated region
        $region65: #{mmfnet_forward.1} parent=63 // pred_check
          %p473 = pneg %p56
        $region66: #{mmfnet_forward.1} parent=63 // pred_check_branch
          %475 = sbr.rel (%p473) target = $region68
        $region67: #{mmfnet_forward.1} parent=63 // pred_region
          %476 = dma.done %s469, 128
        $region68: #{mmfnet_forward.1} parent=63 // pred_fallthru
          _
        %s477 = sand.u32 %s35, 1
        %s478 = scalar_lea.sflag [#allocation8], %s477
        %s479 = sand.u32 %s69, 1
        %s480 = smul.addr %s479, 8
        %s481 = scalar_lea.vmem [#allocation7], %s480
        // Predicated region
        $region69: #{mmfnet_forward.1} parent=63 // pred_check
          %p482 = pneg %p82
        $region70: #{mmfnet_forward.1} parent=63 // pred_check_branch
          %484 = sbr.rel (%p482) target = $region72
        $region71: #{mmfnet_forward.1} parent=63 // pred_region
          %485 = dma.done %s478, 128
        $region72: #{mmfnet_forward.1} parent=63 // pred_fallthru
          _
        // Predicated region
        $region73: #{mmfnet_forward.1} parent=63 // pred_check
          %p486 = pneg %p103
        $region74: #{mmfnet_forward.1} parent=63 // pred_check_branch
          %488 = sbr.rel (%p486) target = $region76
        $region75: #{mmfnet_forward.1} parent=63 // pred_region
          %489 = dma.done [#allocation8], 1024
        $region76: #{mmfnet_forward.1} parent=63 // pred_fallthru
          _
        // Predicated region
        $region77: #{mmfnet_forward.1} parent=63 // pred_check
          %p490 = pneg %p124
        $region78: #{mmfnet_forward.1} parent=63 // pred_check_branch
          %492 = sbr.rel (%p490) target = $region80
        $region79: #{mmfnet_forward.1} parent=63 // pred_region
          %493 = dma.done [#allocation11], 15360
        $region80: #{mmfnet_forward.1} parent=63 // pred_fallthru
          _
        // Predicated region
        $region81: #{mmfnet_forward.1} parent=63 // pred_check
          %p494 = pneg %p145
        $region82: #{mmfnet_forward.1} parent=63 // pred_check_branch
          %496 = sbr.rel (%p494) target = $region84
        $region83: #{mmfnet_forward.1} parent=63 // pred_region
          %497 = dma.done [#allocation11], 64
        $region84: #{mmfnet_forward.1} parent=63 // pred_fallthru
          _
        // Predicated region
        $region85: #{mmfnet_forward.1} parent=63 // pred_check
          %p498 = pneg %p166
        $region86: #{mmfnet_forward.1} parent=63 // pred_check_branch
          %500 = sbr.rel (%p498) target = $region88
        $region87: #{mmfnet_forward.1} parent=63 // pred_region
          %501 = dma.done [#allocation14], 64
        $region88: #{mmfnet_forward.1} parent=63 // pred_fallthru
          _
        // Predicated region
        $region89: #{mmfnet_forward.1} parent=63 // pred_check
          %p502 = pneg %p187
        $region90: #{mmfnet_forward.1} parent=63 // pred_check_branch
          %504 = sbr.rel (%p502) target = $region92
        $region91: #{mmfnet_forward.1} parent=63 // pred_region
          %505 = dma.done [#allocation14], 1024
        $region92: #{mmfnet_forward.1} parent=63 // pred_fallthru
          _
        // Predicated region
        $region93: #{mmfnet_forward.1} parent=63 // pred_check
          %p506 = pneg %p208
        $region94: #{mmfnet_forward.1} parent=63 // pred_check_branch
          %508 = sbr.rel (%p506) target = $region96
        $region95: #{mmfnet_forward.1} parent=63 // pred_region
          %509 = dma.done [#allocation17], 15360
        $region96: #{mmfnet_forward.1} parent=63 // pred_fallthru
          _
        // Predicated region
        $region97: #{mmfnet_forward.1} parent=63 // pred_check
          %p510 = pneg %p229
        $region98: #{mmfnet_forward.1} parent=63 // pred_check_branch
          %512 = sbr.rel (%p510) target = $region100
        $region99: #{mmfnet_forward.1} parent=63 // pred_region
          %513 = dma.done [#allocation17], 64
        $region100: #{mmfnet_forward.1} parent=63 // pred_fallthru
          _
        // Predicated region
        $region101: #{mmfnet_forward.1} parent=63 // pred_check
          %p514 = pneg %p250
        $region102: #{mmfnet_forward.1} parent=63 // pred_check_branch
          %516 = sbr.rel (%p514) target = $region104
        $region103: #{mmfnet_forward.1} parent=63 // pred_region
          %517 = dma.done [#allocation20], 64
        $region104: #{mmfnet_forward.1} parent=63 // pred_fallthru
          _
        // Predicated region
        $region105: #{mmfnet_forward.1} parent=63 // pred_check
          %p518 = pneg %p271
        $region106: #{mmfnet_forward.1} parent=63 // pred_check_branch
          %520 = sbr.rel (%p518) target = $region108
        $region107: #{mmfnet_forward.1} parent=63 // pred_region
          %521 = dma.done [#allocation20], 3072
        $region108: #{mmfnet_forward.1} parent=63 // pred_fallthru
          _
        %s522 = sand.u32 %s43, 1
        %s523 = scalar_lea.sflag [#allocation5], %s522
        %s524 = sand.u32 %s43, 1
        %s525 = smul.addr %s524, 8
        %s526 = scalar_lea.vmem [#allocation4], %s525
        %p527 = pneg %p56
        %p528 = pneg %p53
        %s529 = sand.u32 %s35, 1
        %s530 = scalar_lea.sflag [#allocation8], %s529
        %s531 = sand.u32 %s69, 1
        %s532 = smul.addr %s531, 8
        %s533 = scalar_lea.vmem [#allocation7], %s532
        %p534 = pneg %p82
        %p535 = pneg %p79
        %p536 = pneg %p103
        %p537 = pneg %p100
        %p538 = pneg %p124
        %p539 = pneg %p121
        %p540 = pneg %p145
        %p541 = pneg %p142
        %p542 = pneg %p166
        %p543 = pneg %p163
        %p544 = pneg %p187
        %p545 = pneg %p184
        %p546 = pneg %p208
        %p547 = pneg %p205
        %p548 = pneg %p229
        %p549 = pneg %p226
        %p550 = pneg %p250
        %p551 = pneg %p247
        %p552 = pneg %p271
        %p553 = pneg %p268
        %p554 = pneg %p297
        %p555 = pneg %p294
        %s556 = sand.u32 %s284, 1
        %s557 = scalar_lea.sflag [#allocation6], %s556
        %s558 = sand.u32 %s284, 1
        %s559 = smul.addr %s558, 8
        %s560 = scalar_lea.vmem [#allocation22], %s559
        %562 = vst [vmem:[#allocation2] sm:$0x1] 0.0
        %563 = vst [vmem:[#allocation2 + $0x9] sm:$0x1] 0.0
        %v564 = vld [vmem:[%s472] sm:$0xff]
        %v565 = vpack.c.bf16 %v564, %v564
        %v566 = vld [vmem:[#allocation9] sm:$0xf]
        %v567 = vld [vmem:[#allocation9 + $0x4] sm:$0xf]
        %v568 = vld [vmem:[#allocation9 + $0x8] sm:$0xf]
        %v569 = vld [vmem:[#allocation9 + $0xc] sm:$0xf]
        %v570 = vld [vmem:[#allocation9 + $0x10] sm:$0xf]
        %v571 = vld [vmem:[#allocation9 + $0x14] sm:$0xf]
        %v572 = vld [vmem:[#allocation9 + $0x18] sm:$0xf]
        %v573 = vld [vmem:[#allocation9 + $0x1c] sm:$0xf]
        %v574 = vld [vmem:[#allocation9 + $0x20] sm:$0xf]
        %v575 = vld [vmem:[#allocation9 + $0x24] sm:$0xf]
        %v576 = vld [vmem:[#allocation9 + $0x28] sm:$0xf]
        %v577 = vld [vmem:[#allocation9 + $0x2c] sm:$0xf]
        %v578 = vld [vmem:[#allocation9 + $0x30] sm:$0xf]
        %v579 = vld [vmem:[#allocation9 + $0x34] sm:$0xf]
        %v580 = vld [vmem:[#allocation9 + $0x38] sm:$0xf]
        %v581 = vld [vmem:[#allocation9 + $0x3c] sm:$0xf]
        %v598 = vunpack.c.l.b16 %v566
        %v599 = vunpack.c.l.b16 %v567
        %v600 = vunpack.c.l.b16 %v568
        %v601 = vunpack.c.l.b16 %v569
        %v602 = vunpack.c.l.b16 %v570
        %v603 = vunpack.c.l.b16 %v571
        %v604 = vunpack.c.l.b16 %v572
        %v605 = vunpack.c.l.b16 %v573
        %v606 = vunpack.c.l.b16 %v574
        %v607 = vunpack.c.l.b16 %v575
        %v608 = vunpack.c.l.b16 %v576
        %v609 = vunpack.c.l.b16 %v577
        %v610 = vunpack.c.l.b16 %v578
        %v611 = vunpack.c.l.b16 %v579
        %v612 = vunpack.c.l.b16 %v580
        %v613 = vunpack.c.l.b16 %v581
        %v614 = vpack.c.b16 %v599, %v598
        %v615 = vpack.c.b16 %v601, %v600
        %v616 = vpack.c.b16 %v603, %v602
        %v617 = vpack.c.b16 %v605, %v604
        %v618 = vpack.c.b16 %v607, %v606
        %v619 = vpack.c.b16 %v609, %v608
        %v620 = vpack.c.b16 %v611, %v610
        %v621 = vpack.c.b16 %v613, %v612
        %630 = vmatprep.subr.bf16.mxu0 0
        %631 = vmatpush1.bf16.msra.mxu0 %v614
        %632 = vmatprep.subr.bf16.mxu0 0
        %633 = vmatpush1.bf16.msra.mxu0 %v615
        %634 = vmatprep.subr.bf16.mxu0 0
        %635 = vmatpush1.bf16.msra.mxu0 %v616
        %636 = vmatprep.subr.bf16.mxu0 0
        %637 = vmatpush1.bf16.msra.mxu0 %v617
        %638 = vmatprep.subr.bf16.mxu0 0
        %639 = vmatpush1.bf16.msra.mxu0 %v618
        %640 = vmatprep.subr.bf16.mxu0 0
        %641 = vmatpush1.bf16.msra.mxu0 %v619
        %642 = vmatprep.subr.bf16.mxu0 0
        %643 = vmatpush1.bf16.msra.mxu0 %v620
        %644 = vmatprep.subr.bf16.mxu0 0
        %645 = vmatpush1.bf16.msra.mxu0 %v621
        %646 = vmatprep.subr.bf16.mxu0 0
        %647 = vmatpush1.bf16.msra.mxu0 0
        %648 = vmatprep.subr.bf16.mxu0 0
        %649 = vmatpush1.bf16.msra.mxu0 0
        %650 = vmatprep.subr.bf16.mxu0 0
        %651 = vmatpush1.bf16.msra.mxu0 0
        %652 = vmatprep.subr.bf16.mxu0 0
        %653 = vmatpush1.bf16.msra.mxu0 0
        %654 = vmatprep.subr.bf16.mxu0 0
        %655 = vmatpush1.bf16.msra.mxu0 0
        %656 = vmatprep.subr.bf16.mxu0 0
        %657 = vmatpush1.bf16.msra.mxu0 0
        %658 = vmatprep.subr.bf16.mxu0 0
        %659 = vmatpush1.bf16.msra.mxu0 0
        %660 = vmatprep.subr.bf16.mxu0 0
        %661 = vmatpush1.bf16.msra.mxu0 0
        %662 = vmatprep.mubr.bf16.mxu0 0
        %663 = vmatmul.mubr.bf16.gmra.mrb[0].mxu0 %v565
        %v664 = vpop.f32.mrb[0].mxu0
        %v665 = vadd.f32 0.0, %v664
        %v666 = vpop.f32.mrb[0].mxu0
        %v667 = vpop.f32.mrb[0].mxu0
        %v668 = vpop.f32.mrb[0].mxu0
        %669 = vdwg.mxu0
        %670 = vst [vmem:[#allocation2 + $0x1] sm:$0xff] %v665
        %v671 = vld [vmem:[#allocation10] sm:$0xf]
        %v672 = vld [vmem:[#allocation10 + $0x4] sm:$0xf]
        %v673 = vld [vmem:[#allocation10 + $0x8] sm:$0xf]
        %v674 = vld [vmem:[#allocation10 + $0xc] sm:$0xf]
        %v675 = vld [vmem:[#allocation10 + $0x10] sm:$0xf]
        %v676 = vld [vmem:[#allocation10 + $0x14] sm:$0xf]
        %v677 = vld [vmem:[#allocation10 + $0x18] sm:$0xf]
        %v678 = vld [vmem:[#allocation10 + $0x1c] sm:$0xf]
        %v679 = vld [vmem:[#allocation10 + $0x20] sm:$0xf]
        %v680 = vld [vmem:[#allocation10 + $0x24] sm:$0xf]
        %v681 = vld [vmem:[#allocation10 + $0x28] sm:$0xf]
        %v682 = vld [vmem:[#allocation10 + $0x2c] sm:$0xf]
        %v683 = vld [vmem:[#allocation10 + $0x30] sm:$0xf]
        %v684 = vld [vmem:[#allocation10 + $0x34] sm:$0xf]
        %v685 = vld [vmem:[#allocation10 + $0x38] sm:$0xf]
        %v686 = vld [vmem:[#allocation10 + $0x3c] sm:$0xf]
        %v687 = vld [vmem:[#allocation10 + $0x40] sm:$0xf]
        %v688 = vld [vmem:[#allocation10 + $0x44] sm:$0xf]
        %v689 = vld [vmem:[#allocation10 + $0x48] sm:$0xf]
        %v690 = vld [vmem:[#allocation10 + $0x4c] sm:$0xf]
        %v691 = vld [vmem:[#allocation10 + $0x50] sm:$0xf]
        %v692 = vld [vmem:[#allocation10 + $0x54] sm:$0xf]
        %v693 = vld [vmem:[#allocation10 + $0x58] sm:$0xf]
        %v694 = vld [vmem:[#allocation10 + $0x5c] sm:$0xf]
        %v695 = vld [vmem:[#allocation10 + $0x60] sm:$0xf]
        %v696 = vld [vmem:[#allocation10 + $0x64] sm:$0xf]
        %v697 = vld [vmem:[#allocation10 + $0x68] sm:$0xf]
        %v698 = vld [vmem:[#allocation10 + $0x6c] sm:$0xf]
        %v699 = vld [vmem:[#allocation10 + $0x70] sm:$0xf]
        %v700 = vld [vmem:[#allocation10 + $0x74] sm:$0xf]
        %v701 = vld [vmem:[#allocation10 + $0x78] sm:$0xf]
        %v702 = vld [vmem:[#allocation10 + $0x7c] sm:$0xf]
        %v703 = vld [vmem:[#allocation10 + $0x80] sm:$0xf]
        %v704 = vld [vmem:[#allocation10 + $0x84] sm:$0xf]
        %v705 = vld [vmem:[#allocation10 + $0x88] sm:$0xf]
        %v706 = vld [vmem:[#allocation10 + $0x8c] sm:$0xf]
        %v707 = vld [vmem:[#allocation10 + $0x90] sm:$0xf]
        %v708 = vld [vmem:[#allocation10 + $0x94] sm:$0xf]
        %v709 = vld [vmem:[#allocation10 + $0x98] sm:$0xf]
        %v710 = vld [vmem:[#allocation10 + $0x9c] sm:$0xf]
        %v711 = vld [vmem:[#allocation10 + $0xa0] sm:$0xf]
        %v712 = vld [vmem:[#allocation10 + $0xa4] sm:$0xf]
        %v713 = vld [vmem:[#allocation10 + $0xa8] sm:$0xf]
        %v714 = vld [vmem:[#allocation10 + $0xac] sm:$0xf]
        %v715 = vld [vmem:[#allocation10 + $0xb0] sm:$0xf]
        %v716 = vld [vmem:[#allocation10 + $0xb4] sm:$0xf]
        %v717 = vld [vmem:[#allocation10 + $0xb8] sm:$0xf]
        %v718 = vld [vmem:[#allocation10 + $0xbc] sm:$0xf]
        %v719 = vld [vmem:[#allocation2] sm:$0xff]
        %v720 = vld [vmem:[#allocation2 + $0x1] sm:$0xff]
        %v721 = vld [vmem:[#allocation2 + $0x2] sm:$0xff]
        %v722 = vpack.c.bf16 %v719, %v719
        %v723 = vpack.c.bf16 %v720, %v720
        %v724 = vpack.c.bf16 %v721, %v721
        %v773 = vunpack.c.l.b16 %v671
        %v774 = vunpack.c.l.b16 %v672
        %v775 = vunpack.c.l.b16 %v673
        %v776 = vunpack.c.l.b16 %v674
        %v777 = vunpack.c.l.b16 %v675
        %v778 = vunpack.c.l.b16 %v676
        %v779 = vunpack.c.l.b16 %v677
        %v780 = vunpack.c.l.b16 %v678
        %v781 = vunpack.c.l.b16 %v679
        %v782 = vunpack.c.l.b16 %v680
        %v783 = vunpack.c.l.b16 %v681
        %v784 = vunpack.c.l.b16 %v682
        %v785 = vunpack.c.l.b16 %v683
        %v786 = vunpack.c.l.b16 %v684
        %v787 = vunpack.c.l.b16 %v685
        %v788 = vunpack.c.l.b16 %v686
        %v789 = vunpack.c.l.b16 %v687
        %v790 = vunpack.c.l.b16 %v688
        %v791 = vunpack.c.l.b16 %v689
        %v792 = vunpack.c.l.b16 %v690
        %v793 = vunpack.c.l.b16 %v691
        %v794 = vunpack.c.l.b16 %v692
        %v795 = vunpack.c.l.b16 %v693
        %v796 = vunpack.c.l.b16 %v694
        %v797 = vunpack.c.l.b16 %v695
        %v798 = vunpack.c.l.b16 %v696
        %v799 = vunpack.c.l.b16 %v697
        %v800 = vunpack.c.l.b16 %v698
        %v801 = vunpack.c.l.b16 %v699
        %v802 = vunpack.c.l.b16 %v700
        %v803 = vunpack.c.l.b16 %v701
        %v804 = vunpack.c.l.b16 %v702
        %v805 = vunpack.c.l.b16 %v703
        %v806 = vunpack.c.l.b16 %v704
        %v807 = vunpack.c.l.b16 %v705
        %v808 = vunpack.c.l.b16 %v706
        %v809 = vunpack.c.l.b16 %v707
        %v810 = vunpack.c.l.b16 %v708
        %v811 = vunpack.c.l.b16 %v709
        %v812 = vunpack.c.l.b16 %v710
        %v813 = vunpack.c.l.b16 %v711
        %v814 = vunpack.c.l.b16 %v712
        %v815 = vunpack.c.l.b16 %v713
        %v816 = vunpack.c.l.b16 %v714
        %v817 = vunpack.c.l.b16 %v715
        %v818 = vunpack.c.l.b16 %v716
        %v819 = vunpack.c.l.b16 %v717
        %v820 = vunpack.c.l.b16 %v718
        %v821 = vpack.c.b16 %v774, %v773
        %v822 = vpack.c.b16 %v776, %v775
        %v823 = vpack.c.b16 %v778, %v777
        %v824 = vpack.c.b16 %v780, %v779
        %v825 = vpack.c.b16 %v782, %v781
        %v826 = vpack.c.b16 %v784, %v783
        %v827 = vpack.c.b16 %v786, %v785
        %v828 = vpack.c.b16 %v788, %v787
        %v829 = vpack.c.b16 %v790, %v789
        %v830 = vpack.c.b16 %v792, %v791
        %v831 = vpack.c.b16 %v794, %v793
        %v832 = vpack.c.b16 %v796, %v795
        %v833 = vpack.c.b16 %v798, %v797
        %v834 = vpack.c.b16 %v800, %v799
        %v835 = vpack.c.b16 %v802, %v801
        %v836 = vpack.c.b16 %v804, %v803
        %v837 = vpack.c.b16 %v806, %v805
        %v838 = vpack.c.b16 %v808, %v807
        %v839 = vpack.c.b16 %v810, %v809
        %v840 = vpack.c.b16 %v812, %v811
        %v841 = vpack.c.b16 %v814, %v813
        %v842 = vpack.c.b16 %v816, %v815
        %v843 = vpack.c.b16 %v818, %v817
        %v844 = vpack.c.b16 %v820, %v819
        %869 = vmatprep.subr.bf16.mxu0 0
        %870 = vmatpush1.bf16.msra.mxu0 %v821
        %871 = vmatprep.subr.bf16.mxu0 0
        %872 = vmatpush1.bf16.msra.mxu0 %v822
        %873 = vmatprep.subr.bf16.mxu0 0
        %874 = vmatpush1.bf16.msra.mxu0 %v823
        %875 = vmatprep.subr.bf16.mxu0 0
        %876 = vmatpush1.bf16.msra.mxu0 %v824
        %877 = vmatprep.subr.bf16.mxu0 0
        %878 = vmatpush1.bf16.msra.mxu0 %v825
        %879 = vmatprep.subr.bf16.mxu0 0
        %880 = vmatpush1.bf16.msra.mxu0 %v826
        %881 = vmatprep.subr.bf16.mxu0 0
        %882 = vmatpush1.bf16.msra.mxu0 %v827
        %883 = vmatprep.subr.bf16.mxu0 0
        %884 = vmatpush1.bf16.msra.mxu0 %v828
        %885 = vmatprep.subr.bf16.mxu0 0
        %886 = vmatpush1.bf16.msra.mxu0 %v829
        %887 = vmatprep.subr.bf16.mxu0 0
        %888 = vmatpush1.bf16.msra.mxu0 %v830
        %889 = vmatprep.subr.bf16.mxu0 0
        %890 = vmatpush1.bf16.msra.mxu0 %v831
        %891 = vmatprep.subr.bf16.mxu0 0
        %892 = vmatpush1.bf16.msra.mxu0 %v832
        %893 = vmatprep.subr.bf16.mxu0 0
        %894 = vmatpush1.bf16.msra.mxu0 %v833
        %895 = vmatprep.subr.bf16.mxu0 0
        %896 = vmatpush1.bf16.msra.mxu0 %v834
        %897 = vmatprep.subr.bf16.mxu0 0
        %898 = vmatpush1.bf16.msra.mxu0 %v835
        %899 = vmatprep.subr.bf16.mxu0 0
        %900 = vmatpush1.bf16.msra.mxu0 %v836
        %901 = vmatprep.mubr.bf16.mxu0 %v723
        %902 = vmatmul.mubr.bf16.gmra.mrb[0].mxu0 %v722
        %v903 = vpop.f32.mrb[0].mxu0
        %v904 = vadd.f32 0.0, %v903
        %v905 = vpop.f32.mrb[0].mxu0
        %v906 = vpop.f32.mrb[0].mxu0
        %v907 = vpop.f32.mrb[0].mxu0
        %908 = vdwg.mxu0
        %909 = vmatprep.subr.bf16.mxu0 0
        %910 = vmatpush1.bf16.msra.mxu0 %v837
        %911 = vmatprep.subr.bf16.mxu0 0
        %912 = vmatpush1.bf16.msra.mxu0 %v838
        %913 = vmatprep.subr.bf16.mxu0 0
        %914 = vmatpush1.bf16.msra.mxu0 %v839
        %915 = vmatprep.subr.bf16.mxu0 0
        %916 = vmatpush1.bf16.msra.mxu0 %v840
        %917 = vmatprep.subr.bf16.mxu0 0
        %918 = vmatpush1.bf16.msra.mxu0 %v841
        %919 = vmatprep.subr.bf16.mxu0 0
        %920 = vmatpush1.bf16.msra.mxu0 %v842
        %921 = vmatprep.subr.bf16.mxu0 0
        %922 = vmatpush1.bf16.msra.mxu0 %v843
        %923 = vmatprep.subr.bf16.mxu0 0
        %924 = vmatpush1.bf16.msra.mxu0 %v844
        %925 = vmatprep.subr.bf16.mxu0 0
        %926 = vmatpush1.bf16.msra.mxu0 0
        %927 = vmatprep.subr.bf16.mxu0 0
        %928 = vmatpush1.bf16.msra.mxu0 0
        %929 = vmatprep.subr.bf16.mxu0 0
        %930 = vmatpush1.bf16.msra.mxu0 0
        %931 = vmatprep.subr.bf16.mxu0 0
        %932 = vmatpush1.bf16.msra.mxu0 0
        %933 = vmatprep.subr.bf16.mxu0 0
        %934 = vmatpush1.bf16.msra.mxu0 0
        %935 = vmatprep.subr.bf16.mxu0 0
        %936 = vmatpush1.bf16.msra.mxu0 0
        %937 = vmatprep.subr.bf16.mxu0 0
        %938 = vmatpush1.bf16.msra.mxu0 0
        %939 = vmatprep.subr.bf16.mxu0 0
        %940 = vmatpush1.bf16.msra.mxu0 0
        %941 = vmatprep.mubr.bf16.mxu0 0
        %942 = vmatmul.mubr.bf16.gmra.mrb[0].mxu0 %v724
        %v943 = vpop.f32.mrb[0].mxu0
        %v944 = vadd.f32 %v904, %v943
        %v945 = vpop.f32.mrb[0].mxu0
        %v946 = vpop.f32.mrb[0].mxu0
        %v947 = vpop.f32.mrb[0].mxu0
        %948 = vdwg.mxu0
        %v949 = vld [vmem:[#allocation12] sm:$0x1]
        %v950 = vlaneseq
        %v951 = vshrl.u32 %v950, 7
        %v952 = vsub.s32 0, %v951
        %v953 = vrot.slane %v949, %v952
        %v954 = vmul.f32 %v944, %v953
        %v955 = vld [vmem:[#allocation13] sm:$0x1]
        %v956 = vlaneseq
        %v957 = vshrl.u32 %v956, 7
        %v958 = vsub.s32 0, %v957
        %v959 = vrot.slane %v955, %v958
        %v960 = vadd.f32 %v954, %v959
        %v961 = vmax.f32 %v960, 0.0
        %962 = vst [vmem:[#allocation2 + $0x1] sm:$0xff] %v961
        %s963 = scalar_lea.vmem [#allocation10], 192
        %v964 = vld [vmem:[%s963] sm:$0xf]
        %v965 = vld [vmem:[%s963 + $0x4] sm:$0xf]
        %v966 = vld [vmem:[%s963 + $0x8] sm:$0xf]
        %v967 = vld [vmem:[%s963 + $0xc] sm:$0xf]
        %v968 = vld [vmem:[%s963 + $0x10] sm:$0xf]
        %v969 = vld [vmem:[%s963 + $0x14] sm:$0xf]
        %v970 = vld [vmem:[%s963 + $0x18] sm:$0xf]
        %v971 = vld [vmem:[%s963 + $0x1c] sm:$0xf]
        %v972 = vld [vmem:[%s963 + $0x20] sm:$0xf]
        %v973 = vld [vmem:[%s963 + $0x24] sm:$0xf]
        %v974 = vld [vmem:[%s963 + $0x28] sm:$0xf]
        %v975 = vld [vmem:[%s963 + $0x2c] sm:$0xf]
        %v976 = vld [vmem:[%s963 + $0x30] sm:$0xf]
        %v977 = vld [vmem:[%s963 + $0x34] sm:$0xf]
        %v978 = vld [vmem:[%s963 + $0x38] sm:$0xf]
        %v979 = vld [vmem:[%s963 + $0x3c] sm:$0xf]
        %v980 = vld [vmem:[%s963 + $0x40] sm:$0xf]
        %v981 = vld [vmem:[%s963 + $0x44] sm:$0xf]
        %v982 = vld [vmem:[%s963 + $0x48] sm:$0xf]
        %v983 = vld [vmem:[%s963 + $0x4c] sm:$0xf]
        %v984 = vld [vmem:[%s963 + $0x50] sm:$0xf]
        %v985 = vld [vmem:[%s963 + $0x54] sm:$0xf]
        %v986 = vld [vmem:[%s963 + $0x58] sm:$0xf]
        %v987 = vld [vmem:[%s963 + $0x5c] sm:$0xf]
        %v988 = vld [vmem:[%s963 + $0x60] sm:$0xf]
        %v989 = vld [vmem:[%s963 + $0x64] sm:$0xf]
        %v990 = vld [vmem:[%s963 + $0x68] sm:$0xf]
        %v991 = vld [vmem:[%s963 + $0x6c] sm:$0xf]
        %v992 = vld [vmem:[%s963 + $0x70] sm:$0xf]
        %v993 = vld [vmem:[%s963 + $0x74] sm:$0xf]
        %v994 = vld [vmem:[%s963 + $0x78] sm:$0xf]
        %v995 = vld [vmem:[%s963 + $0x7c] sm:$0xf]
        %v996 = vld [vmem:[%s963 + $0x80] sm:$0xf]
        %v997 = vld [vmem:[%s963 + $0x84] sm:$0xf]
        %v998 = vld [vmem:[%s963 + $0x88] sm:$0xf]
        %v999 = vld [vmem:[%s963 + $0x8c] sm:$0xf]
        %v1000 = vld [vmem:[%s963 + $0x90] sm:$0xf]
        %v1001 = vld [vmem:[%s963 + $0x94] sm:$0xf]
        %v1002 = vld [vmem:[%s963 + $0x98] sm:$0xf]
        %v1003 = vld [vmem:[%s963 + $0x9c] sm:$0xf]
        %v1004 = vld [vmem:[%s963 + $0xa0] sm:$0xf]
        %v1005 = vld [vmem:[%s963 + $0xa4] sm:$0xf]
        %v1006 = vld [vmem:[%s963 + $0xa8] sm:$0xf]
        %v1007 = vld [vmem:[%s963 + $0xac] sm:$0xf]
        %v1008 = vld [vmem:[%s963 + $0xb0] sm:$0xf]
        %v1009 = vld [vmem:[%s963 + $0xb4] sm:$0xf]
        %v1010 = vld [vmem:[%s963 + $0xb8] sm:$0xf]
        %v1011 = vld [vmem:[%s963 + $0xbc] sm:$0xf]
        %v1012 = vld [vmem:[#allocation2] sm:$0xff]
        %v1013 = vld [vmem:[#allocation2 + $0x1] sm:$0xff]
        %v1014 = vld [vmem:[#allocation2 + $0x2] sm:$0xff]
        %v1015 = vpack.c.bf16 %v1012, %v1012
        %v1016 = vpack.c.bf16 %v1013, %v1013
        %v1017 = vpack.c.bf16 %v1014, %v1014
        %v1066 = vunpack.c.l.b16 %v964
        %v1067 = vunpack.c.l.b16 %v965
        %v1068 = vunpack.c.l.b16 %v966
        %v1069 = vunpack.c.l.b16 %v967
        %v1070 = vunpack.c.l.b16 %v968
        %v1071 = vunpack.c.l.b16 %v969
        %v1072 = vunpack.c.l.b16 %v970
        %v1073 = vunpack.c.l.b16 %v971
        %v1074 = vunpack.c.l.b16 %v972
        %v1075 = vunpack.c.l.b16 %v973
        %v1076 = vunpack.c.l.b16 %v974
        %v1077 = vunpack.c.l.b16 %v975
        %v1078 = vunpack.c.l.b16 %v976
        %v1079 = vunpack.c.l.b16 %v977
        %v1080 = vunpack.c.l.b16 %v978
        %v1081 = vunpack.c.l.b16 %v979
        %v1082 = vunpack.c.l.b16 %v980
        %v1083 = vunpack.c.l.b16 %v981
        %v1084 = vunpack.c.l.b16 %v982
        %v1085 = vunpack.c.l.b16 %v983
        %v1086 = vunpack.c.l.b16 %v984
        %v1087 = vunpack.c.l.b16 %v985
        %v1088 = vunpack.c.l.b16 %v986
        %v1089 = vunpack.c.l.b16 %v987
        %v1090 = vunpack.c.l.b16 %v988
        %v1091 = vunpack.c.l.b16 %v989
        %v1092 = vunpack.c.l.b16 %v990
        %v1093 = vunpack.c.l.b16 %v991
        %v1094 = vunpack.c.l.b16 %v992
        %v1095 = vunpack.c.l.b16 %v993
        %v1096 = vunpack.c.l.b16 %v994
        %v1097 = vunpack.c.l.b16 %v995
        %v1098 = vunpack.c.l.b16 %v996
        %v1099 = vunpack.c.l.b16 %v997
        %v1100 = vunpack.c.l.b16 %v998
        %v1101 = vunpack.c.l.b16 %v999
        %v1102 = vunpack.c.l.b16 %v1000
        %v1103 = vunpack.c.l.b16 %v1001
        %v1104 = vunpack.c.l.b16 %v1002
        %v1105 = vunpack.c.l.b16 %v1003
        %v1106 = vunpack.c.l.b16 %v1004
        %v1107 = vunpack.c.l.b16 %v1005
        %v1108 = vunpack.c.l.b16 %v1006
        %v1109 = vunpack.c.l.b16 %v1007
        %v1110 = vunpack.c.l.b16 %v1008
        %v1111 = vunpack.c.l.b16 %v1009
        %v1112 = vunpack.c.l.b16 %v1010
        %v1113 = vunpack.c.l.b16 %v1011
        %v1114 = vpack.c.b16 %v1067, %v1066
        %v1115 = vpack.c.b16 %v1069, %v1068
        %v1116 = vpack.c.b16 %v1071, %v1070
        %v1117 = vpack.c.b16 %v1073, %v1072
        %v1118 = vpack.c.b16 %v1075, %v1074
        %v1119 = vpack.c.b16 %v1077, %v1076
        %v1120 = vpack.c.b16 %v1079, %v1078
        %v1121 = vpack.c.b16 %v1081, %v1080
        %v1122 = vpack.c.b16 %v1083, %v1082
        %v1123 = vpack.c.b16 %v1085, %v1084
        %v1124 = vpack.c.b16 %v1087, %v1086
        %v1125 = vpack.c.b16 %v1089, %v1088
        %v1126 = vpack.c.b16 %v1091, %v1090
        %v1127 = vpack.c.b16 %v1093, %v1092
        %v1128 = vpack.c.b16 %v1095, %v1094
        %v1129 = vpack.c.b16 %v1097, %v1096
        %v1130 = vpack.c.b16 %v1099, %v1098
        %v1131 = vpack.c.b16 %v1101, %v1100
        %v1132 = vpack.c.b16 %v1103, %v1102
        %v1133 = vpack.c.b16 %v1105, %v1104
        %v1134 = vpack.c.b16 %v1107, %v1106
        %v1135 = vpack.c.b16 %v1109, %v1108
        %v1136 = vpack.c.b16 %v1111, %v1110
        %v1137 = vpack.c.b16 %v1113, %v1112
        %1162 = vmatprep.subr.bf16.mxu0 0
        %1163 = vmatpush1.bf16.msra.mxu0 %v1114
        %1164 = vmatprep.subr.bf16.mxu0 0
        %1165 = vmatpush1.bf16.msra.mxu0 %v1115
        %1166 = vmatprep.subr.bf16.mxu0 0
        %1167 = vmatpush1.bf16.msra.mxu0 %v1116
        %1168 = vmatprep.subr.bf16.mxu0 0
        %1169 = vmatpush1.bf16.msra.mxu0 %v1117
        %1170 = vmatprep.subr.bf16.mxu0 0
        %1171 = vmatpush1.bf16.msra.mxu0 %v1118
        %1172 = vmatprep.subr.bf16.mxu0 0
        %1173 = vmatpush1.bf16.msra.mxu0 %v1119
        %1174 = vmatprep.subr.bf16.mxu0 0
        %1175 = vmatpush1.bf16.msra.mxu0 %v1120
        %1176 = vmatprep.subr.bf16.mxu0 0
        %1177 = vmatpush1.bf16.msra.mxu0 %v1121
        %1178 = vmatprep.subr.bf16.mxu0 0
        %1179 = vmatpush1.bf16.msra.mxu0 %v1122
        %1180 = vmatprep.subr.bf16.mxu0 0
        %1181 = vmatpush1.bf16.msra.mxu0 %v1123
        %1182 = vmatprep.subr.bf16.mxu0 0
        %1183 = vmatpush1.bf16.msra.mxu0 %v1124
        %1184 = vmatprep.subr.bf16.mxu0 0
        %1185 = vmatpush1.bf16.msra.mxu0 %v1125
        %1186 = vmatprep.subr.bf16.mxu0 0
        %1187 = vmatpush1.bf16.msra.mxu0 %v1126
        %1188 = vmatprep.subr.bf16.mxu0 0
        %1189 = vmatpush1.bf16.msra.mxu0 %v1127
        %1190 = vmatprep.subr.bf16.mxu0 0
        %1191 = vmatpush1.bf16.msra.mxu0 %v1128
        %1192 = vmatprep.subr.bf16.mxu0 0
        %1193 = vmatpush1.bf16.msra.mxu0 %v1129
        %1194 = vmatprep.mubr.bf16.mxu0 %v1016
        %1195 = vmatmul.mubr.bf16.gmra.mrb[0].mxu0 %v1015
        %v1196 = vpop.f32.mrb[0].mxu0
        %v1197 = vadd.f32 0.0, %v1196
        %v1198 = vpop.f32.mrb[0].mxu0
        %v1199 = vpop.f32.mrb[0].mxu0
        %v1200 = vpop.f32.mrb[0].mxu0
        %1201 = vdwg.mxu0
        %1202 = vmatprep.subr.bf16.mxu0 0
        %1203 = vmatpush1.bf16.msra.mxu0 %v1130
        %1204 = vmatprep.subr.bf16.mxu0 0
        %1205 = vmatpush1.bf16.msra.mxu0 %v1131
        %1206 = vmatprep.subr.bf16.mxu0 0
        %1207 = vmatpush1.bf16.msra.mxu0 %v1132
        %1208 = vmatprep.subr.bf16.mxu0 0
        %1209 = vmatpush1.bf16.msra.mxu0 %v1133
        %1210 = vmatprep.subr.bf16.mxu0 0
        %1211 = vmatpush1.bf16.msra.mxu0 %v1134
        %1212 = vmatprep.subr.bf16.mxu0 0
        %1213 = vmatpush1.bf16.msra.mxu0 %v1135
        %1214 = vmatprep.subr.bf16.mxu0 0
        %1215 = vmatpush1.bf16.msra.mxu0 %v1136
        %1216 = vmatprep.subr.bf16.mxu0 0
        %1217 = vmatpush1.bf16.msra.mxu0 %v1137
        %1218 = vmatprep.subr.bf16.mxu0 0
        %1219 = vmatpush1.bf16.msra.mxu0 0
        %1220 = vmatprep.subr.bf16.mxu0 0
        %1221 = vmatpush1.bf16.msra.mxu0 0
        %1222 = vmatprep.subr.bf16.mxu0 0
        %1223 = vmatpush1.bf16.msra.mxu0 0
        %1224 = vmatprep.subr.bf16.mxu0 0
        %1225 = vmatpush1.bf16.msra.mxu0 0
        %1226 = vmatprep.subr.bf16.mxu0 0
        %1227 = vmatpush1.bf16.msra.mxu0 0
        %1228 = vmatprep.subr.bf16.mxu0 0
        %1229 = vmatpush1.bf16.msra.mxu0 0
        %1230 = vmatprep.subr.bf16.mxu0 0
        %1231 = vmatpush1.bf16.msra.mxu0 0
        %1232 = vmatprep.subr.bf16.mxu0 0
        %1233 = vmatpush1.bf16.msra.mxu0 0
        %1234 = vmatprep.mubr.bf16.mxu0 0
        %1235 = vmatmul.mubr.bf16.gmra.mrb[0].mxu0 %v1017
        %v1236 = vpop.f32.mrb[0].mxu0
        %v1237 = vadd.f32 %v1197, %v1236
        %v1238 = vpop.f32.mrb[0].mxu0
        %v1239 = vpop.f32.mrb[0].mxu0
        %v1240 = vpop.f32.mrb[0].mxu0
        %1241 = vdwg.mxu0
        %v1242 = vld [vmem:[#allocation12 + $0x1] sm:$0x1]
        %v1243 = vlaneseq
        %v1244 = vshrl.u32 %v1243, 7
        %v1245 = vsub.s32 0, %v1244
        %v1246 = vrot.slane %v1242, %v1245
        %v1247 = vmul.f32 %v1237, %v1246
        %v1248 = vld [vmem:[#allocation13 + $0x1] sm:$0x1]
        %v1249 = vlaneseq
        %v1250 = vshrl.u32 %v1249, 7
        %v1251 = vsub.s32 0, %v1250
        %v1252 = vrot.slane %v1248, %v1251
        %v1253 = vadd.f32 %v1247, %v1252
        %v1254 = vadd.f32 %v1253, %v665
        %v1255 = vmax.f32 %v1254, 0.0
        %1256 = vst [vmem:[#allocation2 + $0x1] sm:$0xff] %v1255
        %s1257 = scalar_lea.vmem [#allocation10], 384
        %v1258 = vld [vmem:[%s1257] sm:$0xf]
        %v1259 = vld [vmem:[%s1257 + $0x4] sm:$0xf]
        %v1260 = vld [vmem:[%s1257 + $0x8] sm:$0xf]
        %v1261 = vld [vmem:[%s1257 + $0xc] sm:$0xf]
        %v1262 = vld [vmem:[%s1257 + $0x10] sm:$0xf]
        %v1263 = vld [vmem:[%s1257 + $0x14] sm:$0xf]
        %v1264 = vld [vmem:[%s1257 + $0x18] sm:$0xf]
        %v1265 = vld [vmem:[%s1257 + $0x1c] sm:$0xf]
        %v1266 = vld [vmem:[%s1257 + $0x20] sm:$0xf]
        %v1267 = vld [vmem:[%s1257 + $0x24] sm:$0xf]
        %v1268 = vld [vmem:[%s1257 + $0x28] sm:$0xf]
        %v1269 = vld [vmem:[%s1257 + $0x2c] sm:$0xf]
        %v1270 = vld [vmem:[%s1257 + $0x30] sm:$0xf]
        %v1271 = vld [vmem:[%s1257 + $0x34] sm:$0xf]
        %v1272 = vld [vmem:[%s1257 + $0x38] sm:$0xf]
        %v1273 = vld [vmem:[%s1257 + $0x3c] sm:$0xf]
        %v1274 = vld [vmem:[%s1257 + $0x40] sm:$0xf]
        %v1275 = vld [vmem:[%s1257 + $0x44] sm:$0xf]
        %v1276 = vld [vmem:[%s1257 + $0x48] sm:$0xf]
        %v1277 = vld [vmem:[%s1257 + $0x4c] sm:$0xf]
        %v1278 = vld [vmem:[%s1257 + $0x50] sm:$0xf]
        %v1279 = vld [vmem:[%s1257 + $0x54] sm:$0xf]
        %v1280 = vld [vmem:[%s1257 + $0x58] sm:$0xf]
        %v1281 = vld [vmem:[%s1257 + $0x5c] sm:$0xf]
        %v1282 = vld [vmem:[%s1257 + $0x60] sm:$0xf]
        %v1283 = vld [vmem:[%s1257 + $0x64] sm:$0xf]
        %v1284 = vld [vmem:[%s1257 + $0x68] sm:$0xf]
        %v1285 = vld [vmem:[%s1257 + $0x6c] sm:$0xf]
        %v1286 = vld [vmem:[%s1257 + $0x70] sm:$0xf]
        %v1287 = vld [vmem:[%s1257 + $0x74] sm:$0xf]
        %v1288 = vld [vmem:[%s1257 + $0x78] sm:$0xf]
        %v1289 = vld [vmem:[%s1257 + $0x7c] sm:$0xf]
        %v1290 = vld [vmem:[%s1257 + $0x80] sm:$0xf]
        %v1291 = vld [vmem:[%s1257 + $0x84] sm:$0xf]
        %v1292 = vld [vmem:[%s1257 + $0x88] sm:$0xf]
        %v1293 = vld [vmem:[%s1257 + $0x8c] sm:$0xf]
        %v1294 = vld [vmem:[%s1257 + $0x90] sm:$0xf]
        %v1295 = vld [vmem:[%s1257 + $0x94] sm:$0xf]
        %v1296 = vld [vmem:[%s1257 + $0x98] sm:$0xf]
        %v1297 = vld [vmem:[%s1257 + $0x9c] sm:$0xf]
        %v1298 = vld [vmem:[%s1257 + $0xa0] sm:$0xf]
        %v1299 = vld [vmem:[%s1257 + $0xa4] sm:$0xf]
        %v1300 = vld [vmem:[%s1257 + $0xa8] sm:$0xf]
        %v1301 = vld [vmem:[%s1257 + $0xac] sm:$0xf]
        %v1302 = vld [vmem:[%s1257 + $0xb0] sm:$0xf]
        %v1303 = vld [vmem:[%s1257 + $0xb4] sm:$0xf]
        %v1304 = vld [vmem:[%s1257 + $0xb8] sm:$0xf]
        %v1305 = vld [vmem:[%s1257 + $0xbc] sm:$0xf]
        %v1306 = vld [vmem:[#allocation2] sm:$0xff]
        %v1307 = vld [vmem:[#allocation2 + $0x1] sm:$0xff]
        %v1308 = vld [vmem:[#allocation2 + $0x2] sm:$0xff]
        %v1309 = vpack.c.bf16 %v1306, %v1306
        %v1310 = vpack.c.bf16 %v1307, %v1307
        %v1311 = vpack.c.bf16 %v1308, %v1308
        %v1360 = vunpack.c.l.b16 %v1258
        %v1361 = vunpack.c.l.b16 %v1259
        %v1362 = vunpack.c.l.b16 %v1260
        %v1363 = vunpack.c.l.b16 %v1261
        %v1364 = vunpack.c.l.b16 %v1262
        %v1365 = vunpack.c.l.b16 %v1263
        %v1366 = vunpack.c.l.b16 %v1264
        %v1367 = vunpack.c.l.b16 %v1265
        %v1368 = vunpack.c.l.b16 %v1266
        %v1369 = vunpack.c.l.b16 %v1267
        %v1370 = vunpack.c.l.b16 %v1268
        %v1371 = vunpack.c.l.b16 %v1269
        %v1372 = vunpack.c.l.b16 %v1270
        %v1373 = vunpack.c.l.b16 %v1271
        %v1374 = vunpack.c.l.b16 %v1272
        %v1375 = vunpack.c.l.b16 %v1273
        %v1376 = vunpack.c.l.b16 %v1274
        %v1377 = vunpack.c.l.b16 %v1275
        %v1378 = vunpack.c.l.b16 %v1276
        %v1379 = vunpack.c.l.b16 %v1277
        %v1380 = vunpack.c.l.b16 %v1278
        %v1381 = vunpack.c.l.b16 %v1279
        %v1382 = vunpack.c.l.b16 %v1280
        %v1383 = vunpack.c.l.b16 %v1281
        %v1384 = vunpack.c.l.b16 %v1282
        %v1385 = vunpack.c.l.b16 %v1283
        %v1386 = vunpack.c.l.b16 %v1284
        %v1387 = vunpack.c.l.b16 %v1285
        %v1388 = vunpack.c.l.b16 %v1286
        %v1389 = vunpack.c.l.b16 %v1287
        %v1390 = vunpack.c.l.b16 %v1288
        %v1391 = vunpack.c.l.b16 %v1289
        %v1392 = vunpack.c.l.b16 %v1290
        %v1393 = vunpack.c.l.b16 %v1291
        %v1394 = vunpack.c.l.b16 %v1292
        %v1395 = vunpack.c.l.b16 %v1293
        %v1396 = vunpack.c.l.b16 %v1294
        %v1397 = vunpack.c.l.b16 %v1295
        %v1398 = vunpack.c.l.b16 %v1296
        %v1399 = vunpack.c.l.b16 %v1297
        %v1400 = vunpack.c.l.b16 %v1298
        %v1401 = vunpack.c.l.b16 %v1299
        %v1402 = vunpack.c.l.b16 %v1300
        %v1403 = vunpack.c.l.b16 %v1301
        %v1404 = vunpack.c.l.b16 %v1302
        %v1405 = vunpack.c.l.b16 %v1303
        %v1406 = vunpack.c.l.b16 %v1304
        %v1407 = vunpack.c.l.b16 %v1305
        %v1408 = vpack.c.b16 %v1361, %v1360
        %v1409 = vpack.c.b16 %v1363, %v1362
        %v1410 = vpack.c.b16 %v1365, %v1364
        %v1411 = vpack.c.b16 %v1367, %v1366
        %v1412 = vpack.c.b16 %v1369, %v1368
        %v1413 = vpack.c.b16 %v1371, %v1370
        %v1414 = vpack.c.b16 %v1373, %v1372
        %v1415 = vpack.c.b16 %v1375, %v1374
        %v1416 = vpack.c.b16 %v1377, %v1376
        %v1417 = vpack.c.b16 %v1379, %v1378
        %v1418 = vpack.c.b16 %v1381, %v1380
        %v1419 = vpack.c.b16 %v1383, %v1382
        %v1420 = vpack.c.b16 %v1385, %v1384
        %v1421 = vpack.c.b16 %v1387, %v1386
        %v1422 = vpack.c.b16 %v1389, %v1388
        %v1423 = vpack.c.b16 %v1391, %v1390
        %v1424 = vpack.c.b16 %v1393, %v1392
        %v1425 = vpack.c.b16 %v1395, %v1394
        %v1426 = vpack.c.b16 %v1397, %v1396
        %v1427 = vpack.c.b16 %v1399, %v1398
        %v1428 = vpack.c.b16 %v1401, %v1400
        %v1429 = vpack.c.b16 %v1403, %v1402
        %v1430 = vpack.c.b16 %v1405, %v1404
        %v1431 = vpack.c.b16 %v1407, %v1406
        %1456 = vmatprep.subr.bf16.mxu0 0
        %1457 = vmatpush1.bf16.msra.mxu0 %v1408
        %1458 = vmatprep.subr.bf16.mxu0 0
        %1459 = vmatpush1.bf16.msra.mxu0 %v1409
        %1460 = vmatprep.subr.bf16.mxu0 0
        %1461 = vmatpush1.bf16.msra.mxu0 %v1410
        %1462 = vmatprep.subr.bf16.mxu0 0
        %1463 = vmatpush1.bf16.msra.mxu0 %v1411
        %1464 = vmatprep.subr.bf16.mxu0 0
        %1465 = vmatpush1.bf16.msra.mxu0 %v1412
        %1466 = vmatprep.subr.bf16.mxu0 0
        %1467 = vmatpush1.bf16.msra.mxu0 %v1413
        %1468 = vmatprep.subr.bf16.mxu0 0
        %1469 = vmatpush1.bf16.msra.mxu0 %v1414
        %1470 = vmatprep.subr.bf16.mxu0 0
        %1471 = vmatpush1.bf16.msra.mxu0 %v1415
        %1472 = vmatprep.subr.bf16.mxu0 0
        %1473 = vmatpush1.bf16.msra.mxu0 %v1416
        %1474 = vmatprep.subr.bf16.mxu0 0
        %1475 = vmatpush1.bf16.msra.mxu0 %v1417
        %1476 = vmatprep.subr.bf16.mxu0 0
        %1477 = vmatpush1.bf16.msra.mxu0 %v1418
        %1478 = vmatprep.subr.bf16.mxu0 0
        %1479 = vmatpush1.bf16.msra.mxu0 %v1419
        %1480 = vmatprep.subr.bf16.mxu0 0
        %1481 = vmatpush1.bf16.msra.mxu0 %v1420
        %1482 = vmatprep.subr.bf16.mxu0 0
        %1483 = vmatpush1.bf16.msra.mxu0 %v1421
        %1484 = vmatprep.subr.bf16.mxu0 0
        %1485 = vmatpush1.bf16.msra.mxu0 %v1422
        %1486 = vmatprep.subr.bf16.mxu0 0
        %1487 = vmatpush1.bf16.msra.mxu0 %v1423
        %1488 = vmatprep.mubr.bf16.mxu0 %v1310
        %1489 = vmatmul.mubr.bf16.gmra.mrb[0].mxu0 %v1309
        %v1490 = vpop.f32.mrb[0].mxu0
        %v1491 = vadd.f32 0.0, %v1490
        %v1492 = vpop.f32.mrb[0].mxu0
        %v1493 = vpop.f32.mrb[0].mxu0
        %v1494 = vpop.f32.mrb[0].mxu0
        %1495 = vdwg.mxu0
        %1496 = vmatprep.subr.bf16.mxu0 0
        %1497 = vmatpush1.bf16.msra.mxu0 %v1424
        %1498 = vmatprep.subr.bf16.mxu0 0
        %1499 = vmatpush1.bf16.msra.mxu0 %v1425
        %1500 = vmatprep.subr.bf16.mxu0 0
        %1501 = vmatpush1.bf16.msra.mxu0 %v1426
        %1502 = vmatprep.subr.bf16.mxu0 0
        %1503 = vmatpush1.bf16.msra.mxu0 %v1427
        %1504 = vmatprep.subr.bf16.mxu0 0
        %1505 = vmatpush1.bf16.msra.mxu0 %v1428
        %1506 = vmatprep.subr.bf16.mxu0 0
        %1507 = vmatpush1.bf16.msra.mxu0 %v1429
        %1508 = vmatprep.subr.bf16.mxu0 0
        %1509 = vmatpush1.bf16.msra.mxu0 %v1430
        %1510 = vmatprep.subr.bf16.mxu0 0
        %1511 = vmatpush1.bf16.msra.mxu0 %v1431
        %1512 = vmatprep.subr.bf16.mxu0 0
        %1513 = vmatpush1.bf16.msra.mxu0 0
        %1514 = vmatprep.subr.bf16.mxu0 0
        %1515 = vmatpush1.bf16.msra.mxu0 0
        %1516 = vmatprep.subr.bf16.mxu0 0
        %1517 = vmatpush1.bf16.msra.mxu0 0
        %1518 = vmatprep.subr.bf16.mxu0 0
        %1519 = vmatpush1.bf16.msra.mxu0 0
        %1520 = vmatprep.subr.bf16.mxu0 0
        %1521 = vmatpush1.bf16.msra.mxu0 0
        %1522 = vmatprep.subr.bf16.mxu0 0
        %1523 = vmatpush1.bf16.msra.mxu0 0
        %1524 = vmatprep.subr.bf16.mxu0 0
        %1525 = vmatpush1.bf16.msra.mxu0 0
        %1526 = vmatprep.subr.bf16.mxu0 0
        %1527 = vmatpush1.bf16.msra.mxu0 0
        %1528 = vmatprep.mubr.bf16.mxu0 0
        %1529 = vmatmul.mubr.bf16.gmra.mrb[0].mxu0 %v1311
        %v1530 = vpop.f32.mrb[0].mxu0
        %v1531 = vadd.f32 %v1491, %v1530
        %v1532 = vpop.f32.mrb[0].mxu0
        %v1533 = vpop.f32.mrb[0].mxu0
        %v1534 = vpop.f32.mrb[0].mxu0
        %1535 = vdwg.mxu0
        %v1536 = vld [vmem:[#allocation12 + $0x2] sm:$0x1]
        %v1537 = vlaneseq
        %v1538 = vshrl.u32 %v1537, 7
        %v1539 = vsub.s32 0, %v1538
        %v1540 = vrot.slane %v1536, %v1539
        %v1541 = vmul.f32 %v1531, %v1540
        %v1542 = vld [vmem:[#allocation13 + $0x2] sm:$0x1]
        %v1543 = vlaneseq
        %v1544 = vshrl.u32 %v1543, 7
        %v1545 = vsub.s32 0, %v1544
        %v1546 = vrot.slane %v1542, %v1545
        %v1547 = vadd.f32 %v1541, %v1546
        %v1548 = vmax.f32 %v1547, 0.0
        %1549 = vst [vmem:[#allocation2 + $0x1] sm:$0xff] %v1548
        %s1550 = scalar_lea.vmem [#allocation10], 576
        %v1551 = vld [vmem:[%s1550] sm:$0xf]
        %v1552 = vld [vmem:[%s1550 + $0x4] sm:$0xf]
        %v1553 = vld [vmem:[%s1550 + $0x8] sm:$0xf]
        %v1554 = vld [vmem:[%s1550 + $0xc] sm:$0xf]
        %v1555 = vld [vmem:[%s1550 + $0x10] sm:$0xf]
        %v1556 = vld [vmem:[%s1550 + $0x14] sm:$0xf]
        %v1557 = vld [vmem:[%s1550 + $0x18] sm:$0xf]
        %v1558 = vld [vmem:[%s1550 + $0x1c] sm:$0xf]
        %v1559 = vld [vmem:[%s1550 + $0x20] sm:$0xf]
        %v1560 = vld [vmem:[%s1550 + $0x24] sm:$0xf]
        %v1561 = vld [vmem:[%s1550 + $0x28] sm:$0xf]
        %v1562 = vld [vmem:[%s1550 + $0x2c] sm:$0xf]
        %v1563 = vld [vmem:[%s1550 + $0x30] sm:$0xf]
        %v1564 = vld [vmem:[%s1550 + $0x34] sm:$0xf]
        %v1565 = vld [vmem:[%s1550 + $0x38] sm:$0xf]
        %v1566 = vld [vmem:[%s1550 + $0x3c] sm:$0xf]
        %v1567 = vld [vmem:[%s1550 + $0x40] sm:$0xf]
        %v1568 = vld [vmem:[%s1550 + $0x44] sm:$0xf]
        %v1569 = vld [vmem:[%s1550 + $0x48] sm:$0xf]
        %v1570 = vld [vmem:[%s1550 + $0x4c] sm:$0xf]
        %v1571 = vld [vmem:[%s1550 + $0x50] sm:$0xf]
        %v1572 = vld [vmem:[%s1550 + $0x54] sm:$0xf]
        %v1573 = vld [vmem:[%s1550 + $0x58] sm:$0xf]
        %v1574 = vld [vmem:[%s1550 + $0x5c] sm:$0xf]
        %v1575 = vld [vmem:[%s1550 + $0x60] sm:$0xf]
        %v1576 = vld [vmem:[%s1550 + $0x64] sm:$0xf]
        %v1577 = vld [vmem:[%s1550 + $0x68] sm:$0xf]
        %v1578 = vld [vmem:[%s1550 + $0x6c] sm:$0xf]
        %v1579 = vld [vmem:[%s1550 + $0x70] sm:$0xf]
        %v1580 = vld [vmem:[%s1550 + $0x74] sm:$0xf]
        %v1581 = vld [vmem:[%s1550 + $0x78] sm:$0xf]
        %v1582 = vld [vmem:[%s1550 + $0x7c] sm:$0xf]
        %v1583 = vld [vmem:[%s1550 + $0x80] sm:$0xf]
        %v1584 = vld [vmem:[%s1550 + $0x84] sm:$0xf]
        %v1585 = vld [vmem:[%s1550 + $0x88] sm:$0xf]
        %v1586 = vld [vmem:[%s1550 + $0x8c] sm:$0xf]
        %v1587 = vld [vmem:[%s1550 + $0x90] sm:$0xf]
        %v1588 = vld [vmem:[%s1550 + $0x94] sm:$0xf]
        %v1589 = vld [vmem:[%s1550 + $0x98] sm:$0xf]
        %v1590 = vld [vmem:[%s1550 + $0x9c] sm:$0xf]
        %v1591 = vld [vmem:[%s1550 + $0xa0] sm:$0xf]
        %v1592 = vld [vmem:[%s1550 + $0xa4] sm:$0xf]
        %v1593 = vld [vmem:[%s1550 + $0xa8] sm:$0xf]
        %v1594 = vld [vmem:[%s1550 + $0xac] sm:$0xf]
        %v1595 = vld [vmem:[%s1550 + $0xb0] sm:$0xf]
        %v1596 = vld [vmem:[%s1550 + $0xb4] sm:$0xf]
        %v1597 = vld [vmem:[%s1550 + $0xb8] sm:$0xf]
        %v1598 = vld [vmem:[%s1550 + $0xbc] sm:$0xf]
        %v1599 = vld [vmem:[#allocation2] sm:$0xff]
        %v1600 = vld [vmem:[#allocation2 + $0x1] sm:$0xff]
        %v1601 = vld [vmem:[#allocation2 + $0x2] sm:$0xff]
        %v1602 = vpack.c.bf16 %v1599, %v1599
        %v1603 = vpack.c.bf16 %v1600, %v1600
        %v1604 = vpack.c.bf16 %v1601, %v1601
        %v1653 = vunpack.c.l.b16 %v1551
        %v1654 = vunpack.c.l.b16 %v1552
        %v1655 = vunpack.c.l.b16 %v1553
        %v1656 = vunpack.c.l.b16 %v1554
        %v1657 = vunpack.c.l.b16 %v1555
        %v1658 = vunpack.c.l.b16 %v1556
        %v1659 = vunpack.c.l.b16 %v1557
        %v1660 = vunpack.c.l.b16 %v1558
        %v1661 = vunpack.c.l.b16 %v1559
        %v1662 = vunpack.c.l.b16 %v1560
        %v1663 = vunpack.c.l.b16 %v1561
        %v1664 = vunpack.c.l.b16 %v1562
        %v1665 = vunpack.c.l.b16 %v1563
        %v1666 = vunpack.c.l.b16 %v1564
        %v1667 = vunpack.c.l.b16 %v1565
        %v1668 = vunpack.c.l.b16 %v1566
        %v1669 = vunpack.c.l.b16 %v1567
        %v1670 = vunpack.c.l.b16 %v1568
        %v1671 = vunpack.c.l.b16 %v1569
        %v1672 = vunpack.c.l.b16 %v1570
        %v1673 = vunpack.c.l.b16 %v1571
        %v1674 = vunpack.c.l.b16 %v1572
        %v1675 = vunpack.c.l.b16 %v1573
        %v1676 = vunpack.c.l.b16 %v1574
        %v1677 = vunpack.c.l.b16 %v1575
        %v1678 = vunpack.c.l.b16 %v1576
        %v1679 = vunpack.c.l.b16 %v1577
        %v1680 = vunpack.c.l.b16 %v1578
        %v1681 = vunpack.c.l.b16 %v1579
        %v1682 = vunpack.c.l.b16 %v1580
        %v1683 = vunpack.c.l.b16 %v1581
        %v1684 = vunpack.c.l.b16 %v1582
        %v1685 = vunpack.c.l.b16 %v1583
        %v1686 = vunpack.c.l.b16 %v1584
        %v1687 = vunpack.c.l.b16 %v1585
        %v1688 = vunpack.c.l.b16 %v1586
        %v1689 = vunpack.c.l.b16 %v1587
        %v1690 = vunpack.c.l.b16 %v1588
        %v1691 = vunpack.c.l.b16 %v1589
        %v1692 = vunpack.c.l.b16 %v1590
        %v1693 = vunpack.c.l.b16 %v1591
        %v1694 = vunpack.c.l.b16 %v1592
        %v1695 = vunpack.c.l.b16 %v1593
        %v1696 = vunpack.c.l.b16 %v1594
        %v1697 = vunpack.c.l.b16 %v1595
        %v1698 = vunpack.c.l.b16 %v1596
        %v1699 = vunpack.c.l.b16 %v1597
        %v1700 = vunpack.c.l.b16 %v1598
        %v1701 = vpack.c.b16 %v1654, %v1653
        %v1702 = vpack.c.b16 %v1656, %v1655
        %v1703 = vpack.c.b16 %v1658, %v1657
        %v1704 = vpack.c.b16 %v1660, %v1659
        %v1705 = vpack.c.b16 %v1662, %v1661
        %v1706 = vpack.c.b16 %v1664, %v1663
        %v1707 = vpack.c.b16 %v1666, %v1665
        %v1708 = vpack.c.b16 %v1668, %v1667
        %v1709 = vpack.c.b16 %v1670, %v1669
        %v1710 = vpack.c.b16 %v1672, %v1671
        %v1711 = vpack.c.b16 %v1674, %v1673
        %v1712 = vpack.c.b16 %v1676, %v1675
        %v1713 = vpack.c.b16 %v1678, %v1677
        %v1714 = vpack.c.b16 %v1680, %v1679
        %v1715 = vpack.c.b16 %v1682, %v1681
        %v1716 = vpack.c.b16 %v1684, %v1683
        %v1717 = vpack.c.b16 %v1686, %v1685
        %v1718 = vpack.c.b16 %v1688, %v1687
        %v1719 = vpack.c.b16 %v1690, %v1689
        %v1720 = vpack.c.b16 %v1692, %v1691
        %v1721 = vpack.c.b16 %v1694, %v1693
        %v1722 = vpack.c.b16 %v1696, %v1695
        %v1723 = vpack.c.b16 %v1698, %v1697
        %v1724 = vpack.c.b16 %v1700, %v1699
        %1749 = vmatprep.subr.bf16.mxu0 0
        %1750 = vmatpush1.bf16.msra.mxu0 %v1701
        %1751 = vmatprep.subr.bf16.mxu0 0
        %1752 = vmatpush1.bf16.msra.mxu0 %v1702
        %1753 = vmatprep.subr.bf16.mxu0 0
        %1754 = vmatpush1.bf16.msra.mxu0 %v1703
        %1755 = vmatprep.subr.bf16.mxu0 0
        %1756 = vmatpush1.bf16.msra.mxu0 %v1704
        %1757 = vmatprep.subr.bf16.mxu0 0
        %1758 = vmatpush1.bf16.msra.mxu0 %v1705
        %1759 = vmatprep.subr.bf16.mxu0 0
        %1760 = vmatpush1.bf16.msra.mxu0 %v1706
        %1761 = vmatprep.subr.bf16.mxu0 0
        %1762 = vmatpush1.bf16.msra.mxu0 %v1707
        %1763 = vmatprep.subr.bf16.mxu0 0
        %1764 = vmatpush1.bf16.msra.mxu0 %v1708
        %1765 = vmatprep.subr.bf16.mxu0 0
        %1766 = vmatpush1.bf16.msra.mxu0 %v1709
        %1767 = vmatprep.subr.bf16.mxu0 0
        %1768 = vmatpush1.bf16.msra.mxu0 %v1710
        %1769 = vmatprep.subr.bf16.mxu0 0
        %1770 = vmatpush1.bf16.msra.mxu0 %v1711
        %1771 = vmatprep.subr.bf16.mxu0 0
        %1772 = vmatpush1.bf16.msra.mxu0 %v1712
        %1773 = vmatprep.subr.bf16.mxu0 0
        %1774 = vmatpush1.bf16.msra.mxu0 %v1713
        %1775 = vmatprep.subr.bf16.mxu0 0
        %1776 = vmatpush1.bf16.msra.mxu0 %v1714
        %1777 = vmatprep.subr.bf16.mxu0 0
        %1778 = vmatpush1.bf16.msra.mxu0 %v1715
        %1779 = vmatprep.subr.bf16.mxu0 0
        %1780 = vmatpush1.bf16.msra.mxu0 %v1716
        %1781 = vmatprep.mubr.bf16.mxu0 %v1603
        %1782 = vmatmul.mubr.bf16.gmra.mrb[0].mxu0 %v1602
        %v1783 = vpop.f32.mrb[0].mxu0
        %v1784 = vadd.f32 0.0, %v1783
        %v1785 = vpop.f32.mrb[0].mxu0
        %v1786 = vpop.f32.mrb[0].mxu0
        %v1787 = vpop.f32.mrb[0].mxu0
        %1788 = vdwg.mxu0
        %1789 = vmatprep.subr.bf16.mxu0 0
        %1790 = vmatpush1.bf16.msra.mxu0 %v1717
        %1791 = vmatprep.subr.bf16.mxu0 0
        %1792 = vmatpush1.bf16.msra.mxu0 %v1718
        %1793 = vmatprep.subr.bf16.mxu0 0
        %1794 = vmatpush1.bf16.msra.mxu0 %v1719
        %1795 = vmatprep.subr.bf16.mxu0 0
        %1796 = vmatpush1.bf16.msra.mxu0 %v1720
        %1797 = vmatprep.subr.bf16.mxu0 0
        %1798 = vmatpush1.bf16.msra.mxu0 %v1721
        %1799 = vmatprep.subr.bf16.mxu0 0
        %1800 = vmatpush1.bf16.msra.mxu0 %v1722
        %1801 = vmatprep.subr.bf16.mxu0 0
        %1802 = vmatpush1.bf16.msra.mxu0 %v1723
        %1803 = vmatprep.subr.bf16.mxu0 0
        %1804 = vmatpush1.bf16.msra.mxu0 %v1724
        %1805 = vmatprep.subr.bf16.mxu0 0
        %1806 = vmatpush1.bf16.msra.mxu0 0
        %1807 = vmatprep.subr.bf16.mxu0 0
        %1808 = vmatpush1.bf16.msra.mxu0 0
        %1809 = vmatprep.subr.bf16.mxu0 0
        %1810 = vmatpush1.bf16.msra.mxu0 0
        %1811 = vmatprep.subr.bf16.mxu0 0
        %1812 = vmatpush1.bf16.msra.mxu0 0
        %1813 = vmatprep.subr.bf16.mxu0 0
        %1814 = vmatpush1.bf16.msra.mxu0 0
        %1815 = vmatprep.subr.bf16.mxu0 0
        %1816 = vmatpush1.bf16.msra.mxu0 0
        %1817 = vmatprep.subr.bf16.mxu0 0
        %1818 = vmatpush1.bf16.msra.mxu0 0
        %1819 = vmatprep.subr.bf16.mxu0 0
        %1820 = vmatpush1.bf16.msra.mxu0 0
        %1821 = vmatprep.mubr.bf16.mxu0 0
        %1822 = vmatmul.mubr.bf16.gmra.mrb[0].mxu0 %v1604
        %v1823 = vpop.f32.mrb[0].mxu0
        %v1824 = vadd.f32 %v1784, %v1823
        %v1825 = vpop.f32.mrb[0].mxu0
        %v1826 = vpop.f32.mrb[0].mxu0
        %v1827 = vpop.f32.mrb[0].mxu0
        %1828 = vdwg.mxu0
        %v1829 = vld [vmem:[#allocation12 + $0x3] sm:$0x1]
        %v1830 = vlaneseq
        %v1831 = vshrl.u32 %v1830, 7
        %v1832 = vsub.s32 0, %v1831
        %v1833 = vrot.slane %v1829, %v1832
        %v1834 = vmul.f32 %v1824, %v1833
        %v1835 = vld [vmem:[#allocation13 + $0x3] sm:$0x1]
        %v1836 = vlaneseq
        %v1837 = vshrl.u32 %v1836, 7
        %v1838 = vsub.s32 0, %v1837
        %v1839 = vrot.slane %v1835, %v1838
        %v1840 = vadd.f32 %v1834, %v1839
        %v1841 = vadd.f32 %v1840, %v1255
        %v1842 = vmax.f32 %v1841, 0.0
        %1843 = vst [vmem:[#allocation2 + $0x1] sm:$0xff] %v1842
        %s1844 = scalar_lea.vmem [#allocation10], 768
        %v1845 = vld [vmem:[%s1844] sm:$0xf]
        %v1846 = vld [vmem:[%s1844 + $0x4] sm:$0xf]
        %v1847 = vld [vmem:[%s1844 + $0x8] sm:$0xf]
        %v1848 = vld [vmem:[%s1844 + $0xc] sm:$0xf]
        %v1849 = vld [vmem:[%s1844 + $0x10] sm:$0xf]
        %v1850 = vld [vmem:[%s1844 + $0x14] sm:$0xf]
        %v1851 = vld [vmem:[%s1844 + $0x18] sm:$0xf]
        %v1852 = vld [vmem:[%s1844 + $0x1c] sm:$0xf]
        %v1853 = vld [vmem:[%s1844 + $0x20] sm:$0xf]
        %v1854 = vld [vmem:[%s1844 + $0x24] sm:$0xf]
        %v1855 = vld [vmem:[%s1844 + $0x28] sm:$0xf]
        %v1856 = vld [vmem:[%s1844 + $0x2c] sm:$0xf]
        %v1857 = vld [vmem:[%s1844 + $0x30] sm:$0xf]
        %v1858 = vld [vmem:[%s1844 + $0x34] sm:$0xf]
        %v1859 = vld [vmem:[%s1844 + $0x38] sm:$0xf]
        %v1860 = vld [vmem:[%s1844 + $0x3c] sm:$0xf]
        %v1861 = vld [vmem:[%s1844 + $0x40] sm:$0xf]
        %v1862 = vld [vmem:[%s1844 + $0x44] sm:$0xf]
        %v1863 = vld [vmem:[%s1844 + $0x48] sm:$0xf]
        %v1864 = vld [vmem:[%s1844 + $0x4c] sm:$0xf]
        %v1865 = vld [vmem:[%s1844 + $0x50] sm:$0xf]
        %v1866 = vld [vmem:[%s1844 + $0x54] sm:$0xf]
        %v1867 = vld [vmem:[%s1844 + $0x58] sm:$0xf]
        %v1868 = vld [vmem:[%s1844 + $0x5c] sm:$0xf]
        %v1869 = vld [vmem:[%s1844 + $0x60] sm:$0xf]
        %v1870 = vld [vmem:[%s1844 + $0x64] sm:$0xf]
        %v1871 = vld [vmem:[%s1844 + $0x68] sm:$0xf]
        %v1872 = vld [vmem:[%s1844 + $0x6c] sm:$0xf]
        %v1873 = vld [vmem:[%s1844 + $0x70] sm:$0xf]
        %v1874 = vld [vmem:[%s1844 + $0x74] sm:$0xf]
        %v1875 = vld [vmem:[%s1844 + $0x78] sm:$0xf]
        %v1876 = vld [vmem:[%s1844 + $0x7c] sm:$0xf]
        %v1877 = vld [vmem:[%s1844 + $0x80] sm:$0xf]
        %v1878 = vld [vmem:[%s1844 + $0x84] sm:$0xf]
        %v1879 = vld [vmem:[%s1844 + $0x88] sm:$0xf]
        %v1880 = vld [vmem:[%s1844 + $0x8c] sm:$0xf]
        %v1881 = vld [vmem:[%s1844 + $0x90] sm:$0xf]
        %v1882 = vld [vmem:[%s1844 + $0x94] sm:$0xf]
        %v1883 = vld [vmem:[%s1844 + $0x98] sm:$0xf]
        %v1884 = vld [vmem:[%s1844 + $0x9c] sm:$0xf]
        %v1885 = vld [vmem:[%s1844 + $0xa0] sm:$0xf]
        %v1886 = vld [vmem:[%s1844 + $0xa4] sm:$0xf]
        %v1887 = vld [vmem:[%s1844 + $0xa8] sm:$0xf]
        %v1888 = vld [vmem:[%s1844 + $0xac] sm:$0xf]
        %v1889 = vld [vmem:[%s1844 + $0xb0] sm:$0xf]
        %v1890 = vld [vmem:[%s1844 + $0xb4] sm:$0xf]
        %v1891 = vld [vmem:[%s1844 + $0xb8] sm:$0xf]
        %v1892 = vld [vmem:[%s1844 + $0xbc] sm:$0xf]
        %v1893 = vld [vmem:[#allocation2] sm:$0xff]
        %v1894 = vld [vmem:[#allocation2 + $0x1] sm:$0xff]
        %v1895 = vld [vmem:[#allocation2 + $0x2] sm:$0xff]
        %v1896 = vpack.c.bf16 %v1893, %v1893
        %v1897 = vpack.c.bf16 %v1894, %v1894
        %v1898 = vpack.c.bf16 %v1895, %v1895
        %v1899 = vld [vmem:[%s481] sm:$0xff]
        %v1900 = vpack.c.bf16 %v1899, %v1899
        %v1901 = vld [vmem:[#allocation15] sm:$0xf]
        %v1902 = vld [vmem:[#allocation15 + $0x4] sm:$0xf]
        %v1903 = vld [vmem:[#allocation15 + $0x8] sm:$0xf]
        %v1904 = vld [vmem:[#allocation15 + $0xc] sm:$0xf]
        %v1905 = vld [vmem:[#allocation15 + $0x10] sm:$0xf]
        %v1906 = vld [vmem:[#allocation15 + $0x14] sm:$0xf]
        %v1907 = vld [vmem:[#allocation15 + $0x18] sm:$0xf]
        %v1908 = vld [vmem:[#allocation15 + $0x1c] sm:$0xf]
        %v1909 = vld [vmem:[#allocation15 + $0x20] sm:$0xf]
        %v1910 = vld [vmem:[#allocation15 + $0x24] sm:$0xf]
        %v1911 = vld [vmem:[#allocation15 + $0x28] sm:$0xf]
        %v1912 = vld [vmem:[#allocation15 + $0x2c] sm:$0xf]
        %v1913 = vld [vmem:[#allocation15 + $0x30] sm:$0xf]
        %v1914 = vld [vmem:[#allocation15 + $0x34] sm:$0xf]
        %v1915 = vld [vmem:[#allocation15 + $0x38] sm:$0xf]
        %v1916 = vld [vmem:[#allocation15 + $0x3c] sm:$0xf]
        %v1933 = vunpack.c.l.b16 %v1901
        %v1934 = vunpack.c.l.b16 %v1902
        %v1935 = vunpack.c.l.b16 %v1903
        %v1936 = vunpack.c.l.b16 %v1904
        %v1937 = vunpack.c.l.b16 %v1905
        %v1938 = vunpack.c.l.b16 %v1906
        %v1939 = vunpack.c.l.b16 %v1907
        %v1940 = vunpack.c.l.b16 %v1908
        %v1941 = vunpack.c.l.b16 %v1909
        %v1942 = vunpack.c.l.b16 %v1910
        %v1943 = vunpack.c.l.b16 %v1911
        %v1944 = vunpack.c.l.b16 %v1912
        %v1945 = vunpack.c.l.b16 %v1913
        %v1946 = vunpack.c.l.b16 %v1914
        %v1947 = vunpack.c.l.b16 %v1915
        %v1948 = vunpack.c.l.b16 %v1916
        %v1949 = vpack.c.b16 %v1934, %v1933
        %v1950 = vpack.c.b16 %v1936, %v1935
        %v1951 = vpack.c.b16 %v1938, %v1937
        %v1952 = vpack.c.b16 %v1940, %v1939
        %v1953 = vpack.c.b16 %v1942, %v1941
        %v1954 = vpack.c.b16 %v1944, %v1943
        %v1955 = vpack.c.b16 %v1946, %v1945
        %v1956 = vpack.c.b16 %v1948, %v1947
        %1965 = vmatprep.subr.bf16.mxu0 0
        %1966 = vmatpush1.bf16.msra.mxu0 %v1949
        %1967 = vmatprep.subr.bf16.mxu0 0
        %1968 = vmatpush1.bf16.msra.mxu0 %v1950
        %1969 = vmatprep.subr.bf16.mxu0 0
        %1970 = vmatpush1.bf16.msra.mxu0 %v1951
        %1971 = vmatprep.subr.bf16.mxu0 0
        %1972 = vmatpush1.bf16.msra.mxu0 %v1952
        %1973 = vmatprep.subr.bf16.mxu0 0
        %1974 = vmatpush1.bf16.msra.mxu0 %v1953
        %1975 = vmatprep.subr.bf16.mxu0 0
        %1976 = vmatpush1.bf16.msra.mxu0 %v1954
        %1977 = vmatprep.subr.bf16.mxu0 0
        %1978 = vmatpush1.bf16.msra.mxu0 %v1955
        %1979 = vmatprep.subr.bf16.mxu0 0
        %1980 = vmatpush1.bf16.msra.mxu0 %v1956
        %1981 = vmatprep.subr.bf16.mxu0 0
        %1982 = vmatpush1.bf16.msra.mxu0 0
        %1983 = vmatprep.subr.bf16.mxu0 0
        %1984 = vmatpush1.bf16.msra.mxu0 0
        %1985 = vmatprep.subr.bf16.mxu0 0
        %1986 = vmatpush1.bf16.msra.mxu0 0
        %1987 = vmatprep.subr.bf16.mxu0 0
        %1988 = vmatpush1.bf16.msra.mxu0 0
        %1989 = vmatprep.subr.bf16.mxu0 0
        %1990 = vmatpush1.bf16.msra.mxu0 0
        %1991 = vmatprep.subr.bf16.mxu0 0
        %1992 = vmatpush1.bf16.msra.mxu0 0
        %1993 = vmatprep.subr.bf16.mxu0 0
        %1994 = vmatpush1.bf16.msra.mxu0 0
        %1995 = vmatprep.subr.bf16.mxu0 0
        %1996 = vmatpush1.bf16.msra.mxu0 0
        %1997 = vmatprep.mubr.bf16.mxu0 0
        %1998 = vmatmul.mubr.bf16.gmra.mrb[0].mxu0 %v1900
        %v1999 = vpop.f32.mrb[0].mxu0
        %v2000 = vadd.f32 0.0, %v1999
        %v2001 = vpop.f32.mrb[0].mxu0
        %v2002 = vpop.f32.mrb[0].mxu0
        %v2003 = vpop.f32.mrb[0].mxu0
        %2004 = vdwg.mxu0
        %2005 = vst [vmem:[#allocation2 + $0x1] sm:$0xff] %v2000
        %v2006 = vld [vmem:[#allocation16] sm:$0xf]
        %v2007 = vld [vmem:[#allocation16 + $0x4] sm:$0xf]
        %v2008 = vld [vmem:[#allocation16 + $0x8] sm:$0xf]
        %v2009 = vld [vmem:[#allocation16 + $0xc] sm:$0xf]
        %v2010 = vld [vmem:[#allocation16 + $0x10] sm:$0xf]
        %v2011 = vld [vmem:[#allocation16 + $0x14] sm:$0xf]
        %v2012 = vld [vmem:[#allocation16 + $0x18] sm:$0xf]
        %v2013 = vld [vmem:[#allocation16 + $0x1c] sm:$0xf]
        %v2014 = vld [vmem:[#allocation16 + $0x20] sm:$0xf]
        %v2015 = vld [vmem:[#allocation16 + $0x24] sm:$0xf]
        %v2016 = vld [vmem:[#allocation16 + $0x28] sm:$0xf]
        %v2017 = vld [vmem:[#allocation16 + $0x2c] sm:$0xf]
        %v2018 = vld [vmem:[#allocation16 + $0x30] sm:$0xf]
        %v2019 = vld [vmem:[#allocation16 + $0x34] sm:$0xf]
        %v2020 = vld [vmem:[#allocation16 + $0x38] sm:$0xf]
        %v2021 = vld [vmem:[#allocation16 + $0x3c] sm:$0xf]
        %v2022 = vld [vmem:[#allocation16 + $0x40] sm:$0xf]
        %v2023 = vld [vmem:[#allocation16 + $0x44] sm:$0xf]
        %v2024 = vld [vmem:[#allocation16 + $0x48] sm:$0xf]
        %v2025 = vld [vmem:[#allocation16 + $0x4c] sm:$0xf]
        %v2026 = vld [vmem:[#allocation16 + $0x50] sm:$0xf]
        %v2027 = vld [vmem:[#allocation16 + $0x54] sm:$0xf]
        %v2028 = vld [vmem:[#allocation16 + $0x58] sm:$0xf]
        %v2029 = vld [vmem:[#allocation16 + $0x5c] sm:$0xf]
        %v2030 = vld [vmem:[#allocation16 + $0x60] sm:$0xf]
        %v2031 = vld [vmem:[#allocation16 + $0x64] sm:$0xf]
        %v2032 = vld [vmem:[#allocation16 + $0x68] sm:$0xf]
        %v2033 = vld [vmem:[#allocation16 + $0x6c] sm:$0xf]
        %v2034 = vld [vmem:[#allocation16 + $0x70] sm:$0xf]
        %v2035 = vld [vmem:[#allocation16 + $0x74] sm:$0xf]
        %v2036 = vld [vmem:[#allocation16 + $0x78] sm:$0xf]
        %v2037 = vld [vmem:[#allocation16 + $0x7c] sm:$0xf]
        %v2038 = vld [vmem:[#allocation16 + $0x80] sm:$0xf]
        %v2039 = vld [vmem:[#allocation16 + $0x84] sm:$0xf]
        %v2040 = vld [vmem:[#allocation16 + $0x88] sm:$0xf]
        %v2041 = vld [vmem:[#allocation16 + $0x8c] sm:$0xf]
        %v2042 = vld [vmem:[#allocation16 + $0x90] sm:$0xf]
        %v2043 = vld [vmem:[#allocation16 + $0x94] sm:$0xf]
        %v2044 = vld [vmem:[#allocation16 + $0x98] sm:$0xf]
        %v2045 = vld [vmem:[#allocation16 + $0x9c] sm:$0xf]
        %v2046 = vld [vmem:[#allocation16 + $0xa0] sm:$0xf]
        %v2047 = vld [vmem:[#allocation16 + $0xa4] sm:$0xf]
        %v2048 = vld [vmem:[#allocation16 + $0xa8] sm:$0xf]
        %v2049 = vld [vmem:[#allocation16 + $0xac] sm:$0xf]
        %v2050 = vld [vmem:[#allocation16 + $0xb0] sm:$0xf]
        %v2051 = vld [vmem:[#allocation16 + $0xb4] sm:$0xf]
        %v2052 = vld [vmem:[#allocation16 + $0xb8] sm:$0xf]
        %v2053 = vld [vmem:[#allocation16 + $0xbc] sm:$0xf]
        %v2054 = vld [vmem:[#allocation2] sm:$0xff]
        %v2055 = vld [vmem:[#allocation2 + $0x1] sm:$0xff]
        %v2056 = vld [vmem:[#allocation2 + $0x2] sm:$0xff]
        %v2057 = vpack.c.bf16 %v2054, %v2054
        %v2058 = vpack.c.bf16 %v2055, %v2055
        %v2059 = vpack.c.bf16 %v2056, %v2056
        %v2108 = vunpack.c.l.b16 %v2006
        %v2109 = vunpack.c.l.b16 %v2007
        %v2110 = vunpack.c.l.b16 %v2008
        %v2111 = vunpack.c.l.b16 %v2009
        %v2112 = vunpack.c.l.b16 %v2010
        %v2113 = vunpack.c.l.b16 %v2011
        %v2114 = vunpack.c.l.b16 %v2012
        %v2115 = vunpack.c.l.b16 %v2013
        %v2116 = vunpack.c.l.b16 %v2014
        %v2117 = vunpack.c.l.b16 %v2015
        %v2118 = vunpack.c.l.b16 %v2016
        %v2119 = vunpack.c.l.b16 %v2017
        %v2120 = vunpack.c.l.b16 %v2018
        %v2121 = vunpack.c.l.b16 %v2019
        %v2122 = vunpack.c.l.b16 %v2020
        %v2123 = vunpack.c.l.b16 %v2021
        %v2124 = vunpack.c.l.b16 %v2022
        %v2125 = vunpack.c.l.b16 %v2023
        %v2126 = vunpack.c.l.b16 %v2024
        %v2127 = vunpack.c.l.b16 %v2025
        %v2128 = vunpack.c.l.b16 %v2026
        %v2129 = vunpack.c.l.b16 %v2027
        %v2130 = vunpack.c.l.b16 %v2028
        %v2131 = vunpack.c.l.b16 %v2029
        %v2132 = vunpack.c.l.b16 %v2030
        %v2133 = vunpack.c.l.b16 %v2031
        %v2134 = vunpack.c.l.b16 %v2032
        %v2135 = vunpack.c.l.b16 %v2033
        %v2136 = vunpack.c.l.b16 %v2034
        %v2137 = vunpack.c.l.b16 %v2035
        %v2138 = vunpack.c.l.b16 %v2036
        %v2139 = vunpack.c.l.b16 %v2037
        %v2140 = vunpack.c.l.b16 %v2038
        %v2141 = vunpack.c.l.b16 %v2039
        %v2142 = vunpack.c.l.b16 %v2040
        %v2143 = vunpack.c.l.b16 %v2041
        %v2144 = vunpack.c.l.b16 %v2042
        %v2145 = vunpack.c.l.b16 %v2043
        %v2146 = vunpack.c.l.b16 %v2044
        %v2147 = vunpack.c.l.b16 %v2045
        %v2148 = vunpack.c.l.b16 %v2046
        %v2149 = vunpack.c.l.b16 %v2047
        %v2150 = vunpack.c.l.b16 %v2048
        %v2151 = vunpack.c.l.b16 %v2049
        %v2152 = vunpack.c.l.b16 %v2050
        %v2153 = vunpack.c.l.b16 %v2051
        %v2154 = vunpack.c.l.b16 %v2052
        %v2155 = vunpack.c.l.b16 %v2053
        %v2156 = vpack.c.b16 %v2109, %v2108
        %v2157 = vpack.c.b16 %v2111, %v2110
        %v2158 = vpack.c.b16 %v2113, %v2112
        %v2159 = vpack.c.b16 %v2115, %v2114
        %v2160 = vpack.c.b16 %v2117, %v2116
        %v2161 = vpack.c.b16 %v2119, %v2118
        %v2162 = vpack.c.b16 %v2121, %v2120
        %v2163 = vpack.c.b16 %v2123, %v2122
        %v2164 = vpack.c.b16 %v2125, %v2124
        %v2165 = vpack.c.b16 %v2127, %v2126
        %v2166 = vpack.c.b16 %v2129, %v2128
        %v2167 = vpack.c.b16 %v2131, %v2130
        %v2168 = vpack.c.b16 %v2133, %v2132
        %v2169 = vpack.c.b16 %v2135, %v2134
        %v2170 = vpack.c.b16 %v2137, %v2136
        %v2171 = vpack.c.b16 %v2139, %v2138
        %v2172 = vpack.c.b16 %v2141, %v2140
        %v2173 = vpack.c.b16 %v2143, %v2142
        %v2174 = vpack.c.b16 %v2145, %v2144
        %v2175 = vpack.c.b16 %v2147, %v2146
        %v2176 = vpack.c.b16 %v2149, %v2148
        %v2177 = vpack.c.b16 %v2151, %v2150
        %v2178 = vpack.c.b16 %v2153, %v2152
        %v2179 = vpack.c.b16 %v2155, %v2154
        %2204 = vmatprep.subr.bf16.mxu0 0
        %2205 = vmatpush1.bf16.msra.mxu0 %v2156
        %2206 = vmatprep.subr.bf16.mxu0 0
        %2207 = vmatpush1.bf16.msra.mxu0 %v2157
        %2208 = vmatprep.subr.bf16.mxu0 0
        %2209 = vmatpush1.bf16.msra.mxu0 %v2158
        %2210 = vmatprep.subr.bf16.mxu0 0
        %2211 = vmatpush1.bf16.msra.mxu0 %v2159
        %2212 = vmatprep.subr.bf16.mxu0 0
        %2213 = vmatpush1.bf16.msra.mxu0 %v2160
        %2214 = vmatprep.subr.bf16.mxu0 0
        %2215 = vmatpush1.bf16.msra.mxu0 %v2161
        %2216 = vmatprep.subr.bf16.mxu0 0
        %2217 = vmatpush1.bf16.msra.mxu0 %v2162
        %2218 = vmatprep.subr.bf16.mxu0 0
        %2219 = vmatpush1.bf16.msra.mxu0 %v2163
        %2220 = vmatprep.subr.bf16.mxu0 0
        %2221 = vmatpush1.bf16.msra.mxu0 %v2164
        %2222 = vmatprep.subr.bf16.mxu0 0
        %2223 = vmatpush1.bf16.msra.mxu0 %v2165
        %2224 = vmatprep.subr.bf16.mxu0 0
        %2225 = vmatpush1.bf16.msra.mxu0 %v2166
        %2226 = vmatprep.subr.bf16.mxu0 0
        %2227 = vmatpush1.bf16.msra.mxu0 %v2167
        %2228 = vmatprep.subr.bf16.mxu0 0
        %2229 = vmatpush1.bf16.msra.mxu0 %v2168
        %2230 = vmatprep.subr.bf16.mxu0 0
        %2231 = vmatpush1.bf16.msra.mxu0 %v2169
        %2232 = vmatprep.subr.bf16.mxu0 0
        %2233 = vmatpush1.bf16.msra.mxu0 %v2170
        %2234 = vmatprep.subr.bf16.mxu0 0
        %2235 = vmatpush1.bf16.msra.mxu0 %v2171
        %2236 = vmatprep.mubr.bf16.mxu0 %v2058
        %2237 = vmatmul.mubr.bf16.gmra.mrb[0].mxu0 %v2057
        %v2238 = vpop.f32.mrb[0].mxu0
        %v2239 = vadd.f32 0.0, %v2238
        %v2240 = vpop.f32.mrb[0].mxu0
        %v2241 = vpop.f32.mrb[0].mxu0
        %v2242 = vpop.f32.mrb[0].mxu0
        %2243 = vdwg.mxu0
        %2244 = vmatprep.subr.bf16.mxu0 0
        %2245 = vmatpush1.bf16.msra.mxu0 %v2172
        %2246 = vmatprep.subr.bf16.mxu0 0
        %2247 = vmatpush1.bf16.msra.mxu0 %v2173
        %2248 = vmatprep.subr.bf16.mxu0 0
        %2249 = vmatpush1.bf16.msra.mxu0 %v2174
        %2250 = vmatprep.subr.bf16.mxu0 0
        %2251 = vmatpush1.bf16.msra.mxu0 %v2175
        %2252 = vmatprep.subr.bf16.mxu0 0
        %2253 = vmatpush1.bf16.msra.mxu0 %v2176
        %2254 = vmatprep.subr.bf16.mxu0 0
        %2255 = vmatpush1.bf16.msra.mxu0 %v2177
        %2256 = vmatprep.subr.bf16.mxu0 0
        %2257 = vmatpush1.bf16.msra.mxu0 %v2178
        %2258 = vmatprep.subr.bf16.mxu0 0
        %2259 = vmatpush1.bf16.msra.mxu0 %v2179
        %2260 = vmatprep.subr.bf16.mxu0 0
        %2261 = vmatpush1.bf16.msra.mxu0 0
        %2262 = vmatprep.subr.bf16.mxu0 0
        %2263 = vmatpush1.bf16.msra.mxu0 0
        %2264 = vmatprep.subr.bf16.mxu0 0
        %2265 = vmatpush1.bf16.msra.mxu0 0
        %2266 = vmatprep.subr.bf16.mxu0 0
        %2267 = vmatpush1.bf16.msra.mxu0 0
        %2268 = vmatprep.subr.bf16.mxu0 0
        %2269 = vmatpush1.bf16.msra.mxu0 0
        %2270 = vmatprep.subr.bf16.mxu0 0
        %2271 = vmatpush1.bf16.msra.mxu0 0
        %2272 = vmatprep.subr.bf16.mxu0 0
        %2273 = vmatpush1.bf16.msra.mxu0 0
        %2274 = vmatprep.subr.bf16.mxu0 0
        %2275 = vmatpush1.bf16.msra.mxu0 0
        %2276 = vmatprep.mubr.bf16.mxu0 0
        %2277 = vmatmul.mubr.bf16.gmra.mrb[0].mxu0 %v2059
        %v2278 = vpop.f32.mrb[0].mxu0
        %v2279 = vadd.f32 %v2239, %v2278
        %v2280 = vpop.f32.mrb[0].mxu0
        %v2281 = vpop.f32.mrb[0].mxu0
        %v2282 = vpop.f32.mrb[0].mxu0
        %2283 = vdwg.mxu0
        %v2284 = vld [vmem:[#allocation18] sm:$0x1]
        %v2285 = vlaneseq
        %v2286 = vshrl.u32 %v2285, 7
        %v2287 = vsub.s32 0, %v2286
        %v2288 = vrot.slane %v2284, %v2287
        %v2289 = vmul.f32 %v2279, %v2288
        %v2290 = vld [vmem:[#allocation19] sm:$0x1]
        %v2291 = vlaneseq
        %v2292 = vshrl.u32 %v2291, 7
        %v2293 = vsub.s32 0, %v2292
        %v2294 = vrot.slane %v2290, %v2293
        %v2295 = vadd.f32 %v2289, %v2294
        %v2296 = vmax.f32 %v2295, 0.0
        %2297 = vst [vmem:[#allocation2 + $0x1] sm:$0xff] %v2296
        %s2298 = scalar_lea.vmem [#allocation16], 192
        %v2299 = vld [vmem:[%s2298] sm:$0xf]
        %v2300 = vld [vmem:[%s2298 + $0x4] sm:$0xf]
        %v2301 = vld [vmem:[%s2298 + $0x8] sm:$0xf]
        %v2302 = vld [vmem:[%s2298 + $0xc] sm:$0xf]
        %v2303 = vld [vmem:[%s2298 + $0x10] sm:$0xf]
        %v2304 = vld [vmem:[%s2298 + $0x14] sm:$0xf]
        %v2305 = vld [vmem:[%s2298 + $0x18] sm:$0xf]
        %v2306 = vld [vmem:[%s2298 + $0x1c] sm:$0xf]
        %v2307 = vld [vmem:[%s2298 + $0x20] sm:$0xf]
        %v2308 = vld [vmem:[%s2298 + $0x24] sm:$0xf]
        %v2309 = vld [vmem:[%s2298 + $0x28] sm:$0xf]
        %v2310 = vld [vmem:[%s2298 + $0x2c] sm:$0xf]
        %v2311 = vld [vmem:[%s2298 + $0x30] sm:$0xf]
        %v2312 = vld [vmem:[%s2298 + $0x34] sm:$0xf]
        %v2313 = vld [vmem:[%s2298 + $0x38] sm:$0xf]
        %v2314 = vld [vmem:[%s2298 + $0x3c] sm:$0xf]
        %v2315 = vld [vmem:[%s2298 + $0x40] sm:$0xf]
        %v2316 = vld [vmem:[%s2298 + $0x44] sm:$0xf]
        %v2317 = vld [vmem:[%s2298 + $0x48] sm:$0xf]
        %v2318 = vld [vmem:[%s2298 + $0x4c] sm:$0xf]
        %v2319 = vld [vmem:[%s2298 + $0x50] sm:$0xf]
        %v2320 = vld [vmem:[%s2298 + $0x54] sm:$0xf]
        %v2321 = vld [vmem:[%s2298 + $0x58] sm:$0xf]
        %v2322 = vld [vmem:[%s2298 + $0x5c] sm:$0xf]
        %v2323 = vld [vmem:[%s2298 + $0x60] sm:$0xf]
        %v2324 = vld [vmem:[%s2298 + $0x64] sm:$0xf]
        %v2325 = vld [vmem:[%s2298 + $0x68] sm:$0xf]
        %v2326 = vld [vmem:[%s2298 + $0x6c] sm:$0xf]
        %v2327 = vld [vmem:[%s2298 + $0x70] sm:$0xf]
        %v2328 = vld [vmem:[%s2298 + $0x74] sm:$0xf]
        %v2329 = vld [vmem:[%s2298 + $0x78] sm:$0xf]
        %v2330 = vld [vmem:[%s2298 + $0x7c] sm:$0xf]
        %v2331 = vld [vmem:[%s2298 + $0x80] sm:$0xf]
        %v2332 = vld [vmem:[%s2298 + $0x84] sm:$0xf]
        %v2333 = vld [vmem:[%s2298 + $0x88] sm:$0xf]
        %v2334 = vld [vmem:[%s2298 + $0x8c] sm:$0xf]
        %v2335 = vld [vmem:[%s2298 + $0x90] sm:$0xf]
        %v2336 = vld [vmem:[%s2298 + $0x94] sm:$0xf]
        %v2337 = vld [vmem:[%s2298 + $0x98] sm:$0xf]
        %v2338 = vld [vmem:[%s2298 + $0x9c] sm:$0xf]
        %v2339 = vld [vmem:[%s2298 + $0xa0] sm:$0xf]
        %v2340 = vld [vmem:[%s2298 + $0xa4] sm:$0xf]
        %v2341 = vld [vmem:[%s2298 + $0xa8] sm:$0xf]
        %v2342 = vld [vmem:[%s2298 + $0xac] sm:$0xf]
        %v2343 = vld [vmem:[%s2298 + $0xb0] sm:$0xf]
        %v2344 = vld [vmem:[%s2298 + $0xb4] sm:$0xf]
        %v2345 = vld [vmem:[%s2298 + $0xb8] sm:$0xf]
        %v2346 = vld [vmem:[%s2298 + $0xbc] sm:$0xf]
        %v2347 = vld [vmem:[#allocation2] sm:$0xff]
        %v2348 = vld [vmem:[#allocation2 + $0x1] sm:$0xff]
        %v2349 = vld [vmem:[#allocation2 + $0x2] sm:$0xff]
        %v2350 = vpack.c.bf16 %v2347, %v2347
        %v2351 = vpack.c.bf16 %v2348, %v2348
        %v2352 = vpack.c.bf16 %v2349, %v2349
        %v2401 = vunpack.c.l.b16 %v2299
        %v2402 = vunpack.c.l.b16 %v2300
        %v2403 = vunpack.c.l.b16 %v2301
        %v2404 = vunpack.c.l.b16 %v2302
        %v2405 = vunpack.c.l.b16 %v2303
        %v2406 = vunpack.c.l.b16 %v2304
        %v2407 = vunpack.c.l.b16 %v2305
        %v2408 = vunpack.c.l.b16 %v2306
        %v2409 = vunpack.c.l.b16 %v2307
        %v2410 = vunpack.c.l.b16 %v2308
        %v2411 = vunpack.c.l.b16 %v2309
        %v2412 = vunpack.c.l.b16 %v2310
        %v2413 = vunpack.c.l.b16 %v2311
        %v2414 = vunpack.c.l.b16 %v2312
        %v2415 = vunpack.c.l.b16 %v2313
        %v2416 = vunpack.c.l.b16 %v2314
        %v2417 = vunpack.c.l.b16 %v2315
        %v2418 = vunpack.c.l.b16 %v2316
        %v2419 = vunpack.c.l.b16 %v2317
        %v2420 = vunpack.c.l.b16 %v2318
        %v2421 = vunpack.c.l.b16 %v2319
        %v2422 = vunpack.c.l.b16 %v2320
        %v2423 = vunpack.c.l.b16 %v2321
        %v2424 = vunpack.c.l.b16 %v2322
        %v2425 = vunpack.c.l.b16 %v2323
        %v2426 = vunpack.c.l.b16 %v2324
        %v2427 = vunpack.c.l.b16 %v2325
        %v2428 = vunpack.c.l.b16 %v2326
        %v2429 = vunpack.c.l.b16 %v2327
        %v2430 = vunpack.c.l.b16 %v2328
        %v2431 = vunpack.c.l.b16 %v2329
        %v2432 = vunpack.c.l.b16 %v2330
        %v2433 = vunpack.c.l.b16 %v2331
        %v2434 = vunpack.c.l.b16 %v2332
        %v2435 = vunpack.c.l.b16 %v2333
        %v2436 = vunpack.c.l.b16 %v2334
        %v2437 = vunpack.c.l.b16 %v2335
        %v2438 = vunpack.c.l.b16 %v2336
        %v2439 = vunpack.c.l.b16 %v2337
        %v2440 = vunpack.c.l.b16 %v2338
        %v2441 = vunpack.c.l.b16 %v2339
        %v2442 = vunpack.c.l.b16 %v2340
        %v2443 = vunpack.c.l.b16 %v2341
        %v2444 = vunpack.c.l.b16 %v2342
        %v2445 = vunpack.c.l.b16 %v2343
        %v2446 = vunpack.c.l.b16 %v2344
        %v2447 = vunpack.c.l.b16 %v2345
        %v2448 = vunpack.c.l.b16 %v2346
        %v2449 = vpack.c.b16 %v2402, %v2401
        %v2450 = vpack.c.b16 %v2404, %v2403
        %v2451 = vpack.c.b16 %v2406, %v2405
        %v2452 = vpack.c.b16 %v2408, %v2407
        %v2453 = vpack.c.b16 %v2410, %v2409
        %v2454 = vpack.c.b16 %v2412, %v2411
        %v2455 = vpack.c.b16 %v2414, %v2413
        %v2456 = vpack.c.b16 %v2416, %v2415
        %v2457 = vpack.c.b16 %v2418, %v2417
        %v2458 = vpack.c.b16 %v2420, %v2419
        %v2459 = vpack.c.b16 %v2422, %v2421
        %v2460 = vpack.c.b16 %v2424, %v2423
        %v2461 = vpack.c.b16 %v2426, %v2425
        %v2462 = vpack.c.b16 %v2428, %v2427
        %v2463 = vpack.c.b16 %v2430, %v2429
        %v2464 = vpack.c.b16 %v2432, %v2431
        %v2465 = vpack.c.b16 %v2434, %v2433
        %v2466 = vpack.c.b16 %v2436, %v2435
        %v2467 = vpack.c.b16 %v2438, %v2437
        %v2468 = vpack.c.b16 %v2440, %v2439
        %v2469 = vpack.c.b16 %v2442, %v2441
        %v2470 = vpack.c.b16 %v2444, %v2443
        %v2471 = vpack.c.b16 %v2446, %v2445
        %v2472 = vpack.c.b16 %v2448, %v2447
        %2497 = vmatprep.subr.bf16.mxu0 0
        %2498 = vmatpush1.bf16.msra.mxu0 %v2449
        %2499 = vmatprep.subr.bf16.mxu0 0
        %2500 = vmatpush1.bf16.msra.mxu0 %v2450
        %2501 = vmatprep.subr.bf16.mxu0 0
        %2502 = vmatpush1.bf16.msra.mxu0 %v2451
        %2503 = vmatprep.subr.bf16.mxu0 0
        %2504 = vmatpush1.bf16.msra.mxu0 %v2452
        %2505 = vmatprep.subr.bf16.mxu0 0
        %2506 = vmatpush1.bf16.msra.mxu0 %v2453
        %2507 = vmatprep.subr.bf16.mxu0 0
        %2508 = vmatpush1.bf16.msra.mxu0 %v2454
        %2509 = vmatprep.subr.bf16.mxu0 0
        %2510 = vmatpush1.bf16.msra.mxu0 %v2455
        %2511 = vmatprep.subr.bf16.mxu0 0
        %2512 = vmatpush1.bf16.msra.mxu0 %v2456
        %2513 = vmatprep.subr.bf16.mxu0 0
        %2514 = vmatpush1.bf16.msra.mxu0 %v2457
        %2515 = vmatprep.subr.bf16.mxu0 0
        %2516 = vmatpush1.bf16.msra.mxu0 %v2458
        %2517 = vmatprep.subr.bf16.mxu0 0
        %2518 = vmatpush1.bf16.msra.mxu0 %v2459
        %2519 = vmatprep.subr.bf16.mxu0 0
        %2520 = vmatpush1.bf16.msra.mxu0 %v2460
        %2521 = vmatprep.subr.bf16.mxu0 0
        %2522 = vmatpush1.bf16.msra.mxu0 %v2461
        %2523 = vmatprep.subr.bf16.mxu0 0
        %2524 = vmatpush1.bf16.msra.mxu0 %v2462
        %2525 = vmatprep.subr.bf16.mxu0 0
        %2526 = vmatpush1.bf16.msra.mxu0 %v2463
        %2527 = vmatprep.subr.bf16.mxu0 0
        %2528 = vmatpush1.bf16.msra.mxu0 %v2464
        %2529 = vmatprep.mubr.bf16.mxu0 %v2351
        %2530 = vmatmul.mubr.bf16.gmra.mrb[0].mxu0 %v2350
        %v2531 = vpop.f32.mrb[0].mxu0
        %v2532 = vadd.f32 0.0, %v2531
        %v2533 = vpop.f32.mrb[0].mxu0
        %v2534 = vpop.f32.mrb[0].mxu0
        %v2535 = vpop.f32.mrb[0].mxu0
        %2536 = vdwg.mxu0
        %2537 = vmatprep.subr.bf16.mxu0 0
        %2538 = vmatpush1.bf16.msra.mxu0 %v2465
        %2539 = vmatprep.subr.bf16.mxu0 0
        %2540 = vmatpush1.bf16.msra.mxu0 %v2466
        %2541 = vmatprep.subr.bf16.mxu0 0
        %2542 = vmatpush1.bf16.msra.mxu0 %v2467
        %2543 = vmatprep.subr.bf16.mxu0 0
        %2544 = vmatpush1.bf16.msra.mxu0 %v2468
        %2545 = vmatprep.subr.bf16.mxu0 0
        %2546 = vmatpush1.bf16.msra.mxu0 %v2469
        %2547 = vmatprep.subr.bf16.mxu0 0
        %2548 = vmatpush1.bf16.msra.mxu0 %v2470
        %2549 = vmatprep.subr.bf16.mxu0 0
        %2550 = vmatpush1.bf16.msra.mxu0 %v2471
        %2551 = vmatprep.subr.bf16.mxu0 0
        %2552 = vmatpush1.bf16.msra.mxu0 %v2472
        %2553 = vmatprep.subr.bf16.mxu0 0
        %2554 = vmatpush1.bf16.msra.mxu0 0
        %2555 = vmatprep.subr.bf16.mxu0 0
        %2556 = vmatpush1.bf16.msra.mxu0 0
        %2557 = vmatprep.subr.bf16.mxu0 0
        %2558 = vmatpush1.bf16.msra.mxu0 0
        %2559 = vmatprep.subr.bf16.mxu0 0
        %2560 = vmatpush1.bf16.msra.mxu0 0
        %2561 = vmatprep.subr.bf16.mxu0 0
        %2562 = vmatpush1.bf16.msra.mxu0 0
        %2563 = vmatprep.subr.bf16.mxu0 0
        %2564 = vmatpush1.bf16.msra.mxu0 0
        %2565 = vmatprep.subr.bf16.mxu0 0
        %2566 = vmatpush1.bf16.msra.mxu0 0
        %2567 = vmatprep.subr.bf16.mxu0 0
        %2568 = vmatpush1.bf16.msra.mxu0 0
        %2569 = vmatprep.mubr.bf16.mxu0 0
        %2570 = vmatmul.mubr.bf16.gmra.mrb[0].mxu0 %v2352
        %v2571 = vpop.f32.mrb[0].mxu0
        %v2572 = vadd.f32 %v2532, %v2571
        %v2573 = vpop.f32.mrb[0].mxu0
        %v2574 = vpop.f32.mrb[0].mxu0
        %v2575 = vpop.f32.mrb[0].mxu0
        %2576 = vdwg.mxu0
        %v2577 = vld [vmem:[#allocation18 + $0x1] sm:$0x1]
        %v2578 = vlaneseq
        %v2579 = vshrl.u32 %v2578, 7
        %v2580 = vsub.s32 0, %v2579
        %v2581 = vrot.slane %v2577, %v2580
        %v2582 = vmul.f32 %v2572, %v2581
        %v2583 = vld [vmem:[#allocation19 + $0x1] sm:$0x1]
        %v2584 = vlaneseq
        %v2585 = vshrl.u32 %v2584, 7
        %v2586 = vsub.s32 0, %v2585
        %v2587 = vrot.slane %v2583, %v2586
        %v2588 = vadd.f32 %v2582, %v2587
        %v2589 = vadd.f32 %v2588, %v2000
        %v2590 = vmax.f32 %v2589, 0.0
        %2591 = vst [vmem:[#allocation2 + $0x1] sm:$0xff] %v2590
        %s2592 = scalar_lea.vmem [#allocation16], 384
        %v2593 = vld [vmem:[%s2592] sm:$0xf]
        %v2594 = vld [vmem:[%s2592 + $0x4] sm:$0xf]
        %v2595 = vld [vmem:[%s2592 + $0x8] sm:$0xf]
        %v2596 = vld [vmem:[%s2592 + $0xc] sm:$0xf]
        %v2597 = vld [vmem:[%s2592 + $0x10] sm:$0xf]
        %v2598 = vld [vmem:[%s2592 + $0x14] sm:$0xf]
        %v2599 = vld [vmem:[%s2592 + $0x18] sm:$0xf]
        %v2600 = vld [vmem:[%s2592 + $0x1c] sm:$0xf]
        %v2601 = vld [vmem:[%s2592 + $0x20] sm:$0xf]
        %v2602 = vld [vmem:[%s2592 + $0x24] sm:$0xf]
        %v2603 = vld [vmem:[%s2592 + $0x28] sm:$0xf]
        %v2604 = vld [vmem:[%s2592 + $0x2c] sm:$0xf]
        %v2605 = vld [vmem:[%s2592 + $0x30] sm:$0xf]
        %v2606 = vld [vmem:[%s2592 + $0x34] sm:$0xf]
        %v2607 = vld [vmem:[%s2592 + $0x38] sm:$0xf]
        %v2608 = vld [vmem:[%s2592 + $0x3c] sm:$0xf]
        %v2609 = vld [vmem:[%s2592 + $0x40] sm:$0xf]
        %v2610 = vld [vmem:[%s2592 + $0x44] sm:$0xf]
        %v2611 = vld [vmem:[%s2592 + $0x48] sm:$0xf]
        %v2612 = vld [vmem:[%s2592 + $0x4c] sm:$0xf]
        %v2613 = vld [vmem:[%s2592 + $0x50] sm:$0xf]
        %v2614 = vld [vmem:[%s2592 + $0x54] sm:$0xf]
        %v2615 = vld [vmem:[%s2592 + $0x58] sm:$0xf]
        %v2616 = vld [vmem:[%s2592 + $0x5c] sm:$0xf]
        %v2617 = vld [vmem:[%s2592 + $0x60] sm:$0xf]
        %v2618 = vld [vmem:[%s2592 + $0x64] sm:$0xf]
        %v2619 = vld [vmem:[%s2592 + $0x68] sm:$0xf]
        %v2620 = vld [vmem:[%s2592 + $0x6c] sm:$0xf]
        %v2621 = vld [vmem:[%s2592 + $0x70] sm:$0xf]
        %v2622 = vld [vmem:[%s2592 + $0x74] sm:$0xf]
        %v2623 = vld [vmem:[%s2592 + $0x78] sm:$0xf]
        %v2624 = vld [vmem:[%s2592 + $0x7c] sm:$0xf]
        %v2625 = vld [vmem:[%s2592 + $0x80] sm:$0xf]
        %v2626 = vld [vmem:[%s2592 + $0x84] sm:$0xf]
        %v2627 = vld [vmem:[%s2592 + $0x88] sm:$0xf]
        %v2628 = vld [vmem:[%s2592 + $0x8c] sm:$0xf]
        %v2629 = vld [vmem:[%s2592 + $0x90] sm:$0xf]
        %v2630 = vld [vmem:[%s2592 + $0x94] sm:$0xf]
        %v2631 = vld [vmem:[%s2592 + $0x98] sm:$0xf]
        %v2632 = vld [vmem:[%s2592 + $0x9c] sm:$0xf]
        %v2633 = vld [vmem:[%s2592 + $0xa0] sm:$0xf]
        %v2634 = vld [vmem:[%s2592 + $0xa4] sm:$0xf]
        %v2635 = vld [vmem:[%s2592 + $0xa8] sm:$0xf]
        %v2636 = vld [vmem:[%s2592 + $0xac] sm:$0xf]
        %v2637 = vld [vmem:[%s2592 + $0xb0] sm:$0xf]
        %v2638 = vld [vmem:[%s2592 + $0xb4] sm:$0xf]
        %v2639 = vld [vmem:[%s2592 + $0xb8] sm:$0xf]
        %v2640 = vld [vmem:[%s2592 + $0xbc] sm:$0xf]
        %v2641 = vld [vmem:[#allocation2] sm:$0xff]
        %v2642 = vld [vmem:[#allocation2 + $0x1] sm:$0xff]
        %v2643 = vld [vmem:[#allocation2 + $0x2] sm:$0xff]
        %v2644 = vpack.c.bf16 %v2641, %v2641
        %v2645 = vpack.c.bf16 %v2642, %v2642
        %v2646 = vpack.c.bf16 %v2643, %v2643
        %v2695 = vunpack.c.l.b16 %v2593
        %v2696 = vunpack.c.l.b16 %v2594
        %v2697 = vunpack.c.l.b16 %v2595
        %v2698 = vunpack.c.l.b16 %v2596
        %v2699 = vunpack.c.l.b16 %v2597
        %v2700 = vunpack.c.l.b16 %v2598
        %v2701 = vunpack.c.l.b16 %v2599
        %v2702 = vunpack.c.l.b16 %v2600
        %v2703 = vunpack.c.l.b16 %v2601
        %v2704 = vunpack.c.l.b16 %v2602
        %v2705 = vunpack.c.l.b16 %v2603
        %v2706 = vunpack.c.l.b16 %v2604
        %v2707 = vunpack.c.l.b16 %v2605
        %v2708 = vunpack.c.l.b16 %v2606
        %v2709 = vunpack.c.l.b16 %v2607
        %v2710 = vunpack.c.l.b16 %v2608
        %v2711 = vunpack.c.l.b16 %v2609
        %v2712 = vunpack.c.l.b16 %v2610
        %v2713 = vunpack.c.l.b16 %v2611
        %v2714 = vunpack.c.l.b16 %v2612
        %v2715 = vunpack.c.l.b16 %v2613
        %v2716 = vunpack.c.l.b16 %v2614
        %v2717 = vunpack.c.l.b16 %v2615
        %v2718 = vunpack.c.l.b16 %v2616
        %v2719 = vunpack.c.l.b16 %v2617
        %v2720 = vunpack.c.l.b16 %v2618
        %v2721 = vunpack.c.l.b16 %v2619
        %v2722 = vunpack.c.l.b16 %v2620
        %v2723 = vunpack.c.l.b16 %v2621
        %v2724 = vunpack.c.l.b16 %v2622
        %v2725 = vunpack.c.l.b16 %v2623
        %v2726 = vunpack.c.l.b16 %v2624
        %v2727 = vunpack.c.l.b16 %v2625
        %v2728 = vunpack.c.l.b16 %v2626
        %v2729 = vunpack.c.l.b16 %v2627
        %v2730 = vunpack.c.l.b16 %v2628
        %v2731 = vunpack.c.l.b16 %v2629
        %v2732 = vunpack.c.l.b16 %v2630
        %v2733 = vunpack.c.l.b16 %v2631
        %v2734 = vunpack.c.l.b16 %v2632
        %v2735 = vunpack.c.l.b16 %v2633
        %v2736 = vunpack.c.l.b16 %v2634
        %v2737 = vunpack.c.l.b16 %v2635
        %v2738 = vunpack.c.l.b16 %v2636
        %v2739 = vunpack.c.l.b16 %v2637
        %v2740 = vunpack.c.l.b16 %v2638
        %v2741 = vunpack.c.l.b16 %v2639
        %v2742 = vunpack.c.l.b16 %v2640
        %v2743 = vpack.c.b16 %v2696, %v2695
        %v2744 = vpack.c.b16 %v2698, %v2697
        %v2745 = vpack.c.b16 %v2700, %v2699
        %v2746 = vpack.c.b16 %v2702, %v2701
        %v2747 = vpack.c.b16 %v2704, %v2703
        %v2748 = vpack.c.b16 %v2706, %v2705
        %v2749 = vpack.c.b16 %v2708, %v2707
        %v2750 = vpack.c.b16 %v2710, %v2709
        %v2751 = vpack.c.b16 %v2712, %v2711
        %v2752 = vpack.c.b16 %v2714, %v2713
        %v2753 = vpack.c.b16 %v2716, %v2715
        %v2754 = vpack.c.b16 %v2718, %v2717
        %v2755 = vpack.c.b16 %v2720, %v2719
        %v2756 = vpack.c.b16 %v2722, %v2721
        %v2757 = vpack.c.b16 %v2724, %v2723
        %v2758 = vpack.c.b16 %v2726, %v2725
        %v2759 = vpack.c.b16 %v2728, %v2727
        %v2760 = vpack.c.b16 %v2730, %v2729
        %v2761 = vpack.c.b16 %v2732, %v2731
        %v2762 = vpack.c.b16 %v2734, %v2733
        %v2763 = vpack.c.b16 %v2736, %v2735
        %v2764 = vpack.c.b16 %v2738, %v2737
        %v2765 = vpack.c.b16 %v2740, %v2739
        %v2766 = vpack.c.b16 %v2742, %v2741
        %2791 = vmatprep.subr.bf16.mxu0 0
        %2792 = vmatpush1.bf16.msra.mxu0 %v2743
        %2793 = vmatprep.subr.bf16.mxu0 0
        %2794 = vmatpush1.bf16.msra.mxu0 %v2744
        %2795 = vmatprep.subr.bf16.mxu0 0
        %2796 = vmatpush1.bf16.msra.mxu0 %v2745
        %2797 = vmatprep.subr.bf16.mxu0 0
        %2798 = vmatpush1.bf16.msra.mxu0 %v2746
        %2799 = vmatprep.subr.bf16.mxu0 0
        %2800 = vmatpush1.bf16.msra.mxu0 %v2747
        %2801 = vmatprep.subr.bf16.mxu0 0
        %2802 = vmatpush1.bf16.msra.mxu0 %v2748
        %2803 = vmatprep.subr.bf16.mxu0 0
        %2804 = vmatpush1.bf16.msra.mxu0 %v2749
        %2805 = vmatprep.subr.bf16.mxu0 0
        %2806 = vmatpush1.bf16.msra.mxu0 %v2750
        %2807 = vmatprep.subr.bf16.mxu0 0
        %2808 = vmatpush1.bf16.msra.mxu0 %v2751
        %2809 = vmatprep.subr.bf16.mxu0 0
        %2810 = vmatpush1.bf16.msra.mxu0 %v2752
        %2811 = vmatprep.subr.bf16.mxu0 0
        %2812 = vmatpush1.bf16.msra.mxu0 %v2753
        %2813 = vmatprep.subr.bf16.mxu0 0
        %2814 = vmatpush1.bf16.msra.mxu0 %v2754
        %2815 = vmatprep.subr.bf16.mxu0 0
        %2816 = vmatpush1.bf16.msra.mxu0 %v2755
        %2817 = vmatprep.subr.bf16.mxu0 0
        %2818 = vmatpush1.bf16.msra.mxu0 %v2756
        %2819 = vmatprep.subr.bf16.mxu0 0
        %2820 = vmatpush1.bf16.msra.mxu0 %v2757
        %2821 = vmatprep.subr.bf16.mxu0 0
        %2822 = vmatpush1.bf16.msra.mxu0 %v2758
        %2823 = vmatprep.mubr.bf16.mxu0 %v2645
        %2824 = vmatmul.mubr.bf16.gmra.mrb[0].mxu0 %v2644
        %v2825 = vpop.f32.mrb[0].mxu0
        %v2826 = vadd.f32 0.0, %v2825
        %v2827 = vpop.f32.mrb[0].mxu0
        %v2828 = vpop.f32.mrb[0].mxu0
        %v2829 = vpop.f32.mrb[0].mxu0
        %2830 = vdwg.mxu0
        %2831 = vmatprep.subr.bf16.mxu0 0
        %2832 = vmatpush1.bf16.msra.mxu0 %v2759
        %2833 = vmatprep.subr.bf16.mxu0 0
        %2834 = vmatpush1.bf16.msra.mxu0 %v2760
        %2835 = vmatprep.subr.bf16.mxu0 0
        %2836 = vmatpush1.bf16.msra.mxu0 %v2761
        %2837 = vmatprep.subr.bf16.mxu0 0
        %2838 = vmatpush1.bf16.msra.mxu0 %v2762
        %2839 = vmatprep.subr.bf16.mxu0 0
        %2840 = vmatpush1.bf16.msra.mxu0 %v2763
        %2841 = vmatprep.subr.bf16.mxu0 0
        %2842 = vmatpush1.bf16.msra.mxu0 %v2764
        %2843 = vmatprep.subr.bf16.mxu0 0
        %2844 = vmatpush1.bf16.msra.mxu0 %v2765
        %2845 = vmatprep.subr.bf16.mxu0 0
        %2846 = vmatpush1.bf16.msra.mxu0 %v2766
        %2847 = vmatprep.subr.bf16.mxu0 0
        %2848 = vmatpush1.bf16.msra.mxu0 0
        %2849 = vmatprep.subr.bf16.mxu0 0
        %2850 = vmatpush1.bf16.msra.mxu0 0
        %2851 = vmatprep.subr.bf16.mxu0 0
        %2852 = vmatpush1.bf16.msra.mxu0 0
        %2853 = vmatprep.subr.bf16.mxu0 0
        %2854 = vmatpush1.bf16.msra.mxu0 0
        %2855 = vmatprep.subr.bf16.mxu0 0
        %2856 = vmatpush1.bf16.msra.mxu0 0
        %2857 = vmatprep.subr.bf16.mxu0 0
        %2858 = vmatpush1.bf16.msra.mxu0 0
        %2859 = vmatprep.subr.bf16.mxu0 0
        %2860 = vmatpush1.bf16.msra.mxu0 0
        %2861 = vmatprep.subr.bf16.mxu0 0
        %2862 = vmatpush1.bf16.msra.mxu0 0
        %2863 = vmatprep.mubr.bf16.mxu0 0
        %2864 = vmatmul.mubr.bf16.gmra.mrb[0].mxu0 %v2646
        %v2865 = vpop.f32.mrb[0].mxu0
        %v2866 = vadd.f32 %v2826, %v2865
        %v2867 = vpop.f32.mrb[0].mxu0
        %v2868 = vpop.f32.mrb[0].mxu0
        %v2869 = vpop.f32.mrb[0].mxu0
        %2870 = vdwg.mxu0
        %v2871 = vld [vmem:[#allocation18 + $0x2] sm:$0x1]
        %v2872 = vlaneseq
        %v2873 = vshrl.u32 %v2872, 7
        %v2874 = vsub.s32 0, %v2873
        %v2875 = vrot.slane %v2871, %v2874
        %v2876 = vmul.f32 %v2866, %v2875
        %v2877 = vld [vmem:[#allocation19 + $0x2] sm:$0x1]
        %v2878 = vlaneseq
        %v2879 = vshrl.u32 %v2878, 7
        %v2880 = vsub.s32 0, %v2879
        %v2881 = vrot.slane %v2877, %v2880
        %v2882 = vadd.f32 %v2876, %v2881
        %v2883 = vmax.f32 %v2882, 0.0
        %2884 = vst [vmem:[#allocation2 + $0x1] sm:$0xff] %v2883
        %s2885 = scalar_lea.vmem [#allocation16], 576
        %v2886 = vld [vmem:[%s2885] sm:$0xf]
        %v2887 = vld [vmem:[%s2885 + $0x4] sm:$0xf]
        %v2888 = vld [vmem:[%s2885 + $0x8] sm:$0xf]
        %v2889 = vld [vmem:[%s2885 + $0xc] sm:$0xf]
        %v2890 = vld [vmem:[%s2885 + $0x10] sm:$0xf]
        %v2891 = vld [vmem:[%s2885 + $0x14] sm:$0xf]
        %v2892 = vld [vmem:[%s2885 + $0x18] sm:$0xf]
        %v2893 = vld [vmem:[%s2885 + $0x1c] sm:$0xf]
        %v2894 = vld [vmem:[%s2885 + $0x20] sm:$0xf]
        %v2895 = vld [vmem:[%s2885 + $0x24] sm:$0xf]
        %v2896 = vld [vmem:[%s2885 + $0x28] sm:$0xf]
        %v2897 = vld [vmem:[%s2885 + $0x2c] sm:$0xf]
        %v2898 = vld [vmem:[%s2885 + $0x30] sm:$0xf]
        %v2899 = vld [vmem:[%s2885 + $0x34] sm:$0xf]
        %v2900 = vld [vmem:[%s2885 + $0x38] sm:$0xf]
        %v2901 = vld [vmem:[%s2885 + $0x3c] sm:$0xf]
        %v2902 = vld [vmem:[%s2885 + $0x40] sm:$0xf]
        %v2903 = vld [vmem:[%s2885 + $0x44] sm:$0xf]
        %v2904 = vld [vmem:[%s2885 + $0x48] sm:$0xf]
        %v2905 = vld [vmem:[%s2885 + $0x4c] sm:$0xf]
        %v2906 = vld [vmem:[%s2885 + $0x50] sm:$0xf]
        %v2907 = vld [vmem:[%s2885 + $0x54] sm:$0xf]
        %v2908 = vld [vmem:[%s2885 + $0x58] sm:$0xf]
        %v2909 = vld [vmem:[%s2885 + $0x5c] sm:$0xf]
        %v2910 = vld [vmem:[%s2885 + $0x60] sm:$0xf]
        %v2911 = vld [vmem:[%s2885 + $0x64] sm:$0xf]
        %v2912 = vld [vmem:[%s2885 + $0x68] sm:$0xf]
        %v2913 = vld [vmem:[%s2885 + $0x6c] sm:$0xf]
        %v2914 = vld [vmem:[%s2885 + $0x70] sm:$0xf]
        %v2915 = vld [vmem:[%s2885 + $0x74] sm:$0xf]
        %v2916 = vld [vmem:[%s2885 + $0x78] sm:$0xf]
        %v2917 = vld [vmem:[%s2885 + $0x7c] sm:$0xf]
        %v2918 = vld [vmem:[%s2885 + $0x80] sm:$0xf]
        %v2919 = vld [vmem:[%s2885 + $0x84] sm:$0xf]
        %v2920 = vld [vmem:[%s2885 + $0x88] sm:$0xf]
        %v2921 = vld [vmem:[%s2885 + $0x8c] sm:$0xf]
        %v2922 = vld [vmem:[%s2885 + $0x90] sm:$0xf]
        %v2923 = vld [vmem:[%s2885 + $0x94] sm:$0xf]
        %v2924 = vld [vmem:[%s2885 + $0x98] sm:$0xf]
        %v2925 = vld [vmem:[%s2885 + $0x9c] sm:$0xf]
        %v2926 = vld [vmem:[%s2885 + $0xa0] sm:$0xf]
        %v2927 = vld [vmem:[%s2885 + $0xa4] sm:$0xf]
        %v2928 = vld [vmem:[%s2885 + $0xa8] sm:$0xf]
        %v2929 = vld [vmem:[%s2885 + $0xac] sm:$0xf]
        %v2930 = vld [vmem:[%s2885 + $0xb0] sm:$0xf]
        %v2931 = vld [vmem:[%s2885 + $0xb4] sm:$0xf]
        %v2932 = vld [vmem:[%s2885 + $0xb8] sm:$0xf]
        %v2933 = vld [vmem:[%s2885 + $0xbc] sm:$0xf]
        %v2934 = vld [vmem:[#allocation2] sm:$0xff]
        %v2935 = vld [vmem:[#allocation2 + $0x1] sm:$0xff]
        %v2936 = vld [vmem:[#allocation2 + $0x2] sm:$0xff]
        %v2937 = vpack.c.bf16 %v2934, %v2934
        %v2938 = vpack.c.bf16 %v2935, %v2935
        %v2939 = vpack.c.bf16 %v2936, %v2936
        %v2988 = vunpack.c.l.b16 %v2886
        %v2989 = vunpack.c.l.b16 %v2887
        %v2990 = vunpack.c.l.b16 %v2888
        %v2991 = vunpack.c.l.b16 %v2889
        %v2992 = vunpack.c.l.b16 %v2890
        %v2993 = vunpack.c.l.b16 %v2891
        %v2994 = vunpack.c.l.b16 %v2892
        %v2995 = vunpack.c.l.b16 %v2893
        %v2996 = vunpack.c.l.b16 %v2894
        %v2997 = vunpack.c.l.b16 %v2895
        %v2998 = vunpack.c.l.b16 %v2896
        %v2999 = vunpack.c.l.b16 %v2897
        %v3000 = vunpack.c.l.b16 %v2898
        %v3001 = vunpack.c.l.b16 %v2899
        %v3002 = vunpack.c.l.b16 %v2900
        %v3003 = vunpack.c.l.b16 %v2901
        %v3004 = vunpack.c.l.b16 %v2902
        %v3005 = vunpack.c.l.b16 %v2903
        %v3006 = vunpack.c.l.b16 %v2904
        %v3007 = vunpack.c.l.b16 %v2905
        %v3008 = vunpack.c.l.b16 %v2906
        %v3009 = vunpack.c.l.b16 %v2907
        %v3010 = vunpack.c.l.b16 %v2908
        %v3011 = vunpack.c.l.b16 %v2909
        %v3012 = vunpack.c.l.b16 %v2910
        %v3013 = vunpack.c.l.b16 %v2911
        %v3014 = vunpack.c.l.b16 %v2912
        %v3015 = vunpack.c.l.b16 %v2913
        %v3016 = vunpack.c.l.b16 %v2914
        %v3017 = vunpack.c.l.b16 %v2915
        %v3018 = vunpack.c.l.b16 %v2916
        %v3019 = vunpack.c.l.b16 %v2917
        %v3020 = vunpack.c.l.b16 %v2918
        %v3021 = vunpack.c.l.b16 %v2919
        %v3022 = vunpack.c.l.b16 %v2920
        %v3023 = vunpack.c.l.b16 %v2921
        %v3024 = vunpack.c.l.b16 %v2922
        %v3025 = vunpack.c.l.b16 %v2923
        %v3026 = vunpack.c.l.b16 %v2924
        %v3027 = vunpack.c.l.b16 %v2925
        %v3028 = vunpack.c.l.b16 %v2926
        %v3029 = vunpack.c.l.b16 %v2927
        %v3030 = vunpack.c.l.b16 %v2928
        %v3031 = vunpack.c.l.b16 %v2929
        %v3032 = vunpack.c.l.b16 %v2930
        %v3033 = vunpack.c.l.b16 %v2931
        %v3034 = vunpack.c.l.b16 %v2932
        %v3035 = vunpack.c.l.b16 %v2933
        %v3036 = vpack.c.b16 %v2989, %v2988
        %v3037 = vpack.c.b16 %v2991, %v2990
        %v3038 = vpack.c.b16 %v2993, %v2992
        %v3039 = vpack.c.b16 %v2995, %v2994
        %v3040 = vpack.c.b16 %v2997, %v2996
        %v3041 = vpack.c.b16 %v2999, %v2998
        %v3042 = vpack.c.b16 %v3001, %v3000
        %v3043 = vpack.c.b16 %v3003, %v3002
        %v3044 = vpack.c.b16 %v3005, %v3004
        %v3045 = vpack.c.b16 %v3007, %v3006
        %v3046 = vpack.c.b16 %v3009, %v3008
        %v3047 = vpack.c.b16 %v3011, %v3010
        %v3048 = vpack.c.b16 %v3013, %v3012
        %v3049 = vpack.c.b16 %v3015, %v3014
        %v3050 = vpack.c.b16 %v3017, %v3016
        %v3051 = vpack.c.b16 %v3019, %v3018
        %v3052 = vpack.c.b16 %v3021, %v3020
        %v3053 = vpack.c.b16 %v3023, %v3022
        %v3054 = vpack.c.b16 %v3025, %v3024
        %v3055 = vpack.c.b16 %v3027, %v3026
        %v3056 = vpack.c.b16 %v3029, %v3028
        %v3057 = vpack.c.b16 %v3031, %v3030
        %v3058 = vpack.c.b16 %v3033, %v3032
        %v3059 = vpack.c.b16 %v3035, %v3034
        %3084 = vmatprep.subr.bf16.mxu0 0
        %3085 = vmatpush1.bf16.msra.mxu0 %v3036
        %3086 = vmatprep.subr.bf16.mxu0 0
        %3087 = vmatpush1.bf16.msra.mxu0 %v3037
        %3088 = vmatprep.subr.bf16.mxu0 0
        %3089 = vmatpush1.bf16.msra.mxu0 %v3038
        %3090 = vmatprep.subr.bf16.mxu0 0
        %3091 = vmatpush1.bf16.msra.mxu0 %v3039
        %3092 = vmatprep.subr.bf16.mxu0 0
        %3093 = vmatpush1.bf16.msra.mxu0 %v3040
        %3094 = vmatprep.subr.bf16.mxu0 0
        %3095 = vmatpush1.bf16.msra.mxu0 %v3041
        %3096 = vmatprep.subr.bf16.mxu0 0
        %3097 = vmatpush1.bf16.msra.mxu0 %v3042
        %3098 = vmatprep.subr.bf16.mxu0 0
        %3099 = vmatpush1.bf16.msra.mxu0 %v3043
        %3100 = vmatprep.subr.bf16.mxu0 0
        %3101 = vmatpush1.bf16.msra.mxu0 %v3044
        %3102 = vmatprep.subr.bf16.mxu0 0
        %3103 = vmatpush1.bf16.msra.mxu0 %v3045
        %3104 = vmatprep.subr.bf16.mxu0 0
        %3105 = vmatpush1.bf16.msra.mxu0 %v3046
        %3106 = vmatprep.subr.bf16.mxu0 0
        %3107 = vmatpush1.bf16.msra.mxu0 %v3047
        %3108 = vmatprep.subr.bf16.mxu0 0
        %3109 = vmatpush1.bf16.msra.mxu0 %v3048
        %3110 = vmatprep.subr.bf16.mxu0 0
        %3111 = vmatpush1.bf16.msra.mxu0 %v3049
        %3112 = vmatprep.subr.bf16.mxu0 0
        %3113 = vmatpush1.bf16.msra.mxu0 %v3050
        %3114 = vmatprep.subr.bf16.mxu0 0
        %3115 = vmatpush1.bf16.msra.mxu0 %v3051
        %3116 = vmatprep.mubr.bf16.mxu0 %v2938
        %3117 = vmatmul.mubr.bf16.gmra.mrb[0].mxu0 %v2937
        %v3118 = vpop.f32.mrb[0].mxu0
        %v3119 = vadd.f32 0.0, %v3118
        %v3120 = vpop.f32.mrb[0].mxu0
        %v3121 = vpop.f32.mrb[0].mxu0
        %v3122 = vpop.f32.mrb[0].mxu0
        %3123 = vdwg.mxu0
        %3124 = vmatprep.subr.bf16.mxu0 0
        %3125 = vmatpush1.bf16.msra.mxu0 %v3052
        %3126 = vmatprep.subr.bf16.mxu0 0
        %3127 = vmatpush1.bf16.msra.mxu0 %v3053
        %3128 = vmatprep.subr.bf16.mxu0 0
        %3129 = vmatpush1.bf16.msra.mxu0 %v3054
        %3130 = vmatprep.subr.bf16.mxu0 0
        %3131 = vmatpush1.bf16.msra.mxu0 %v3055
        %3132 = vmatprep.subr.bf16.mxu0 0
        %3133 = vmatpush1.bf16.msra.mxu0 %v3056
        %3134 = vmatprep.subr.bf16.mxu0 0
        %3135 = vmatpush1.bf16.msra.mxu0 %v3057
        %3136 = vmatprep.subr.bf16.mxu0 0
        %3137 = vmatpush1.bf16.msra.mxu0 %v3058
        %3138 = vmatprep.subr.bf16.mxu0 0
        %3139 = vmatpush1.bf16.msra.mxu0 %v3059
        %3140 = vmatprep.subr.bf16.mxu0 0
        %3141 = vmatpush1.bf16.msra.mxu0 0
        %3142 = vmatprep.subr.bf16.mxu0 0
        %3143 = vmatpush1.bf16.msra.mxu0 0
        %3144 = vmatprep.subr.bf16.mxu0 0
        %3145 = vmatpush1.bf16.msra.mxu0 0
        %3146 = vmatprep.subr.bf16.mxu0 0
        %3147 = vmatpush1.bf16.msra.mxu0 0
        %3148 = vmatprep.subr.bf16.mxu0 0
        %3149 = vmatpush1.bf16.msra.mxu0 0
        %3150 = vmatprep.subr.bf16.mxu0 0
        %3151 = vmatpush1.bf16.msra.mxu0 0
        %3152 = vmatprep.subr.bf16.mxu0 0
        %3153 = vmatpush1.bf16.msra.mxu0 0
        %3154 = vmatprep.subr.bf16.mxu0 0
        %3155 = vmatpush1.bf16.msra.mxu0 0
        %3156 = vmatprep.mubr.bf16.mxu0 0
        %3157 = vmatmul.mubr.bf16.gmra.mrb[0].mxu0 %v2939
        %v3158 = vpop.f32.mrb[0].mxu0
        %v3159 = vadd.f32 %v3119, %v3158
        %v3160 = vpop.f32.mrb[0].mxu0
        %v3161 = vpop.f32.mrb[0].mxu0
        %v3162 = vpop.f32.mrb[0].mxu0
        %3163 = vdwg.mxu0
        %v3164 = vld [vmem:[#allocation18 + $0x3] sm:$0x1]
        %v3165 = vlaneseq
        %v3166 = vshrl.u32 %v3165, 7
        %v3167 = vsub.s32 0, %v3166
        %v3168 = vrot.slane %v3164, %v3167
        %v3169 = vmul.f32 %v3159, %v3168
        %v3170 = vld [vmem:[#allocation19 + $0x3] sm:$0x1]
        %v3171 = vlaneseq
        %v3172 = vshrl.u32 %v3171, 7
        %v3173 = vsub.s32 0, %v3172
        %v3174 = vrot.slane %v3170, %v3173
        %v3175 = vadd.f32 %v3169, %v3174
        %v3176 = vadd.f32 %v3175, %v2590
        %v3177 = vmax.f32 %v3176, 0.0
        %3178 = vst [vmem:[#allocation2 + $0x1] sm:$0xff] %v3177
        %s3179 = scalar_lea.vmem [#allocation16], 768
        %v3180 = vld [vmem:[%s3179] sm:$0xf]
        %v3181 = vld [vmem:[%s3179 + $0x4] sm:$0xf]
        %v3182 = vld [vmem:[%s3179 + $0x8] sm:$0xf]
        %v3183 = vld [vmem:[%s3179 + $0xc] sm:$0xf]
        %v3184 = vld [vmem:[%s3179 + $0x10] sm:$0xf]
        %v3185 = vld [vmem:[%s3179 + $0x14] sm:$0xf]
        %v3186 = vld [vmem:[%s3179 + $0x18] sm:$0xf]
        %v3187 = vld [vmem:[%s3179 + $0x1c] sm:$0xf]
        %v3188 = vld [vmem:[%s3179 + $0x20] sm:$0xf]
        %v3189 = vld [vmem:[%s3179 + $0x24] sm:$0xf]
        %v3190 = vld [vmem:[%s3179 + $0x28] sm:$0xf]
        %v3191 = vld [vmem:[%s3179 + $0x2c] sm:$0xf]
        %v3192 = vld [vmem:[%s3179 + $0x30] sm:$0xf]
        %v3193 = vld [vmem:[%s3179 + $0x34] sm:$0xf]
        %v3194 = vld [vmem:[%s3179 + $0x38] sm:$0xf]
        %v3195 = vld [vmem:[%s3179 + $0x3c] sm:$0xf]
        %v3196 = vld [vmem:[%s3179 + $0x40] sm:$0xf]
        %v3197 = vld [vmem:[%s3179 + $0x44] sm:$0xf]
        %v3198 = vld [vmem:[%s3179 + $0x48] sm:$0xf]
        %v3199 = vld [vmem:[%s3179 + $0x4c] sm:$0xf]
        %v3200 = vld [vmem:[%s3179 + $0x50] sm:$0xf]
        %v3201 = vld [vmem:[%s3179 + $0x54] sm:$0xf]
        %v3202 = vld [vmem:[%s3179 + $0x58] sm:$0xf]
        %v3203 = vld [vmem:[%s3179 + $0x5c] sm:$0xf]
        %v3204 = vld [vmem:[%s3179 + $0x60] sm:$0xf]
        %v3205 = vld [vmem:[%s3179 + $0x64] sm:$0xf]
        %v3206 = vld [vmem:[%s3179 + $0x68] sm:$0xf]
        %v3207 = vld [vmem:[%s3179 + $0x6c] sm:$0xf]
        %v3208 = vld [vmem:[%s3179 + $0x70] sm:$0xf]
        %v3209 = vld [vmem:[%s3179 + $0x74] sm:$0xf]
        %v3210 = vld [vmem:[%s3179 + $0x78] sm:$0xf]
        %v3211 = vld [vmem:[%s3179 + $0x7c] sm:$0xf]
        %v3212 = vld [vmem:[%s3179 + $0x80] sm:$0xf]
        %v3213 = vld [vmem:[%s3179 + $0x84] sm:$0xf]
        %v3214 = vld [vmem:[%s3179 + $0x88] sm:$0xf]
        %v3215 = vld [vmem:[%s3179 + $0x8c] sm:$0xf]
        %v3216 = vld [vmem:[%s3179 + $0x90] sm:$0xf]
        %v3217 = vld [vmem:[%s3179 + $0x94] sm:$0xf]
        %v3218 = vld [vmem:[%s3179 + $0x98] sm:$0xf]
        %v3219 = vld [vmem:[%s3179 + $0x9c] sm:$0xf]
        %v3220 = vld [vmem:[%s3179 + $0xa0] sm:$0xf]
        %v3221 = vld [vmem:[%s3179 + $0xa4] sm:$0xf]
        %v3222 = vld [vmem:[%s3179 + $0xa8] sm:$0xf]
        %v3223 = vld [vmem:[%s3179 + $0xac] sm:$0xf]
        %v3224 = vld [vmem:[%s3179 + $0xb0] sm:$0xf]
        %v3225 = vld [vmem:[%s3179 + $0xb4] sm:$0xf]
        %v3226 = vld [vmem:[%s3179 + $0xb8] sm:$0xf]
        %v3227 = vld [vmem:[%s3179 + $0xbc] sm:$0xf]
        %v3228 = vld [vmem:[#allocation2] sm:$0xff]
        %v3229 = vld [vmem:[#allocation2 + $0x1] sm:$0xff]
        %v3230 = vld [vmem:[#allocation2 + $0x2] sm:$0xff]
        %v3231 = vpack.c.bf16 %v3228, %v3228
        %v3232 = vpack.c.bf16 %v3229, %v3229
        %v3233 = vpack.c.bf16 %v3230, %v3230
        %v3282 = vunpack.c.l.b16 %v3180
        %v3283 = vunpack.c.l.b16 %v3181
        %v3284 = vunpack.c.l.b16 %v3182
        %v3285 = vunpack.c.l.b16 %v3183
        %v3286 = vunpack.c.l.b16 %v3184
        %v3287 = vunpack.c.l.b16 %v3185
        %v3288 = vunpack.c.l.b16 %v3186
        %v3289 = vunpack.c.l.b16 %v3187
        %v3290 = vunpack.c.l.b16 %v3188
        %v3291 = vunpack.c.l.b16 %v3189
        %v3292 = vunpack.c.l.b16 %v3190
        %v3293 = vunpack.c.l.b16 %v3191
        %v3294 = vunpack.c.l.b16 %v3192
        %v3295 = vunpack.c.l.b16 %v3193
        %v3296 = vunpack.c.l.b16 %v3194
        %v3297 = vunpack.c.l.b16 %v3195
        %v3298 = vunpack.c.l.b16 %v3196
        %v3299 = vunpack.c.l.b16 %v3197
        %v3300 = vunpack.c.l.b16 %v3198
        %v3301 = vunpack.c.l.b16 %v3199
        %v3302 = vunpack.c.l.b16 %v3200
        %v3303 = vunpack.c.l.b16 %v3201
        %v3304 = vunpack.c.l.b16 %v3202
        %v3305 = vunpack.c.l.b16 %v3203
        %v3306 = vunpack.c.l.b16 %v3204
        %v3307 = vunpack.c.l.b16 %v3205
        %v3308 = vunpack.c.l.b16 %v3206
        %v3309 = vunpack.c.l.b16 %v3207
        %v3310 = vunpack.c.l.b16 %v3208
        %v3311 = vunpack.c.l.b16 %v3209
        %v3312 = vunpack.c.l.b16 %v3210
        %v3313 = vunpack.c.l.b16 %v3211
        %v3314 = vunpack.c.l.b16 %v3212
        %v3315 = vunpack.c.l.b16 %v3213
        %v3316 = vunpack.c.l.b16 %v3214
        %v3317 = vunpack.c.l.b16 %v3215
        %v3318 = vunpack.c.l.b16 %v3216
        %v3319 = vunpack.c.l.b16 %v3217
        %v3320 = vunpack.c.l.b16 %v3218
        %v3321 = vunpack.c.l.b16 %v3219
        %v3322 = vunpack.c.l.b16 %v3220
        %v3323 = vunpack.c.l.b16 %v3221
        %v3324 = vunpack.c.l.b16 %v3222
        %v3325 = vunpack.c.l.b16 %v3223
        %v3326 = vunpack.c.l.b16 %v3224
        %v3327 = vunpack.c.l.b16 %v3225
        %v3328 = vunpack.c.l.b16 %v3226
        %v3329 = vunpack.c.l.b16 %v3227
        %v3330 = vpack.c.b16 %v3283, %v3282
        %v3331 = vpack.c.b16 %v3285, %v3284
        %v3332 = vpack.c.b16 %v3287, %v3286
        %v3333 = vpack.c.b16 %v3289, %v3288
        %v3334 = vpack.c.b16 %v3291, %v3290
        %v3335 = vpack.c.b16 %v3293, %v3292
        %v3336 = vpack.c.b16 %v3295, %v3294
        %v3337 = vpack.c.b16 %v3297, %v3296
        %v3338 = vpack.c.b16 %v3299, %v3298
        %v3339 = vpack.c.b16 %v3301, %v3300
        %v3340 = vpack.c.b16 %v3303, %v3302
        %v3341 = vpack.c.b16 %v3305, %v3304
        %v3342 = vpack.c.b16 %v3307, %v3306
        %v3343 = vpack.c.b16 %v3309, %v3308
        %v3344 = vpack.c.b16 %v3311, %v3310
        %v3345 = vpack.c.b16 %v3313, %v3312
        %v3346 = vpack.c.b16 %v3315, %v3314
        %v3347 = vpack.c.b16 %v3317, %v3316
        %v3348 = vpack.c.b16 %v3319, %v3318
        %v3349 = vpack.c.b16 %v3321, %v3320
        %v3350 = vpack.c.b16 %v3323, %v3322
        %v3351 = vpack.c.b16 %v3325, %v3324
        %v3352 = vpack.c.b16 %v3327, %v3326
        %v3353 = vpack.c.b16 %v3329, %v3328
        %3378 = vmatprep.subr.bf16.mxu0 0
        %3379 = vmatpush1.bf16.msra.mxu0 %v3330
        %3380 = vmatprep.subr.bf16.mxu0 0
        %3381 = vmatpush1.bf16.msra.mxu0 %v3331
        %3382 = vmatprep.subr.bf16.mxu0 0
        %3383 = vmatpush1.bf16.msra.mxu0 %v3332
        %3384 = vmatprep.subr.bf16.mxu0 0
        %3385 = vmatpush1.bf16.msra.mxu0 %v3333
        %3386 = vmatprep.subr.bf16.mxu0 0
        %3387 = vmatpush1.bf16.msra.mxu0 %v3334
        %3388 = vmatprep.subr.bf16.mxu0 0
        %3389 = vmatpush1.bf16.msra.mxu0 %v3335
        %3390 = vmatprep.subr.bf16.mxu0 0
        %3391 = vmatpush1.bf16.msra.mxu0 %v3336
        %3392 = vmatprep.subr.bf16.mxu0 0
        %3393 = vmatpush1.bf16.msra.mxu0 %v3337
        %3394 = vmatprep.subr.bf16.mxu0 0
        %3395 = vmatpush1.bf16.msra.mxu0 %v3338
        %3396 = vmatprep.subr.bf16.mxu0 0
        %3397 = vmatpush1.bf16.msra.mxu0 %v3339
        %3398 = vmatprep.subr.bf16.mxu0 0
        %3399 = vmatpush1.bf16.msra.mxu0 %v3340
        %3400 = vmatprep.subr.bf16.mxu0 0
        %3401 = vmatpush1.bf16.msra.mxu0 %v3341
        %3402 = vmatprep.subr.bf16.mxu0 0
        %3403 = vmatpush1.bf16.msra.mxu0 %v3342
        %3404 = vmatprep.subr.bf16.mxu0 0
        %3405 = vmatpush1.bf16.msra.mxu0 %v3343
        %3406 = vmatprep.subr.bf16.mxu0 0
        %3407 = vmatpush1.bf16.msra.mxu0 %v3344
        %3408 = vmatprep.subr.bf16.mxu0 0
        %3409 = vmatpush1.bf16.msra.mxu0 %v3345
        %3410 = vmatprep.mubr.bf16.mxu0 %v3232
        %3411 = vmatmul.mubr.bf16.gmra.mrb[0].mxu0 %v3231
        %v3412 = vpop.f32.mrb[0].mxu0
        %v3413 = vadd.f32 0.0, %v3412
        %v3414 = vpop.f32.mrb[0].mxu0
        %v3415 = vpop.f32.mrb[0].mxu0
        %v3416 = vpop.f32.mrb[0].mxu0
        %3417 = vdwg.mxu0
        %3418 = vmatprep.subr.bf16.mxu0 0
        %3419 = vmatpush1.bf16.msra.mxu0 %v3346
        %3420 = vmatprep.subr.bf16.mxu0 0
        %3421 = vmatpush1.bf16.msra.mxu0 %v3347
        %3422 = vmatprep.subr.bf16.mxu0 0
        %3423 = vmatpush1.bf16.msra.mxu0 %v3348
        %3424 = vmatprep.subr.bf16.mxu0 0
        %3425 = vmatpush1.bf16.msra.mxu0 %v3349
        %3426 = vmatprep.subr.bf16.mxu0 0
        %3427 = vmatpush1.bf16.msra.mxu0 %v3350
        %3428 = vmatprep.subr.bf16.mxu0 0
        %3429 = vmatpush1.bf16.msra.mxu0 %v3351
        %3430 = vmatprep.subr.bf16.mxu0 0
        %3431 = vmatpush1.bf16.msra.mxu0 %v3352
        %3432 = vmatprep.subr.bf16.mxu0 0
        %3433 = vmatpush1.bf16.msra.mxu0 %v3353
        %3434 = vmatprep.subr.bf16.mxu0 0
        %3435 = vmatpush1.bf16.msra.mxu0 0
        %3436 = vmatprep.subr.bf16.mxu0 0
        %3437 = vmatpush1.bf16.msra.mxu0 0
        %3438 = vmatprep.subr.bf16.mxu0 0
        %3439 = vmatpush1.bf16.msra.mxu0 0
        %3440 = vmatprep.subr.bf16.mxu0 0
        %3441 = vmatpush1.bf16.msra.mxu0 0
        %3442 = vmatprep.subr.bf16.mxu0 0
        %3443 = vmatpush1.bf16.msra.mxu0 0
        %3444 = vmatprep.subr.bf16.mxu0 0
        %3445 = vmatpush1.bf16.msra.mxu0 0
        %3446 = vmatprep.subr.bf16.mxu0 0
        %3447 = vmatpush1.bf16.msra.mxu0 0
        %3448 = vmatprep.subr.bf16.mxu0 0
        %3449 = vmatpush1.bf16.msra.mxu0 0
        %3450 = vmatprep.mubr.bf16.mxu0 0
        %3451 = vmatmul.mubr.bf16.gmra.mrb[0].mxu0 %v3233
        %v3452 = vpop.f32.mrb[0].mxu0
        %v3453 = vadd.f32 %v3413, %v3452
        %v3454 = vpop.f32.mrb[0].mxu0
        %v3455 = vpop.f32.mrb[0].mxu0
        %v3456 = vpop.f32.mrb[0].mxu0
        %3457 = vdwg.mxu0
        %v3506 = vunpack.c.l.b16 %v1845
        %v3507 = vunpack.c.l.b16 %v1846
        %v3508 = vunpack.c.l.b16 %v1847
        %v3509 = vunpack.c.l.b16 %v1848
        %v3510 = vunpack.c.l.b16 %v1849
        %v3511 = vunpack.c.l.b16 %v1850
        %v3512 = vunpack.c.l.b16 %v1851
        %v3513 = vunpack.c.l.b16 %v1852
        %v3514 = vunpack.c.l.b16 %v1853
        %v3515 = vunpack.c.l.b16 %v1854
        %v3516 = vunpack.c.l.b16 %v1855
        %v3517 = vunpack.c.l.b16 %v1856
        %v3518 = vunpack.c.l.b16 %v1857
        %v3519 = vunpack.c.l.b16 %v1858
        %v3520 = vunpack.c.l.b16 %v1859
        %v3521 = vunpack.c.l.b16 %v1860
        %v3522 = vunpack.c.l.b16 %v1861
        %v3523 = vunpack.c.l.b16 %v1862
        %v3524 = vunpack.c.l.b16 %v1863
        %v3525 = vunpack.c.l.b16 %v1864
        %v3526 = vunpack.c.l.b16 %v1865
        %v3527 = vunpack.c.l.b16 %v1866
        %v3528 = vunpack.c.l.b16 %v1867
        %v3529 = vunpack.c.l.b16 %v1868
        %v3530 = vunpack.c.l.b16 %v1869
        %v3531 = vunpack.c.l.b16 %v1870
        %v3532 = vunpack.c.l.b16 %v1871
        %v3533 = vunpack.c.l.b16 %v1872
        %v3534 = vunpack.c.l.b16 %v1873
        %v3535 = vunpack.c.l.b16 %v1874
        %v3536 = vunpack.c.l.b16 %v1875
        %v3537 = vunpack.c.l.b16 %v1876
        %v3538 = vunpack.c.l.b16 %v1877
        %v3539 = vunpack.c.l.b16 %v1878
        %v3540 = vunpack.c.l.b16 %v1879
        %v3541 = vunpack.c.l.b16 %v1880
        %v3542 = vunpack.c.l.b16 %v1881
        %v3543 = vunpack.c.l.b16 %v1882
        %v3544 = vunpack.c.l.b16 %v1883
        %v3545 = vunpack.c.l.b16 %v1884
        %v3546 = vunpack.c.l.b16 %v1885
        %v3547 = vunpack.c.l.b16 %v1886
        %v3548 = vunpack.c.l.b16 %v1887
        %v3549 = vunpack.c.l.b16 %v1888
        %v3550 = vunpack.c.l.b16 %v1889
        %v3551 = vunpack.c.l.b16 %v1890
        %v3552 = vunpack.c.l.b16 %v1891
        %v3553 = vunpack.c.l.b16 %v1892
        %v3554 = vpack.c.b16 %v3507, %v3506
        %v3555 = vpack.c.b16 %v3509, %v3508
        %v3556 = vpack.c.b16 %v3511, %v3510
        %v3557 = vpack.c.b16 %v3513, %v3512
        %v3558 = vpack.c.b16 %v3515, %v3514
        %v3559 = vpack.c.b16 %v3517, %v3516
        %v3560 = vpack.c.b16 %v3519, %v3518
        %v3561 = vpack.c.b16 %v3521, %v3520
        %v3562 = vpack.c.b16 %v3523, %v3522
        %v3563 = vpack.c.b16 %v3525, %v3524
        %v3564 = vpack.c.b16 %v3527, %v3526
        %v3565 = vpack.c.b16 %v3529, %v3528
        %v3566 = vpack.c.b16 %v3531, %v3530
        %v3567 = vpack.c.b16 %v3533, %v3532
        %v3568 = vpack.c.b16 %v3535, %v3534
        %v3569 = vpack.c.b16 %v3537, %v3536
        %v3570 = vpack.c.b16 %v3539, %v3538
        %v3571 = vpack.c.b16 %v3541, %v3540
        %v3572 = vpack.c.b16 %v3543, %v3542
        %v3573 = vpack.c.b16 %v3545, %v3544
        %v3574 = vpack.c.b16 %v3547, %v3546
        %v3575 = vpack.c.b16 %v3549, %v3548
        %v3576 = vpack.c.b16 %v3551, %v3550
        %v3577 = vpack.c.b16 %v3553, %v3552
        %3602 = vmatprep.subr.bf16.mxu0 0
        %3603 = vmatpush1.bf16.msra.mxu0 %v3554
        %3604 = vmatprep.subr.bf16.mxu0 0
        %3605 = vmatpush1.bf16.msra.mxu0 %v3555
        %3606 = vmatprep.subr.bf16.mxu0 0
        %3607 = vmatpush1.bf16.msra.mxu0 %v3556
        %3608 = vmatprep.subr.bf16.mxu0 0
        %3609 = vmatpush1.bf16.msra.mxu0 %v3557
        %3610 = vmatprep.subr.bf16.mxu0 0
        %3611 = vmatpush1.bf16.msra.mxu0 %v3558
        %3612 = vmatprep.subr.bf16.mxu0 0
        %3613 = vmatpush1.bf16.msra.mxu0 %v3559
        %3614 = vmatprep.subr.bf16.mxu0 0
        %3615 = vmatpush1.bf16.msra.mxu0 %v3560
        %3616 = vmatprep.subr.bf16.mxu0 0
        %3617 = vmatpush1.bf16.msra.mxu0 %v3561
        %3618 = vmatprep.subr.bf16.mxu0 0
        %3619 = vmatpush1.bf16.msra.mxu0 %v3562
        %3620 = vmatprep.subr.bf16.mxu0 0
        %3621 = vmatpush1.bf16.msra.mxu0 %v3563
        %3622 = vmatprep.subr.bf16.mxu0 0
        %3623 = vmatpush1.bf16.msra.mxu0 %v3564
        %3624 = vmatprep.subr.bf16.mxu0 0
        %3625 = vmatpush1.bf16.msra.mxu0 %v3565
        %3626 = vmatprep.subr.bf16.mxu0 0
        %3627 = vmatpush1.bf16.msra.mxu0 %v3566
        %3628 = vmatprep.subr.bf16.mxu0 0
        %3629 = vmatpush1.bf16.msra.mxu0 %v3567
        %3630 = vmatprep.subr.bf16.mxu0 0
        %3631 = vmatpush1.bf16.msra.mxu0 %v3568
        %3632 = vmatprep.subr.bf16.mxu0 0
        %3633 = vmatpush1.bf16.msra.mxu0 %v3569
        %3634 = vmatprep.mubr.bf16.mxu0 %v1897
        %3635 = vmatmul.mubr.bf16.gmra.mrb[0].mxu0 %v1896
        %v3636 = vpop.f32.mrb[0].mxu0
        %v3637 = vadd.f32 %v3453, %v3636
        %v3638 = vpop.f32.mrb[0].mxu0
        %v3639 = vpop.f32.mrb[0].mxu0
        %v3640 = vpop.f32.mrb[0].mxu0
        %3641 = vdwg.mxu0
        %3642 = vmatprep.subr.bf16.mxu0 0
        %3643 = vmatpush1.bf16.msra.mxu0 %v3570
        %3644 = vmatprep.subr.bf16.mxu0 0
        %3645 = vmatpush1.bf16.msra.mxu0 %v3571
        %3646 = vmatprep.subr.bf16.mxu0 0
        %3647 = vmatpush1.bf16.msra.mxu0 %v3572
        %3648 = vmatprep.subr.bf16.mxu0 0
        %3649 = vmatpush1.bf16.msra.mxu0 %v3573
        %3650 = vmatprep.subr.bf16.mxu0 0
        %3651 = vmatpush1.bf16.msra.mxu0 %v3574
        %3652 = vmatprep.subr.bf16.mxu0 0
        %3653 = vmatpush1.bf16.msra.mxu0 %v3575
        %3654 = vmatprep.subr.bf16.mxu0 0
        %3655 = vmatpush1.bf16.msra.mxu0 %v3576
        %3656 = vmatprep.subr.bf16.mxu0 0
        %3657 = vmatpush1.bf16.msra.mxu0 %v3577
        %3658 = vmatprep.subr.bf16.mxu0 0
        %3659 = vmatpush1.bf16.msra.mxu0 0
        %3660 = vmatprep.subr.bf16.mxu0 0
        %3661 = vmatpush1.bf16.msra.mxu0 0
        %3662 = vmatprep.subr.bf16.mxu0 0
        %3663 = vmatpush1.bf16.msra.mxu0 0
        %3664 = vmatprep.subr.bf16.mxu0 0
        %3665 = vmatpush1.bf16.msra.mxu0 0
        %3666 = vmatprep.subr.bf16.mxu0 0
        %3667 = vmatpush1.bf16.msra.mxu0 0
        %3668 = vmatprep.subr.bf16.mxu0 0
        %3669 = vmatpush1.bf16.msra.mxu0 0
        %3670 = vmatprep.subr.bf16.mxu0 0
        %3671 = vmatpush1.bf16.msra.mxu0 0
        %3672 = vmatprep.subr.bf16.mxu0 0
        %3673 = vmatpush1.bf16.msra.mxu0 0
        %3674 = vmatprep.mubr.bf16.mxu0 0
        %3675 = vmatmul.mubr.bf16.gmra.mrb[0].mxu0 %v1898
        %v3676 = vpop.f32.mrb[0].mxu0
        %v3677 = vadd.f32 %v3637, %v3676
        %v3678 = vpop.f32.mrb[0].mxu0
        %v3679 = vpop.f32.mrb[0].mxu0
        %v3680 = vpop.f32.mrb[0].mxu0
        %3681 = vdwg.mxu0
        %v3682 = vmax.f32 %v3677, 0.0
        %vm3683 = vcmask 654336
        %3684 = vst.msk [vmem:[#allocation3] sm:$0xff] %vm3683, 0.0
        %3685 = vst.msk [vmem:[#allocation3 + $0x8] sm:$0xff] %vm3683, 0.0
        %3687 = vrot.lane.b32.xlu0 %v3682, 8
        %v3688 = vpop.permute.xlu0 %3687
        %vm3690 = vcmask 588864
        %3691 = vst.msk [vmem:[#allocation3] sm:$0xff] %vm3690, %v3688
        %3692 = vrot.lane.b32.xlu0 %v3682, 72
        %v3693 = vpop.permute.xlu0 %3692
        %s3695 = scalar_lea.vmem [#allocation3], 8
        %3696 = vst.msk [vmem:[%s3695] sm:$0xff] %vm3690, %v3693
        %v3697 = vld [vmem:[#allocation3] sm:$0xff]
        %3699 = vrot.lane.b32.xlu0 %v3697, 8
        %v3700 = vpop.permute.xlu0 %3699
        %v3702 = vmax.f32 %v3697, %v3700
        %3703 = vrot.lane.b32.xlu0 %v3697, 4
        %v3704 = vpop.permute.xlu0 %3703
        %v3706 = vmax.f32 %v3702, %v3704
        %3707 = vrot.lane.b32.xlu0 %v3697, 124
        %v3708 = vpop.permute.xlu0 %3707
        %v3710 = vmax.f32 %v3706, %v3708
        %3711 = vrot.lane.b32.xlu0 %v3697, 120
        %v3712 = vpop.permute.xlu0 %3711
        %v3714 = vmax.f32 %v3710, %v3712
        %v3715 = vld [vmem:[%s3695] sm:$0xff]
        %3717 = vrot.lane.b32.xlu0 %v3715, 8
        %v3718 = vpop.permute.xlu0 %3717
        %v3720 = vmax.f32 %v3715, %v3718
        %3721 = vrot.lane.b32.xlu0 %v3715, 4
        %v3722 = vpop.permute.xlu0 %3721
        %v3724 = vmax.f32 %v3720, %v3722
        %3725 = vrot.lane.b32.xlu0 %v3715, 124
        %v3726 = vpop.permute.xlu0 %3725
        %v3728 = vmax.f32 %v3724, %v3726
        %3729 = vrot.lane.b32.xlu0 %v3715, 120
        %v3730 = vpop.permute.xlu0 %3729
        %v3732 = vmax.f32 %v3728, %v3730
        %3734 = vrot.lane.b32.xlu0 %v3714, 120
        %v3735 = vpop.permute.xlu0 %3734
        %vm3737 = vcmask 523264
        %3738 = vst.msk [vmem:[#allocation2 + $0x1] sm:$0xff] %vm3737, %v3735
        %3740 = vrot.lane.b32.xlu0 %v3732, 56
        %v3741 = vpop.permute.xlu0 %3740
        %vm3743 = vcmask 1048064
        %3744 = vst.msk [vmem:[#allocation2 + $0x1] sm:$0xff] %vm3743, %v3741
        %v3745 = vld [vmem:[#allocation2] sm:$0xff]
        %v3746 = vld [vmem:[#allocation2 + $0x1] sm:$0xff]
        %v3747 = vld [vmem:[#allocation2 + $0x2] sm:$0xff]
        %3749 = vrot.lane.b32.xlu0 %v3745, 64
        %v3750 = vpop.permute.xlu0 %3749
        %v3752 = vmax.f32 %v3745, %v3750
        %3754 = vrot.lane.b32.xlu0 %v3746, 64
        %v3755 = vpop.permute.xlu0 %3754
        %v3757 = vmax.f32 %v3746, %v3755
        %v3758 = vmax.f32 %v3752, %v3757
        %v3759 = vmax.f32 %v3758, %v3747
        %v3760 = vmax.f32 %v3745, %v3755
        %3762 = vrot.lane.b32.xlu0 %v3747, 64
        %v3763 = vpop.permute.xlu0 %3762
        %v3765 = vmax.f32 %v3746, %v3763
        %v3766 = vmax.f32 %v3760, %v3765
        %v3767 = vmax.f32 %v3766, %v3747
        %3768 = vst.msk [vmem:[#allocation2 + $0x1] sm:$0xff] %vm3737, %v3759
        %3769 = vst.msk [vmem:[#allocation2 + $0x1] sm:$0xff] %vm3743, %v3767
        %v3770 = vld [vmem:[#allocation21] sm:$0xf]
        %v3771 = vld [vmem:[#allocation21 + $0x4] sm:$0xf]
        %v3772 = vld [vmem:[#allocation21 + $0x8] sm:$0xf]
        %v3773 = vld [vmem:[#allocation21 + $0xc] sm:$0xf]
        %v3774 = vld [vmem:[#allocation21 + $0x10] sm:$0xf]
        %v3775 = vld [vmem:[#allocation21 + $0x14] sm:$0xf]
        %v3776 = vld [vmem:[#allocation21 + $0x18] sm:$0xf]
        %v3777 = vld [vmem:[#allocation21 + $0x1c] sm:$0xf]
        %v3778 = vld [vmem:[#allocation21 + $0x20] sm:$0xf]
        %v3779 = vld [vmem:[#allocation21 + $0x24] sm:$0xf]
        %v3780 = vld [vmem:[#allocation21 + $0x28] sm:$0xf]
        %v3781 = vld [vmem:[#allocation21 + $0x2c] sm:$0xf]
        %v3782 = vld [vmem:[#allocation21 + $0x30] sm:$0xf]
        %v3783 = vld [vmem:[#allocation21 + $0x34] sm:$0xf]
        %v3784 = vld [vmem:[#allocation21 + $0x38] sm:$0xf]
        %v3785 = vld [vmem:[#allocation21 + $0x3c] sm:$0xf]
        %v3786 = vld [vmem:[#allocation21 + $0x40] sm:$0xf]
        %v3787 = vld [vmem:[#allocation21 + $0x44] sm:$0xf]
        %v3788 = vld [vmem:[#allocation21 + $0x48] sm:$0xf]
        %v3789 = vld [vmem:[#allocation21 + $0x4c] sm:$0xf]
        %v3790 = vld [vmem:[#allocation21 + $0x50] sm:$0xf]
        %v3791 = vld [vmem:[#allocation21 + $0x54] sm:$0xf]
        %v3792 = vld [vmem:[#allocation21 + $0x58] sm:$0xf]
        %v3793 = vld [vmem:[#allocation21 + $0x5c] sm:$0xf]
        %v3794 = vld [vmem:[#allocation21 + $0x60] sm:$0xf]
        %v3795 = vld [vmem:[#allocation21 + $0x64] sm:$0xf]
        %v3796 = vld [vmem:[#allocation21 + $0x68] sm:$0xf]
        %v3797 = vld [vmem:[#allocation21 + $0x6c] sm:$0xf]
        %v3798 = vld [vmem:[#allocation21 + $0x70] sm:$0xf]
        %v3799 = vld [vmem:[#allocation21 + $0x74] sm:$0xf]
        %v3800 = vld [vmem:[#allocation21 + $0x78] sm:$0xf]
        %v3801 = vld [vmem:[#allocation21 + $0x7c] sm:$0xf]
        %v3802 = vld [vmem:[#allocation21 + $0x80] sm:$0xf]
        %v3803 = vld [vmem:[#allocation21 + $0x84] sm:$0xf]
        %v3804 = vld [vmem:[#allocation21 + $0x88] sm:$0xf]
        %v3805 = vld [vmem:[#allocation21 + $0x8c] sm:$0xf]
        %v3806 = vld [vmem:[#allocation21 + $0x90] sm:$0xf]
        %v3807 = vld [vmem:[#allocation21 + $0x94] sm:$0xf]
        %v3808 = vld [vmem:[#allocation21 + $0x98] sm:$0xf]
        %v3809 = vld [vmem:[#allocation21 + $0x9c] sm:$0xf]
        %v3810 = vld [vmem:[#allocation21 + $0xa0] sm:$0xf]
        %v3811 = vld [vmem:[#allocation21 + $0xa4] sm:$0xf]
        %v3812 = vld [vmem:[#allocation21 + $0xa8] sm:$0xf]
        %v3813 = vld [vmem:[#allocation21 + $0xac] sm:$0xf]
        %v3814 = vld [vmem:[#allocation21 + $0xb0] sm:$0xf]
        %v3815 = vld [vmem:[#allocation21 + $0xb4] sm:$0xf]
        %v3816 = vld [vmem:[#allocation21 + $0xb8] sm:$0xf]
        %v3817 = vld [vmem:[#allocation21 + $0xbc] sm:$0xf]
        %v3818 = vld [vmem:[#allocation2] sm:$0xff]
        %v3819 = vld [vmem:[#allocation2 + $0x1] sm:$0xff]
        %v3820 = vld [vmem:[#allocation2 + $0x2] sm:$0xff]
        %v3821 = vpack.c.bf16 %v3818, %v3818
        %v3822 = vpack.c.bf16 %v3819, %v3819
        %v3823 = vpack.c.bf16 %v3820, %v3820
        %v3872 = vunpack.c.l.b16 %v3770
        %v3873 = vunpack.c.l.b16 %v3771
        %v3874 = vunpack.c.l.b16 %v3772
        %v3875 = vunpack.c.l.b16 %v3773
        %v3876 = vunpack.c.l.b16 %v3774
        %v3877 = vunpack.c.l.b16 %v3775
        %v3878 = vunpack.c.l.b16 %v3776
        %v3879 = vunpack.c.l.b16 %v3777
        %v3880 = vunpack.c.l.b16 %v3778
        %v3881 = vunpack.c.l.b16 %v3779
        %v3882 = vunpack.c.l.b16 %v3780
        %v3883 = vunpack.c.l.b16 %v3781
        %v3884 = vunpack.c.l.b16 %v3782
        %v3885 = vunpack.c.l.b16 %v3783
        %v3886 = vunpack.c.l.b16 %v3784
        %v3887 = vunpack.c.l.b16 %v3785
        %v3888 = vunpack.c.l.b16 %v3786
        %v3889 = vunpack.c.l.b16 %v3787
        %v3890 = vunpack.c.l.b16 %v3788
        %v3891 = vunpack.c.l.b16 %v3789
        %v3892 = vunpack.c.l.b16 %v3790
        %v3893 = vunpack.c.l.b16 %v3791
        %v3894 = vunpack.c.l.b16 %v3792
        %v3895 = vunpack.c.l.b16 %v3793
        %v3896 = vunpack.c.l.b16 %v3794
        %v3897 = vunpack.c.l.b16 %v3795
        %v3898 = vunpack.c.l.b16 %v3796
        %v3899 = vunpack.c.l.b16 %v3797
        %v3900 = vunpack.c.l.b16 %v3798
        %v3901 = vunpack.c.l.b16 %v3799
        %v3902 = vunpack.c.l.b16 %v3800
        %v3903 = vunpack.c.l.b16 %v3801
        %v3904 = vunpack.c.l.b16 %v3802
        %v3905 = vunpack.c.l.b16 %v3803
        %v3906 = vunpack.c.l.b16 %v3804
        %v3907 = vunpack.c.l.b16 %v3805
        %v3908 = vunpack.c.l.b16 %v3806
        %v3909 = vunpack.c.l.b16 %v3807
        %v3910 = vunpack.c.l.b16 %v3808
        %v3911 = vunpack.c.l.b16 %v3809
        %v3912 = vunpack.c.l.b16 %v3810
        %v3913 = vunpack.c.l.b16 %v3811
        %v3914 = vunpack.c.l.b16 %v3812
        %v3915 = vunpack.c.l.b16 %v3813
        %v3916 = vunpack.c.l.b16 %v3814
        %v3917 = vunpack.c.l.b16 %v3815
        %v3918 = vunpack.c.l.b16 %v3816
        %v3919 = vunpack.c.l.b16 %v3817
        %v3920 = vpack.c.b16 %v3873, %v3872
        %v3921 = vpack.c.b16 %v3875, %v3874
        %v3922 = vpack.c.b16 %v3877, %v3876
        %v3923 = vpack.c.b16 %v3879, %v3878
        %v3924 = vpack.c.b16 %v3881, %v3880
        %v3925 = vpack.c.b16 %v3883, %v3882
        %v3926 = vpack.c.b16 %v3885, %v3884
        %v3927 = vpack.c.b16 %v3887, %v3886
        %v3928 = vpack.c.b16 %v3889, %v3888
        %v3929 = vpack.c.b16 %v3891, %v3890
        %v3930 = vpack.c.b16 %v3893, %v3892
        %v3931 = vpack.c.b16 %v3895, %v3894
        %v3932 = vpack.c.b16 %v3897, %v3896
        %v3933 = vpack.c.b16 %v3899, %v3898
        %v3934 = vpack.c.b16 %v3901, %v3900
        %v3935 = vpack.c.b16 %v3903, %v3902
        %v3936 = vpack.c.b16 %v3905, %v3904
        %v3937 = vpack.c.b16 %v3907, %v3906
        %v3938 = vpack.c.b16 %v3909, %v3908
        %v3939 = vpack.c.b16 %v3911, %v3910
        %v3940 = vpack.c.b16 %v3913, %v3912
        %v3941 = vpack.c.b16 %v3915, %v3914
        %v3942 = vpack.c.b16 %v3917, %v3916
        %v3943 = vpack.c.b16 %v3919, %v3918
        %3968 = vmatprep.subr.bf16.mxu0 0
        %3969 = vmatpush1.bf16.msra.mxu0 %v3920
        %3970 = vmatprep.subr.bf16.mxu0 0
        %3971 = vmatpush1.bf16.msra.mxu0 %v3921
        %3972 = vmatprep.subr.bf16.mxu0 0
        %3973 = vmatpush1.bf16.msra.mxu0 %v3922
        %3974 = vmatprep.subr.bf16.mxu0 0
        %3975 = vmatpush1.bf16.msra.mxu0 %v3923
        %3976 = vmatprep.subr.bf16.mxu0 0
        %3977 = vmatpush1.bf16.msra.mxu0 %v3924
        %3978 = vmatprep.subr.bf16.mxu0 0
        %3979 = vmatpush1.bf16.msra.mxu0 %v3925
        %3980 = vmatprep.subr.bf16.mxu0 0
        %3981 = vmatpush1.bf16.msra.mxu0 %v3926
        %3982 = vmatprep.subr.bf16.mxu0 0
        %3983 = vmatpush1.bf16.msra.mxu0 %v3927
        %3984 = vmatprep.subr.bf16.mxu0 0
        %3985 = vmatpush1.bf16.msra.mxu0 %v3928
        %3986 = vmatprep.subr.bf16.mxu0 0
        %3987 = vmatpush1.bf16.msra.mxu0 %v3929
        %3988 = vmatprep.subr.bf16.mxu0 0
        %3989 = vmatpush1.bf16.msra.mxu0 %v3930
        %3990 = vmatprep.subr.bf16.mxu0 0
        %3991 = vmatpush1.bf16.msra.mxu0 %v3931
        %3992 = vmatprep.subr.bf16.mxu0 0
        %3993 = vmatpush1.bf16.msra.mxu0 %v3932
        %3994 = vmatprep.subr.bf16.mxu0 0
        %3995 = vmatpush1.bf16.msra.mxu0 %v3933
        %3996 = vmatprep.subr.bf16.mxu0 0
        %3997 = vmatpush1.bf16.msra.mxu0 %v3934
        %3998 = vmatprep.subr.bf16.mxu0 0
        %3999 = vmatpush1.bf16.msra.mxu0 %v3935
        %4000 = vmatprep.mubr.bf16.mxu0 %v3822
        %4001 = vmatmul.mubr.bf16.gmra.mrb[0].mxu0 %v3821
        %v4002 = vpop.f32.mrb[0].mxu0
        %v4003 = vadd.f32 %v3682, %v4002
        %v4004 = vpop.f32.mrb[0].mxu0
        %v4005 = vpop.f32.mrb[0].mxu0
        %v4006 = vpop.f32.mrb[0].mxu0
        %4007 = vdwg.mxu0
        %4008 = vmatprep.subr.bf16.mxu0 0
        %4009 = vmatpush1.bf16.msra.mxu0 %v3936
        %4010 = vmatprep.subr.bf16.mxu0 0
        %4011 = vmatpush1.bf16.msra.mxu0 %v3937
        %4012 = vmatprep.subr.bf16.mxu0 0
        %4013 = vmatpush1.bf16.msra.mxu0 %v3938
        %4014 = vmatprep.subr.bf16.mxu0 0
        %4015 = vmatpush1.bf16.msra.mxu0 %v3939
        %4016 = vmatprep.subr.bf16.mxu0 0
        %4017 = vmatpush1.bf16.msra.mxu0 %v3940
        %4018 = vmatprep.subr.bf16.mxu0 0
        %4019 = vmatpush1.bf16.msra.mxu0 %v3941
        %4020 = vmatprep.subr.bf16.mxu0 0
        %4021 = vmatpush1.bf16.msra.mxu0 %v3942
        %4022 = vmatprep.subr.bf16.mxu0 0
        %4023 = vmatpush1.bf16.msra.mxu0 %v3943
        %4024 = vmatprep.subr.bf16.mxu0 0
        %4025 = vmatpush1.bf16.msra.mxu0 0
        %4026 = vmatprep.subr.bf16.mxu0 0
        %4027 = vmatpush1.bf16.msra.mxu0 0
        %4028 = vmatprep.subr.bf16.mxu0 0
        %4029 = vmatpush1.bf16.msra.mxu0 0
        %4030 = vmatprep.subr.bf16.mxu0 0
        %4031 = vmatpush1.bf16.msra.mxu0 0
        %4032 = vmatprep.subr.bf16.mxu0 0
        %4033 = vmatpush1.bf16.msra.mxu0 0
        %4034 = vmatprep.subr.bf16.mxu0 0
        %4035 = vmatpush1.bf16.msra.mxu0 0
        %4036 = vmatprep.subr.bf16.mxu0 0
        %4037 = vmatpush1.bf16.msra.mxu0 0
        %4038 = vmatprep.subr.bf16.mxu0 0
        %4039 = vmatpush1.bf16.msra.mxu0 0
        %4040 = vmatprep.mubr.bf16.mxu0 0
        %4041 = vmatmul.mubr.bf16.gmra.mrb[0].mxu0 %v3823
        %v4042 = vpop.f32.mrb[0].mxu0
        %v4043 = vadd.f32 %v4003, %v4042
        %v4044 = vpop.f32.mrb[0].mxu0
        %v4045 = vpop.f32.mrb[0].mxu0
        %v4046 = vpop.f32.mrb[0].mxu0
        %4047 = vdwg.mxu0
        %4048 = vst [vmem:[%s560] sm:$0xff] %v4043
        %s4049 = sand.u32 %s284, 1
        %s4050 = scalar_lea.sflag [#allocation6], %s4049
        %s4051 = sand.u32 %s284, 1
        %s4052 = smul.addr %s4051, 8
        %s4053 = scalar_lea.vmem [#allocation22], %s4052
        // Predicated region
        $region109: #{mmfnet_forward.1} parent=63 // pred_check
          %p4054 = pneg %p294
        $region110: #{mmfnet_forward.1} parent=63 // pred_check_branch
          %4056 = sbr.rel (%p4054) target = $region112
        $region111: #{mmfnet_forward.1} parent=63 // pred_region
          %s4058 = ssub.s32 128, 128
          %4059 = vsyncadd %s4050, %s4058
          %s4060 = smul.addr %s35, 128
          %s4061 = scalar_lea.hbm %s11, %s4060
          %s4063 = sshll.u32 %s4053, 4
          %s4064 = int_to_ptr.vmem [resolvable:$true] %s4063
          %4066 = dma.vmem_to_hbm [thread:$0]  %s4064, 128, %s4061, %s4050
        $region112: #{mmfnet_forward.1} parent=63 // pred_fallthru
          _
      $region64: #{mmfnet_forward.1} parent=5 // pred_fallthru
        _
      %p4067 = scmp.le.s32.totalorder 2, %s30
      // Predicated region
      $region113: #{mmfnet_forward.1} parent=5 // pred_check
        %p4068 = pneg %p4067
      $region114: #{mmfnet_forward.1} parent=5 // pred_check_branch
        %4070 = sbr.rel (%p4068) target = $region116
      $region115: #{mmfnet_forward.1} parent=5 // pred_region
        %s4071 = ssub.s32 %s30, 2
        // Predicated region
        $region117: #{mmfnet_forward.1} parent=115 // pred_check
          %p4072 = pneg %p300
        $region118: #{mmfnet_forward.1} parent=115 // pred_check_branch
          %4074 = sbr.rel (%p4072) target = $region120
        $region119: #{mmfnet_forward.1} parent=115 // pred_region
          %s4075 = sand.u32 %s285, 1
          %s4076 = scalar_lea.sflag [#allocation6], %s4075
          %s4077 = sand.u32 %s285, 1
          %s4078 = smul.addr %s4077, 8
          %s4079 = scalar_lea.vmem [#allocation22], %s4078
          %4080 = dma.done %s4076, 128
        $region120: #{mmfnet_forward.1} parent=115 // pred_fallthru
          _
      $region116: #{mmfnet_forward.1} parent=5 // pred_fallthru
        _
    $region6: #{mmfnet_forward.1} parent=1 // loop_footer
      %s34 = sadd.s32 1, %s30
    $region7: #{mmfnet_forward.1} parent=1 // loop_footer_branch
      %29 = sbr.rel target = $region3
    $region8: #{mmfnet_forward.1} parent=1 // loop_exit
      _
    %4081 = vsyncpa [#allocation5], 1
    %s4082 = scalar_lea.sflag [#allocation5], 1
    %4083 = vsyncpa %s4082, 1
    %4084 = vsyncpa [#allocation8], 1
    %s4085 = scalar_lea.sflag [#allocation8], 1
    %4086 = vsyncpa %s4085, 1
    %4087 = vsyncpa [#allocation11], 1
    %4088 = vsyncpa [#allocation14], 1
    %4089 = vsyncpa [#allocation17], 1
    %4090 = vsyncpa [#allocation20], 1
    %4091 = vsyncpa [#allocation6], 1
    %s4092 = scalar_lea.sflag [#allocation6], 1
    %4093 = vsyncpa %s4092, 1

</llo_original>
